<compile_context>
chip_gen: v7x
topology: tpu7x:2x2x1
jax: 0.10.0
libtpu: 0.0.40
codegen_flags: <defaults>
</compile_context>

<pallas_src>
import math
from functools import partial

import jax
import jax.numpy as jnp
from jax.experimental import pallas as pl
from jax.experimental.pallas import tpu as pltpu


def _layernorm(h, eps=1e-5):
    mu = jnp.mean(h, axis=-1, keepdims=True)
    var = jnp.mean((h - mu) ** 2, axis=-1, keepdims=True)
    return (h - mu) * jax.lax.rsqrt(var + eps)


def encoder_block_kernel(x_ref, scale_ref, shift_ref,
                         wq_ref, bq_ref, wk_ref, bk_ref, wv_ref, bv_ref,
                         wph_ref, bp_ref,
                         g2_ref, be2_ref,
                         w1_ref, b1_ref, w2_ref, b2_ref,
                         out_ref, kh_ref, vh_ref, *, n_head, tq):
    f32 = jnp.float32
    bf16 = jnp.bfloat16

    T, C = x_ref.shape[1], x_ref.shape[2]
    hd = C // n_head
    qi = pl.program_id(1)

    scale = scale_ref[0].astype(f32)            # (1, C)
    shift = shift_ref[0].astype(f32)            # (1, C)

    # ---- K/V path: compute once per batch element (qi == 0), cache head-major
    #      bf16 K/V in VMEM scratch.  Valid across qi because that axis is
    #      "arbitrary" (sequential per core); recomputed whenever b changes. ---
    @pl.when(qi == 0)
    def _():
        x_kv = x_ref[0].astype(f32)                                   # (T, C)
        h_kv = (_layernorm(x_kv) * (1.0 + scale) + shift).astype(bf16)
        k = jnp.dot(h_kv, wk_ref[...], preferred_element_type=f32) + bk_ref[...]
        v = jnp.dot(h_kv, wv_ref[...], preferred_element_type=f32) + bv_ref[...]
        kh_ref[...] = jnp.swapaxes(k.reshape(T, n_head, hd), 0, 1).astype(bf16)
        vh_ref[...] = jnp.swapaxes(v.reshape(T, n_head, hd), 0, 1).astype(bf16)

    # ---- Query tile: slice TQ rows out of the resident full-sequence block ----
    row0 = pl.multiple_of(qi * tq, tq)
    x_q = x_ref[0, pl.ds(row0, tq), :].astype(f32)                    # (TQ, C)
    h_q = _layernorm(x_q) * (1.0 + scale) + shift

    q = jnp.dot(h_q.astype(bf16), wq_ref[...], preferred_element_type=f32) + bq_ref[...]
    q = q * (1.0 / math.sqrt(hd))               # fold attention scale into q
    qh = jnp.swapaxes(q.reshape(tq, n_head, hd), 0, 1)                # (H, TQ, hd)

    # Scores / softmax / att@V, all heads in batched contractions.
    att = jnp.einsum('hqd,hkd->hqk', qh.astype(bf16), kh_ref[...],
                     preferred_element_type=f32)                      # (H, TQ, T)
    att = att - jnp.max(att, axis=-1, keepdims=True)
    # TODO(synk): on v6e/v7x a bf16 exp path (~2x EUP throughput) is available;
    # kept f32 here to stay close to the fp32 PyTorch reference numerics.
    pr = jnp.exp(att)
    inv_l = pl.reciprocal(jnp.sum(pr, axis=-1, keepdims=True), approx=True)
    pr = pr * inv_l
    yh = jnp.einsum('hqk,hkd->hqd', pr.astype(bf16), vh_ref[...],
                    preferred_element_type=f32)                       # (H, TQ, hd)

    # Output projection with the head-merge fused into the contraction:
    # y = sum_h (TQ, hd) @ (hd, C) -> no XLU transpose / no (TQ, C) relayout copy.
    y = jnp.zeros((tq, C), f32)
    for h in range(n_head):                      # static unroll over heads
        y = y + jnp.dot(yh[h].astype(bf16), wph_ref[h],
                        preferred_element_type=f32)
    y = y + bp_ref[...]

    x1 = x_q + y                                                      # residual 1

    # ---- MLP branch: LayerNorm -> Linear -> exact (erf) GELU -> Linear --------
    h2 = _layernorm(x1) * g2_ref[...] + be2_ref[...]
    m = jnp.dot(h2.astype(bf16), w1_ref[...], preferred_element_type=f32) + b1_ref[...]
    m = 0.5 * m * (1.0 + jax.lax.erf(m * (1.0 / math.sqrt(2.0))))
    o = jnp.dot(m.astype(bf16), w2_ref[...], preferred_element_type=f32) + b2_ref[...]

    out_ref[0] = (x1 + o).astype(out_ref.dtype)


def _tpu_defaults():
    """Per-generation (query-tile, vmem_limit_bytes) defaults."""
    try:
        kind = jax.devices()[0].device_kind.lower()
    except Exception:
        kind = ""
    if "v7" in kind:       # v7x: 64 MiB VMEM/TC -> conservative scoped limit
        return 256, 44 * 1024 * 1024
    if "v6" in kind:       # v6e: 128 MiB VMEM, 256-wide MXU -> big tiles
        return 256, 96 * 1024 * 1024
    # v5e / unknown: 128-wide MXU; raise above the 16 MiB scoped default.
    return 128, 64 * 1024 * 1024


def run_block(x, scale, shift, p, n_head, tq=None):
    B, T, C = x.shape
    H4 = p["w1"].shape[1]
    hd = C // n_head
    bf16 = jnp.bfloat16

    tq_default, vmem_limit = _tpu_defaults()
    if tq is None:
        tq = math.gcd(T, min(tq_default, T))
    assert T % tq == 0, "sequence length must be divisible by the query tile"
    num_q = T // tq

    # Host-side relayout of the output projection to head-major (H, hd, C).
    wph = p["wp"].astype(bf16).reshape(n_head, hd, C)

    args = (x, scale, shift,
            p["wq"].astype(bf16), p["bq"], p["wk"].astype(bf16), p["bk"],
            p["wv"].astype(bf16), p["bv"], wph, p["bp"],
            p["g2"], p["be2"],
            p["w1"].astype(bf16), p["b1"], p["w2"].astype(bf16), p["b2"])

    def build(single_buffer_consts):
        def rep(shape):
            nd = len(shape)
            kw = {"pipeline_mode": pl.Buffered(1)} if single_buffer_consts else {}
            # constant index_map: same block for every grid step (fetched once)
            return pl.BlockSpec(shape, lambda b, qi, _nd=nd: (0,) * _nd, **kw)

        x_kw = {"pipeline_mode": pl.Buffered(1)} if single_buffer_consts else {}
        in_specs = [
            pl.BlockSpec((1, T, C), lambda b, qi: (b, 0, 0), **x_kw),  # x full seq
            pl.BlockSpec((1, 1, C), lambda b, qi: (b, 0, 0)),          # scale (B,1,C)
            pl.BlockSpec((1, 1, C), lambda b, qi: (b, 0, 0)),          # shift (B,1,C)
            rep((C, C)), rep((1, C)),                                  # wq, bq
            rep((C, C)), rep((1, C)),                                  # wk, bk
            rep((C, C)), rep((1, C)),                                  # wv, bv
            rep((n_head, hd, C)), rep((1, C)),                         # wp (head-major), bp
            rep((1, C)), rep((1, C)),                                  # ln2 gamma, beta
            rep((C, H4)), rep((1, H4)),                                # w1, b1
            rep((H4, C)), rep((1, C)),                                 # w2, b2
        ]
        out_spec = pl.BlockSpec((1, tq, C), lambda b, qi: (b, qi, 0))

        # TODO(synk): for long sequences (T >= ~2K) replace the materialized
        # (H, TQ, T) logits with a flash-style inner KV-tile loop (m/l/acc).
        return pl.pallas_call(
            partial(encoder_block_kernel, n_head=n_head, tq=tq),
            out_shape=jax.ShapeDtypeStruct((B, T, C), x.dtype),
            grid=(B, num_q),
            in_specs=in_specs,
            out_specs=out_spec,
            scratch_shapes=[pltpu.VMEM((n_head, T, hd), bf16),   # cached K (head-major)
                            pltpu.VMEM((n_head, T, hd), bf16)],  # cached V (head-major)
            compiler_params=pltpu.CompilerParams(
                # qi axis must be "arbitrary": the K/V scratch written at qi==0
                # is reused by the later qi steps of the same batch element.
                dimension_semantics=("parallel", "arbitrary"),
                vmem_limit_bytes=vmem_limit,
            ),
        )

    try:
        return build(True)(*args)
    except Exception:
        # pipeline_mode=pl.Buffered(1) unsupported on this jax version ->
        # fall back to default double-buffering (identical results).
        return build(False)(*args)


# ---------------------- plain-JAX glue (tiny per-batch math) -----------------
def sinusoidal_pos_emb(t, dim):
    half = dim // 2
    freqs = jnp.exp(jnp.arange(half, dtype=jnp.float32)
                    * (-math.log(10000.0) / (half - 1)))
    args = t.astype(jnp.float32)[:, None] * freqs[None, :]
    return jnp.concatenate([jnp.sin(args), jnp.cos(args)], axis=-1)  # (B, dim)


def ada_scale_shift(t, p, C, label_emb=None):
    emb = sinusoidal_pos_emb(t, C)
    if label_emb is not None:
        emb = emb + label_emb
    e = jax.nn.silu(emb) @ p["w_ada"] + p["b_ada"]       # (B, 2C)
    scale, shift = e[:, :C], e[:, C:]
    return scale[:, None, :], shift[:, None, :]          # (B, 1, C)


def init_block_params(key, C, n_head, hidden):
    ks = jax.random.split(key, 7)
    s = 0.02

    def lin(k, fan_in, fan_out):
        kw, kb = jax.random.split(k)
        w = jax.random.normal(kw, (fan_in, fan_out), jnp.float32) * s
        b = jax.random.normal(kb, (1, fan_out), jnp.float32) * s
        return w, b

    wq, bq = lin(ks[0], C, C)
    wk, bk = lin(ks[1], C, C)
    wv, bv = lin(ks[2], C, C)
    wp, bp = lin(ks[3], C, C)
    w1, b1 = lin(ks[4], C, hidden)
    w2, b2 = lin(ks[5], hidden, C)
    w_ada, b_ada = lin(ks[6], C, 2 * C)
    return dict(
        wq=wq, bq=bq, wk=wk, bk=bk, wv=wv, bv=bv, wp=wp, bp=bp,
        g2=jnp.ones((1, C), jnp.float32), be2=jnp.zeros((1, C), jnp.float32),
        w1=w1, b1=b1, w2=w2, b2=b2,
        w_ada=w_ada, b_ada=b_ada[0],
    )


def encoder_forward(x, t, params_list, n_head, label_emb=None, tq=None):
    # TODO(synk): cross-layer weight prefetch (start next layer's weight DMA
    # while this layer computes) needs the cross-pallas_call DMA-future pattern.
    C = x.shape[-1]
    for p in params_list:
        scale, shift = ada_scale_shift(t, p, C, label_emb)
        x = run_block(x, scale, shift, p, n_head, tq=tq)
    return x


if __name__ == "__main__":
    B, T, C = 2, 16, 32
    n_head, n_layer, mlp_hidden_times = 4, 2, 4
    TQ = 8   # exercise the query-tile grid axis (grid = (B, T // TQ) = (2, 2))

    key = jax.random.PRNGKey(0)
    kx, kt, kp = jax.random.split(key, 3)
    x = jax.random.normal(kx, (B, T, C), jnp.float32)
    t = jax.random.randint(kt, (B,), 0, 1000)

    params_list = [
        init_block_params(k, C, n_head, mlp_hidden_times * C)
        for k in jax.random.split(kp, n_layer)
    ]

    out = encoder_forward(x, t, params_list, n_head, tq=TQ)
    jax.block_until_ready(out)
    assert out.shape == (B, T, C) and out.dtype == jnp.float32
    print("KERNEL_OK")
</pallas_src>

<mosaic_0001>
module attributes {stable_mosaic.version = 11 : i64} {
  func.func @encoder_block_kernel(%arg0: i32, %arg1: i32, %arg2: memref<1x16x32xf32, #tpu.memory_space<vmem>>, %arg3: memref<1x1x32xf32, #tpu.memory_space<vmem>>, %arg4: memref<1x1x32xf32, #tpu.memory_space<vmem>>, %arg5: memref<32x32xbf16, #tpu.memory_space<vmem>>, %arg6: memref<1x32xf32, #tpu.memory_space<vmem>>, %arg7: memref<32x32xbf16, #tpu.memory_space<vmem>>, %arg8: memref<1x32xf32, #tpu.memory_space<vmem>>, %arg9: memref<32x32xbf16, #tpu.memory_space<vmem>>, %arg10: memref<1x32xf32, #tpu.memory_space<vmem>>, %arg11: memref<4x8x32xbf16, #tpu.memory_space<vmem>>, %arg12: memref<1x32xf32, #tpu.memory_space<vmem>>, %arg13: memref<1x32xf32, #tpu.memory_space<vmem>>, %arg14: memref<1x32xf32, #tpu.memory_space<vmem>>, %arg15: memref<32x128xbf16, #tpu.memory_space<vmem>>, %arg16: memref<1x128xf32, #tpu.memory_space<vmem>>, %arg17: memref<128x32xbf16, #tpu.memory_space<vmem>>, %arg18: memref<1x32xf32, #tpu.memory_space<vmem>>, %arg19: memref<1x8x32xf32, #tpu.memory_space<vmem>>, %arg20: memref<4x16x8xbf16, #tpu.memory_space<vmem>>, %arg21: memref<4x16x8xbf16, #tpu.memory_space<vmem>>) attributes {dimension_semantics = [#tpu.dimension_semantics<parallel>, #tpu.dimension_semantics<arbitrary>], iteration_bounds = array<i64: 2, 2>, scalar_prefetch = 0 : i64, scratch_operands = 2 : i64, tpu.core_type = #tpu.core_type<tc>, window_params = [{pipeline_mode = #tpu.pipeline_mode<synchronous>, transform_indices = @transform_0, window_bounds = array<i64: 1, 16, 32>}, {transform_indices = @transform_1, window_bounds = array<i64: 1, 1, 32>}, {transform_indices = @transform_2, window_bounds = array<i64: 1, 1, 32>}, {pipeline_mode = #tpu.pipeline_mode<synchronous>, transform_indices = @transform_3, window_bounds = array<i64: 32, 32>}, {pipeline_mode = #tpu.pipeline_mode<synchronous>, transform_indices = @transform_4, window_bounds = array<i64: 1, 32>}, {pipeline_mode = #tpu.pipeline_mode<synchronous>, transform_indices = @transform_5, window_bounds = array<i64: 32, 32>}, {pipeline_mode = #tpu.pipeline_mode<synchronous>, transform_indices = @transform_6, window_bounds = array<i64: 1, 32>}, {pipeline_mode = #tpu.pipeline_mode<synchronous>, transform_indices = @transform_7, window_bounds = array<i64: 32, 32>}, {pipeline_mode = #tpu.pipeline_mode<synchronous>, transform_indices = @transform_8, window_bounds = array<i64: 1, 32>}, {pipeline_mode = #tpu.pipeline_mode<synchronous>, transform_indices = @transform_9, window_bounds = array<i64: 4, 8, 32>}, {pipeline_mode = #tpu.pipeline_mode<synchronous>, transform_indices = @transform_10, window_bounds = array<i64: 1, 32>}, {pipeline_mode = #tpu.pipeline_mode<synchronous>, transform_indices = @transform_11, window_bounds = array<i64: 1, 32>}, {pipeline_mode = #tpu.pipeline_mode<synchronous>, transform_indices = @transform_12, window_bounds = array<i64: 1, 32>}, {pipeline_mode = #tpu.pipeline_mode<synchronous>, transform_indices = @transform_13, window_bounds = array<i64: 32, 128>}, {pipeline_mode = #tpu.pipeline_mode<synchronous>, transform_indices = @transform_14, window_bounds = array<i64: 1, 128>}, {pipeline_mode = #tpu.pipeline_mode<synchronous>, transform_indices = @transform_15, window_bounds = array<i64: 128, 32>}, {pipeline_mode = #tpu.pipeline_mode<synchronous>, transform_indices = @transform_16, window_bounds = array<i64: 1, 32>}, {transform_indices = @transform_17, window_bounds = array<i64: 1, 8, 32>}]} {
    %c0 = arith.constant 0 : index
    %c0_0 = arith.constant 0 : index
    %c0_1 = arith.constant 0 : index
    %0 = vector.load %arg3[%c0, %c0_0, %c0_1] : memref<1x1x32xf32, #tpu.memory_space<vmem>>, vector<1x1x32xf32>
    %1 = vector.shape_cast %0 : vector<1x1x32xf32> to vector<1x32xf32>
    %c0_2 = arith.constant 0 : index
    %c0_3 = arith.constant 0 : index
    %c0_4 = arith.constant 0 : index
    %2 = vector.load %arg4[%c0_2, %c0_3, %c0_4] : memref<1x1x32xf32, #tpu.memory_space<vmem>>, vector<1x1x32xf32>
    %3 = vector.shape_cast %2 : vector<1x1x32xf32> to vector<1x32xf32>
    %c0_i32 = arith.constant 0 : i32
    %4 = arith.cmpi eq, %arg1, %c0_i32 : i32
    %5 = arith.extui %4 : i1 to i32
    %c0_i32_5 = arith.constant 0 : i32
    %6 = arith.cmpi ne, %5, %c0_i32_5 : i32
    scf.if %6 {
      %c0_70 = arith.constant 0 : index
      %c0_71 = arith.constant 0 : index
      %c0_72 = arith.constant 0 : index
      %143 = vector.load %arg2[%c0_70, %c0_71, %c0_72] : memref<1x16x32xf32, #tpu.memory_space<vmem>>, vector<1x16x32xf32>
      %144 = vector.shape_cast %143 : vector<1x16x32xf32> to vector<16x32xf32>
      %cst_73 = arith.constant dense<0.000000e+00> : vector<16xf32>
      %145 = vector.multi_reduction <add>, %144, %cst_73 [1] : vector<16x32xf32> to vector<16xf32>
      %146 = vector.shape_cast %145 : vector<16xf32> to vector<16x1xf32>
      %cst_74 = arith.constant 3.200000e+01 : f32
      %147 = vector.broadcast %cst_74 : f32 to vector<16x1xf32>
      %148 = arith.divf %146, %147 : vector<16x1xf32>
      %149 = vector.broadcast %148 : vector<16x1xf32> to vector<16x32xf32>
      %150 = arith.subf %144, %149 : vector<16x32xf32>
      %151 = arith.mulf %150, %150 : vector<16x32xf32>
      %cst_75 = arith.constant dense<0.000000e+00> : vector<16xf32>
      %152 = vector.multi_reduction <add>, %151, %cst_75 [1] : vector<16x32xf32> to vector<16xf32>
      %153 = vector.shape_cast %152 : vector<16xf32> to vector<16x1xf32>
      %cst_76 = arith.constant 3.200000e+01 : f32
      %154 = vector.broadcast %cst_76 : f32 to vector<16x1xf32>
      %155 = arith.divf %153, %154 : vector<16x1xf32>
      %156 = vector.broadcast %148 : vector<16x1xf32> to vector<16x32xf32>
      %157 = arith.subf %144, %156 : vector<16x32xf32>
      %cst_77 = arith.constant 9.99999974E-6 : f32
      %158 = vector.broadcast %cst_77 : f32 to vector<16x1xf32>
      %159 = arith.addf %155, %158 : vector<16x1xf32>
      %160 = math.rsqrt %159 : vector<16x1xf32>
      %161 = vector.broadcast %160 : vector<16x1xf32> to vector<16x32xf32>
      %162 = arith.mulf %157, %161 : vector<16x32xf32>
      %cst_78 = arith.constant 1.000000e+00 : f32
      %163 = vector.broadcast %cst_78 : f32 to vector<1x32xf32>
      %164 = arith.addf %163, %1 : vector<1x32xf32>
      %165 = vector.broadcast %164 : vector<1x32xf32> to vector<16x32xf32>
      %166 = arith.mulf %162, %165 : vector<16x32xf32>
      %167 = vector.broadcast %3 : vector<1x32xf32> to vector<16x32xf32>
      %168 = arith.addf %166, %167 : vector<16x32xf32>
      %169 = arith.truncf %168 : vector<16x32xf32> to vector<16x32xbf16>
      %c0_79 = arith.constant 0 : index
      %c0_80 = arith.constant 0 : index
      %170 = vector.load %arg7[%c0_79, %c0_80] : memref<32x32xbf16, #tpu.memory_space<vmem>>, vector<32x32xbf16>
      %cst_81 = arith.constant dense<0.000000e+00> : vector<16x32xf32>
      %171 = tpu.matmul %169, %170, %cst_81 {dimension_numbers = #tpu.dot_dimension_numbers<[1], [0], [0], [1], [0, 0, 1, 1], [], []>} : vector<16x32xbf16>, vector<32x32xbf16>, vector<16x32xf32> -> vector<16x32xf32>
      %c0_82 = arith.constant 0 : index
      %c0_83 = arith.constant 0 : index
      %172 = vector.load %arg8[%c0_82, %c0_83] : memref<1x32xf32, #tpu.memory_space<vmem>>, vector<1x32xf32>
      %173 = vector.broadcast %172 : vector<1x32xf32> to vector<16x32xf32>
      %174 = arith.addf %171, %173 : vector<16x32xf32>
      %c0_84 = arith.constant 0 : index
      %c0_85 = arith.constant 0 : index
      %175 = vector.load %arg9[%c0_84, %c0_85] : memref<32x32xbf16, #tpu.memory_space<vmem>>, vector<32x32xbf16>
      %cst_86 = arith.constant dense<0.000000e+00> : vector<16x32xf32>
      %176 = tpu.matmul %169, %175, %cst_86 {dimension_numbers = #tpu.dot_dimension_numbers<[1], [0], [0], [1], [0, 0, 1, 1], [], []>} : vector<16x32xbf16>, vector<32x32xbf16>, vector<16x32xf32> -> vector<16x32xf32>
      %c0_87 = arith.constant 0 : index
      %c0_88 = arith.constant 0 : index
      %177 = vector.load %arg10[%c0_87, %c0_88] : memref<1x32xf32, #tpu.memory_space<vmem>>, vector<1x32xf32>
      %178 = vector.broadcast %177 : vector<1x32xf32> to vector<16x32xf32>
      %179 = arith.addf %176, %178 : vector<16x32xf32>
      %180 = vector.shape_cast %174 : vector<16x32xf32> to vector<16x4x8xf32>
      %181 = tpu.transpose %180, [1, 0, 2] : vector<16x4x8xf32> -> vector<4x16x8xf32>
      %182 = arith.truncf %181 : vector<4x16x8xf32> to vector<4x16x8xbf16>
      %c0_89 = arith.constant 0 : index
      %c0_90 = arith.constant 0 : index
      %c0_91 = arith.constant 0 : index
      %183 = vector.load %arg20[%c0_89, %c0_90, %c0_91] : memref<4x16x8xbf16, #tpu.memory_space<vmem>>, vector<4x16x8xbf16>
      tpu.vector_store %arg20[%c0_89, %c0_90, %c0_91], %182 {strides = array<i32>} : memref<4x16x8xbf16, #tpu.memory_space<vmem>>, vector<4x16x8xbf16>,
      %184 = vector.shape_cast %179 : vector<16x32xf32> to vector<16x4x8xf32>
      %185 = tpu.transpose %184, [1, 0, 2] : vector<16x4x8xf32> -> vector<4x16x8xf32>
      %186 = arith.truncf %185 : vector<4x16x8xf32> to vector<4x16x8xbf16>
      %c0_92 = arith.constant 0 : index
      %c0_93 = arith.constant 0 : index
      %c0_94 = arith.constant 0 : index
      %187 = vector.load %arg21[%c0_92, %c0_93, %c0_94] : memref<4x16x8xbf16, #tpu.memory_space<vmem>>, vector<4x16x8xbf16>
      tpu.vector_store %arg21[%c0_92, %c0_93, %c0_94], %186 {strides = array<i32>} : memref<4x16x8xbf16, #tpu.memory_space<vmem>>, vector<4x16x8xbf16>,
    } else {
    }
    %c8_i32 = arith.constant 8 : i32
    %7 = arith.muli %arg1, %c8_i32 : i32
    %8 = tpu.assume_multiple %7, 8 : i32
    %c0_6 = arith.constant 0 : index
    %9 = arith.index_cast %8 : i32 to index
    %c0_7 = arith.constant 0 : index
    %10 = vector.load %arg2[%c0_6, %9, %c0_7] : memref<1x16x32xf32, #tpu.memory_space<vmem>>, vector<1x8x32xf32>
    %11 = vector.shape_cast %10 : vector<1x8x32xf32> to vector<8x32xf32>
    %cst = arith.constant dense<0.000000e+00> : vector<8xf32>
    %12 = vector.multi_reduction <add>, %11, %cst [1] : vector<8x32xf32> to vector<8xf32>
    %13 = vector.shape_cast %12 : vector<8xf32> to vector<8x1xf32>
    %cst_8 = arith.constant 3.200000e+01 : f32
    %14 = vector.broadcast %cst_8 : f32 to vector<8x1xf32>
    %15 = arith.divf %13, %14 : vector<8x1xf32>
    %16 = vector.broadcast %15 : vector<8x1xf32> to vector<8x32xf32>
    %17 = arith.subf %11, %16 : vector<8x32xf32>
    %18 = arith.mulf %17, %17 : vector<8x32xf32>
    %cst_9 = arith.constant dense<0.000000e+00> : vector<8xf32>
    %19 = vector.multi_reduction <add>, %18, %cst_9 [1] : vector<8x32xf32> to vector<8xf32>
    %20 = vector.shape_cast %19 : vector<8xf32> to vector<8x1xf32>
    %cst_10 = arith.constant 3.200000e+01 : f32
    %21 = vector.broadcast %cst_10 : f32 to vector<8x1xf32>
    %22 = arith.divf %20, %21 : vector<8x1xf32>
    %23 = vector.broadcast %15 : vector<8x1xf32> to vector<8x32xf32>
    %24 = arith.subf %11, %23 : vector<8x32xf32>
    %cst_11 = arith.constant 9.99999974E-6 : f32
    %25 = vector.broadcast %cst_11 : f32 to vector<8x1xf32>
    %26 = arith.addf %22, %25 : vector<8x1xf32>
    %27 = math.rsqrt %26 : vector<8x1xf32>
    %28 = vector.broadcast %27 : vector<8x1xf32> to vector<8x32xf32>
    %29 = arith.mulf %24, %28 : vector<8x32xf32>
    %cst_12 = arith.constant 1.000000e+00 : f32
    %30 = vector.broadcast %cst_12 : f32 to vector<1x32xf32>
    %31 = arith.addf %30, %1 : vector<1x32xf32>
    %32 = vector.broadcast %31 : vector<1x32xf32> to vector<8x32xf32>
    %33 = arith.mulf %29, %32 : vector<8x32xf32>
    %34 = vector.broadcast %3 : vector<1x32xf32> to vector<8x32xf32>
    %35 = arith.addf %33, %34 : vector<8x32xf32>
    %36 = arith.truncf %35 : vector<8x32xf32> to vector<8x32xbf16>
    %c0_13 = arith.constant 0 : index
    %c0_14 = arith.constant 0 : index
    %37 = vector.load %arg5[%c0_13, %c0_14] : memref<32x32xbf16, #tpu.memory_space<vmem>>, vector<32x32xbf16>
    %cst_15 = arith.constant dense<0.000000e+00> : vector<8x32xf32>
    %38 = tpu.matmul %36, %37, %cst_15 {dimension_numbers = #tpu.dot_dimension_numbers<[1], [0], [0], [1], [0, 0, 1, 1], [], []>} : vector<8x32xbf16>, vector<32x32xbf16>, vector<8x32xf32> -> vector<8x32xf32>
    %c0_16 = arith.constant 0 : index
    %c0_17 = arith.constant 0 : index
    %39 = vector.load %arg6[%c0_16, %c0_17] : memref<1x32xf32, #tpu.memory_space<vmem>>, vector<1x32xf32>
    %40 = vector.broadcast %39 : vector<1x32xf32> to vector<8x32xf32>
    %41 = arith.addf %38, %40 : vector<8x32xf32>
    %cst_18 = arith.constant 0.353553385 : f32
    %42 = vector.broadcast %cst_18 : f32 to vector<8x32xf32>
    %43 = arith.mulf %41, %42 : vector<8x32xf32>
    %44 = vector.shape_cast %43 : vector<8x32xf32> to vector<8x4x8xf32>
    %45 = tpu.transpose %44, [1, 0, 2] : vector<8x4x8xf32> -> vector<4x8x8xf32>
    %46 = arith.truncf %45 : vector<4x8x8xf32> to vector<4x8x8xbf16>
    %c0_19 = arith.constant 0 : index
    %c0_20 = arith.constant 0 : index
    %c0_21 = arith.constant 0 : index
    %47 = vector.load %arg20[%c0_19, %c0_20, %c0_21] : memref<4x16x8xbf16, #tpu.memory_space<vmem>>, vector<4x16x8xbf16>
    "tpu.trace_start"() <{level = 10 : i32, message = "hqd,hkd->hqk"}> : () -> ()
    %cst_22 = arith.constant dense<0.000000e+00> : vector<4x8x16xf32>
    %48 = tpu.matmul %46, %47, %cst_22 {dimension_numbers = #tpu.dot_dimension_numbers<[2], [2], [1], [1], [0, 0, 0, 1, 1, 1], [0], [0]>} : vector<4x8x8xbf16>, vector<4x16x8xbf16>, vector<4x8x16xf32> -> vector<4x8x16xf32>
    "tpu.trace_stop"() : () -> ()
    %cst_23 = arith.constant dense<0xFF800000> : vector<4x8xf32>
    %49 = vector.multi_reduction <maximumf>, %48, %cst_23 [2] : vector<4x8x16xf32> to vector<4x8xf32>
    %50 = vector.shape_cast %49 : vector<4x8xf32> to vector<4x8x1xf32>
    %51 = vector.broadcast %50 : vector<4x8x1xf32> to vector<4x8x16xf32>
    %52 = arith.subf %48, %51 : vector<4x8x16xf32>
    %53 = math.exp %52 : vector<4x8x16xf32>
    %cst_24 = arith.constant dense<0.000000e+00> : vector<4x8xf32>
    %54 = vector.multi_reduction <add>, %53, %cst_24 [2] : vector<4x8x16xf32> to vector<4x8xf32>
    %55 = vector.shape_cast %54 : vector<4x8xf32> to vector<4x8x1xf32>
    %56 = tpu.reciprocal %55 {approx = true} : vector<4x8x1xf32> -> vector<4x8x1xf32>
    %57 = vector.broadcast %56 : vector<4x8x1xf32> to vector<4x8x16xf32>
    %58 = arith.mulf %53, %57 : vector<4x8x16xf32>
    %59 = arith.truncf %58 : vector<4x8x16xf32> to vector<4x8x16xbf16>
    %c0_25 = arith.constant 0 : index
    %c0_26 = arith.constant 0 : index
    %c0_27 = arith.constant 0 : index
    %60 = vector.load %arg21[%c0_25, %c0_26, %c0_27] : memref<4x16x8xbf16, #tpu.memory_space<vmem>>, vector<4x16x8xbf16>
    "tpu.trace_start"() <{level = 10 : i32, message = "hqk,hkd->hqd"}> : () -> ()
    %cst_28 = arith.constant dense<0.000000e+00> : vector<4x8x8xf32>
    %61 = tpu.matmul %59, %60, %cst_28 {dimension_numbers = #tpu.dot_dimension_numbers<[2], [1], [1], [2], [0, 0, 0, 1, 1, 2], [0], [0]>} : vector<4x8x16xbf16>, vector<4x16x8xbf16>, vector<4x8x8xf32> -> vector<4x8x8xf32>
    %cst_29 = arith.constant 0.000000e+00 : f32
    "tpu.trace_stop"() : () -> ()
    %62 = vector.broadcast %cst_29 : f32 to vector<8x32xf32>
    %63 = vector.extract_strided_slice %61 {offsets = [0, 0, 0], sizes = [1, 8, 8], strides = [1, 1, 1]} : vector<4x8x8xf32> to vector<1x8x8xf32>
    %64 = vector.shape_cast %63 : vector<1x8x8xf32> to vector<8x8xf32>
    %65 = arith.truncf %64 : vector<8x8xf32> to vector<8x8xbf16>
    %c0_30 = arith.constant 0 : index
    %c0_31 = arith.constant 0 : index
    %c0_32 = arith.constant 0 : index
    %66 = vector.load %arg11[%c0_30, %c0_31, %c0_32] : memref<4x8x32xbf16, #tpu.memory_space<vmem>>, vector<1x8x32xbf16>
    %67 = vector.shape_cast %66 : vector<1x8x32xbf16> to vector<8x32xbf16>
    %cst_33 = arith.constant dense<0.000000e+00> : vector<8x32xf32>
    %68 = tpu.matmul %65, %67, %cst_33 {dimension_numbers = #tpu.dot_dimension_numbers<[1], [0], [0], [1], [0, 0, 1, 1], [], []>} : vector<8x8xbf16>, vector<8x32xbf16>, vector<8x32xf32> -> vector<8x32xf32>
    %69 = arith.addf %62, %68 : vector<8x32xf32>
    %70 = vector.extract_strided_slice %61 {offsets = [1, 0, 0], sizes = [1, 8, 8], strides = [1, 1, 1]} : vector<4x8x8xf32> to vector<1x8x8xf32>
    %71 = vector.shape_cast %70 : vector<1x8x8xf32> to vector<8x8xf32>
    %72 = arith.truncf %71 : vector<8x8xf32> to vector<8x8xbf16>
    %c1 = arith.constant 1 : index
    %c0_34 = arith.constant 0 : index
    %c0_35 = arith.constant 0 : index
    %73 = vector.load %arg11[%c1, %c0_34, %c0_35] : memref<4x8x32xbf16, #tpu.memory_space<vmem>>, vector<1x8x32xbf16>
    %74 = vector.shape_cast %73 : vector<1x8x32xbf16> to vector<8x32xbf16>
    %cst_36 = arith.constant dense<0.000000e+00> : vector<8x32xf32>
    %75 = tpu.matmul %72, %74, %cst_36 {dimension_numbers = #tpu.dot_dimension_numbers<[1], [0], [0], [1], [0, 0, 1, 1], [], []>} : vector<8x8xbf16>, vector<8x32xbf16>, vector<8x32xf32> -> vector<8x32xf32>
    %76 = arith.addf %69, %75 : vector<8x32xf32>
    %77 = vector.extract_strided_slice %61 {offsets = [2, 0, 0], sizes = [1, 8, 8], strides = [1, 1, 1]} : vector<4x8x8xf32> to vector<1x8x8xf32>
    %78 = vector.shape_cast %77 : vector<1x8x8xf32> to vector<8x8xf32>
    %79 = arith.truncf %78 : vector<8x8xf32> to vector<8x8xbf16>
    %c2 = arith.constant 2 : index
    %c0_37 = arith.constant 0 : index
    %c0_38 = arith.constant 0 : index
    %80 = vector.load %arg11[%c2, %c0_37, %c0_38] : memref<4x8x32xbf16, #tpu.memory_space<vmem>>, vector<1x8x32xbf16>
    %81 = vector.shape_cast %80 : vector<1x8x32xbf16> to vector<8x32xbf16>
    %cst_39 = arith.constant dense<0.000000e+00> : vector<8x32xf32>
    %82 = tpu.matmul %79, %81, %cst_39 {dimension_numbers = #tpu.dot_dimension_numbers<[1], [0], [0], [1], [0, 0, 1, 1], [], []>} : vector<8x8xbf16>, vector<8x32xbf16>, vector<8x32xf32> -> vector<8x32xf32>
    %83 = arith.addf %76, %82 : vector<8x32xf32>
    %84 = vector.extract_strided_slice %61 {offsets = [3, 0, 0], sizes = [1, 8, 8], strides = [1, 1, 1]} : vector<4x8x8xf32> to vector<1x8x8xf32>
    %85 = vector.shape_cast %84 : vector<1x8x8xf32> to vector<8x8xf32>
    %86 = arith.truncf %85 : vector<8x8xf32> to vector<8x8xbf16>
    %c3 = arith.constant 3 : index
    %c0_40 = arith.constant 0 : index
    %c0_41 = arith.constant 0 : index
    %87 = vector.load %arg11[%c3, %c0_40, %c0_41] : memref<4x8x32xbf16, #tpu.memory_space<vmem>>, vector<1x8x32xbf16>
    %88 = vector.shape_cast %87 : vector<1x8x32xbf16> to vector<8x32xbf16>
    %cst_42 = arith.constant dense<0.000000e+00> : vector<8x32xf32>
    %89 = tpu.matmul %86, %88, %cst_42 {dimension_numbers = #tpu.dot_dimension_numbers<[1], [0], [0], [1], [0, 0, 1, 1], [], []>} : vector<8x8xbf16>, vector<8x32xbf16>, vector<8x32xf32> -> vector<8x32xf32>
    %90 = arith.addf %83, %89 : vector<8x32xf32>
    %c0_43 = arith.constant 0 : index
    %c0_44 = arith.constant 0 : index
    %91 = vector.load %arg12[%c0_43, %c0_44] : memref<1x32xf32, #tpu.memory_space<vmem>>, vector<1x32xf32>
    %92 = vector.broadcast %91 : vector<1x32xf32> to vector<8x32xf32>
    %93 = arith.addf %90, %92 : vector<8x32xf32>
    %94 = arith.addf %11, %93 : vector<8x32xf32>
    %cst_45 = arith.constant dense<0.000000e+00> : vector<8xf32>
    %95 = vector.multi_reduction <add>, %94, %cst_45 [1] : vector<8x32xf32> to vector<8xf32>
    %96 = vector.shape_cast %95 : vector<8xf32> to vector<8x1xf32>
    %cst_46 = arith.constant 3.200000e+01 : f32
    %97 = vector.broadcast %cst_46 : f32 to vector<8x1xf32>
    %98 = arith.divf %96, %97 : vector<8x1xf32>
    %99 = vector.broadcast %98 : vector<8x1xf32> to vector<8x32xf32>
    %100 = arith.subf %94, %99 : vector<8x32xf32>
    %101 = arith.mulf %100, %100 : vector<8x32xf32>
    %cst_47 = arith.constant dense<0.000000e+00> : vector<8xf32>
    %102 = vector.multi_reduction <add>, %101, %cst_47 [1] : vector<8x32xf32> to vector<8xf32>
    %103 = vector.shape_cast %102 : vector<8xf32> to vector<8x1xf32>
    %cst_48 = arith.constant 3.200000e+01 : f32
    %104 = vector.broadcast %cst_48 : f32 to vector<8x1xf32>
    %105 = arith.divf %103, %104 : vector<8x1xf32>
    %106 = vector.broadcast %98 : vector<8x1xf32> to vector<8x32xf32>
    %107 = arith.subf %94, %106 : vector<8x32xf32>
    %cst_49 = arith.constant 9.99999974E-6 : f32
    %108 = vector.broadcast %cst_49 : f32 to vector<8x1xf32>
    %109 = arith.addf %105, %108 : vector<8x1xf32>
    %110 = math.rsqrt %109 : vector<8x1xf32>
    %111 = vector.broadcast %110 : vector<8x1xf32> to vector<8x32xf32>
    %112 = arith.mulf %107, %111 : vector<8x32xf32>
    %c0_50 = arith.constant 0 : index
    %c0_51 = arith.constant 0 : index
    %113 = vector.load %arg13[%c0_50, %c0_51] : memref<1x32xf32, #tpu.memory_space<vmem>>, vector<1x32xf32>
    %114 = vector.broadcast %113 : vector<1x32xf32> to vector<8x32xf32>
    %115 = arith.mulf %112, %114 : vector<8x32xf32>
    %c0_52 = arith.constant 0 : index
    %c0_53 = arith.constant 0 : index
    %116 = vector.load %arg14[%c0_52, %c0_53] : memref<1x32xf32, #tpu.memory_space<vmem>>, vector<1x32xf32>
    %117 = vector.broadcast %116 : vector<1x32xf32> to vector<8x32xf32>
    %118 = arith.addf %115, %117 : vector<8x32xf32>
    %119 = arith.truncf %118 : vector<8x32xf32> to vector<8x32xbf16>
    %c0_54 = arith.constant 0 : index
    %c0_55 = arith.constant 0 : index
    %120 = vector.load %arg15[%c0_54, %c0_55] : memref<32x128xbf16, #tpu.memory_space<vmem>>, vector<32x128xbf16>
    %cst_56 = arith.constant dense<0.000000e+00> : vector<8x128xf32>
    %121 = tpu.matmul %119, %120, %cst_56 {dimension_numbers = #tpu.dot_dimension_numbers<[1], [0], [0], [1], [0, 0, 1, 1], [], []>} : vector<8x32xbf16>, vector<32x128xbf16>, vector<8x128xf32> -> vector<8x128xf32>
    %c0_57 = arith.constant 0 : index
    %c0_58 = arith.constant 0 : index
    %122 = vector.load %arg16[%c0_57, %c0_58] : memref<1x128xf32, #tpu.memory_space<vmem>>, vector<1x128xf32>
    %123 = vector.broadcast %122 : vector<1x128xf32> to vector<8x128xf32>
    %124 = arith.addf %121, %123 : vector<8x128xf32>
    %cst_59 = arith.constant 5.000000e-01 : f32
    %125 = vector.broadcast %cst_59 : f32 to vector<8x128xf32>
    %126 = arith.mulf %125, %124 : vector<8x128xf32>
    %cst_60 = arith.constant 0.707106769 : f32
    %127 = vector.broadcast %cst_60 : f32 to vector<8x128xf32>
    %128 = arith.mulf %124, %127 : vector<8x128xf32>
    %129 = math.erf %128 : vector<8x128xf32>
    %cst_61 = arith.constant 1.000000e+00 : f32
    %130 = vector.broadcast %cst_61 : f32 to vector<8x128xf32>
    %131 = arith.addf %130, %129 : vector<8x128xf32>
    %132 = arith.mulf %126, %131 : vector<8x128xf32>
    %133 = arith.truncf %132 : vector<8x128xf32> to vector<8x128xbf16>
    %c0_62 = arith.constant 0 : index
    %c0_63 = arith.constant 0 : index
    %134 = vector.load %arg17[%c0_62, %c0_63] : memref<128x32xbf16, #tpu.memory_space<vmem>>, vector<128x32xbf16>
    %cst_64 = arith.constant dense<0.000000e+00> : vector<8x32xf32>
    %135 = tpu.matmul %133, %134, %cst_64 {dimension_numbers = #tpu.dot_dimension_numbers<[1], [0], [0], [1], [0, 0, 1, 1], [], []>} : vector<8x128xbf16>, vector<128x32xbf16>, vector<8x32xf32> -> vector<8x32xf32>
    %c0_65 = arith.constant 0 : index
    %c0_66 = arith.constant 0 : index
    %136 = vector.load %arg18[%c0_65, %c0_66] : memref<1x32xf32, #tpu.memory_space<vmem>>, vector<1x32xf32>
    %137 = vector.broadcast %136 : vector<1x32xf32> to vector<8x32xf32>
    %138 = arith.addf %135, %137 : vector<8x32xf32>
    %139 = arith.addf %94, %138 : vector<8x32xf32>
    %c0_67 = arith.constant 0 : index
    %c0_68 = arith.constant 0 : index
    %c0_69 = arith.constant 0 : index
    %140 = vector.load %arg19[%c0_67, %c0_68, %c0_69] : memref<1x8x32xf32, #tpu.memory_space<vmem>>, vector<1x8x32xf32>
    %141 = vector.shape_cast %140 : vector<1x8x32xf32> to vector<8x32xf32>
    %142 = vector.shape_cast %139 : vector<8x32xf32> to vector<1x8x32xf32>
    tpu.vector_store %arg19[%c0_67, %c0_68, %c0_69], %142 {strides = array<i32>} : memref<1x8x32xf32, #tpu.memory_space<vmem>>, vector<1x8x32xf32>,
    return
  }
  func.func @transform_0(%arg0: i32, %arg1: i32) -> (i32, i32, i32) {
    %c0_i32 = arith.constant 0 : i32
    %c0_i32_0 = arith.constant 0 : i32
    %c0_i32_1 = arith.constant 0 : i32
    return %arg0, %c0_i32, %c0_i32_0 : i32, i32, i32
  }
  func.func @transform_1(%arg0: i32, %arg1: i32) -> (i32, i32, i32) {
    %c0_i32 = arith.constant 0 : i32
    %c0_i32_0 = arith.constant 0 : i32
    %c0_i32_1 = arith.constant 0 : i32
    return %arg0, %c0_i32, %c0_i32_0 : i32, i32, i32
  }
  func.func @transform_2(%arg0: i32, %arg1: i32) -> (i32, i32, i32) {
    %c0_i32 = arith.constant 0 : i32
    %c0_i32_0 = arith.constant 0 : i32
    %c0_i32_1 = arith.constant 0 : i32
    return %arg0, %c0_i32, %c0_i32_0 : i32, i32, i32
  }
  func.func @transform_3(%arg0: i32, %arg1: i32) -> (i32, i32) {
    %c0_i32 = arith.constant 0 : i32
    %c0_i32_0 = arith.constant 0 : i32
    %c0_i32_1 = arith.constant 0 : i32
    return %c0_i32, %c0_i32_0 : i32, i32
  }
  func.func @transform_4(%arg0: i32, %arg1: i32) -> (i32, i32) {
    %c0_i32 = arith.constant 0 : i32
    %c0_i32_0 = arith.constant 0 : i32
    %c0_i32_1 = arith.constant 0 : i32
    return %c0_i32, %c0_i32_0 : i32, i32
  }
  func.func @transform_5(%arg0: i32, %arg1: i32) -> (i32, i32) {
    %c0_i32 = arith.constant 0 : i32
    %c0_i32_0 = arith.constant 0 : i32
    %c0_i32_1 = arith.constant 0 : i32
    return %c0_i32, %c0_i32_0 : i32, i32
  }
  func.func @transform_6(%arg0: i32, %arg1: i32) -> (i32, i32) {
    %c0_i32 = arith.constant 0 : i32
    %c0_i32_0 = arith.constant 0 : i32
    %c0_i32_1 = arith.constant 0 : i32
    return %c0_i32, %c0_i32_0 : i32, i32
  }
  func.func @transform_7(%arg0: i32, %arg1: i32) -> (i32, i32) {
    %c0_i32 = arith.constant 0 : i32
    %c0_i32_0 = arith.constant 0 : i32
    %c0_i32_1 = arith.constant 0 : i32
    return %c0_i32, %c0_i32_0 : i32, i32
  }
  func.func @transform_8(%arg0: i32, %arg1: i32) -> (i32, i32) {
    %c0_i32 = arith.constant 0 : i32
    %c0_i32_0 = arith.constant 0 : i32
    %c0_i32_1 = arith.constant 0 : i32
    return %c0_i32, %c0_i32_0 : i32, i32
  }
  func.func @transform_9(%arg0: i32, %arg1: i32) -> (i32, i32, i32) {
    %c0_i32 = arith.constant 0 : i32
    %c0_i32_0 = arith.constant 0 : i32
    %c0_i32_1 = arith.constant 0 : i32
    %c0_i32_2 = arith.constant 0 : i32
    return %c0_i32, %c0_i32_0, %c0_i32_1 : i32, i32, i32
  }
  func.func @transform_10(%arg0: i32, %arg1: i32) -> (i32, i32) {
    %c0_i32 = arith.constant 0 : i32
    %c0_i32_0 = arith.constant 0 : i32
    %c0_i32_1 = arith.constant 0 : i32
    return %c0_i32, %c0_i32_0 : i32, i32
  }
  func.func @transform_11(%arg0: i32, %arg1: i32) -> (i32, i32) {
    %c0_i32 = arith.constant 0 : i32
    %c0_i32_0 = arith.constant 0 : i32
    %c0_i32_1 = arith.constant 0 : i32
    return %c0_i32, %c0_i32_0 : i32, i32
  }
  func.func @transform_12(%arg0: i32, %arg1: i32) -> (i32, i32) {
    %c0_i32 = arith.constant 0 : i32
    %c0_i32_0 = arith.constant 0 : i32
    %c0_i32_1 = arith.constant 0 : i32
    return %c0_i32, %c0_i32_0 : i32, i32
  }
  func.func @transform_13(%arg0: i32, %arg1: i32) -> (i32, i32) {
    %c0_i32 = arith.constant 0 : i32
    %c0_i32_0 = arith.constant 0 : i32
    %c0_i32_1 = arith.constant 0 : i32
    return %c0_i32, %c0_i32_0 : i32, i32
  }
  func.func @transform_14(%arg0: i32, %arg1: i32) -> (i32, i32) {
    %c0_i32 = arith.constant 0 : i32
    %c0_i32_0 = arith.constant 0 : i32
    %c0_i32_1 = arith.constant 0 : i32
    return %c0_i32, %c0_i32_0 : i32, i32
  }
  func.func @transform_15(%arg0: i32, %arg1: i32) -> (i32, i32) {
    %c0_i32 = arith.constant 0 : i32
    %c0_i32_0 = arith.constant 0 : i32
    %c0_i32_1 = arith.constant 0 : i32
    return %c0_i32, %c0_i32_0 : i32, i32
  }
  func.func @transform_16(%arg0: i32, %arg1: i32) -> (i32, i32) {
    %c0_i32 = arith.constant 0 : i32
    %c0_i32_0 = arith.constant 0 : i32
    %c0_i32_1 = arith.constant 0 : i32
    return %c0_i32, %c0_i32_0 : i32, i32
  }
  func.func @transform_17(%arg0: i32, %arg1: i32) -> (i32, i32, i32) {
    %c0_i32 = arith.constant 0 : i32
    %c0_i32_0 = arith.constant 0 : i32
    return %arg0, %arg1, %c0_i32 : i32, i32, i32
  }
}

module attributes {stable_mosaic.version = 11 : i64} {
  func.func @encoder_block_kernel(%arg0: i32, %arg1: i32, %arg2: memref<1x16x32xf32, #tpu.memory_space<vmem>>, %arg3: memref<1x1x32xf32, #tpu.memory_space<vmem>>, %arg4: memref<1x1x32xf32, #tpu.memory_space<vmem>>, %arg5: memref<32x32xbf16, #tpu.memory_space<vmem>>, %arg6: memref<1x32xf32, #tpu.memory_space<vmem>>, %arg7: memref<32x32xbf16, #tpu.memory_space<vmem>>, %arg8: memref<1x32xf32, #tpu.memory_space<vmem>>, %arg9: memref<32x32xbf16, #tpu.memory_space<vmem>>, %arg10: memref<1x32xf32, #tpu.memory_space<vmem>>, %arg11: memref<4x8x32xbf16, #tpu.memory_space<vmem>>, %arg12: memref<1x32xf32, #tpu.memory_space<vmem>>, %arg13: memref<1x32xf32, #tpu.memory_space<vmem>>, %arg14: memref<1x32xf32, #tpu.memory_space<vmem>>, %arg15: memref<32x128xbf16, #tpu.memory_space<vmem>>, %arg16: memref<1x128xf32, #tpu.memory_space<vmem>>, %arg17: memref<128x32xbf16, #tpu.memory_space<vmem>>, %arg18: memref<1x32xf32, #tpu.memory_space<vmem>>, %arg19: memref<1x8x32xf32, #tpu.memory_space<vmem>>, %arg20: memref<4x16x8xbf16, #tpu.memory_space<vmem>>, %arg21: memref<4x16x8xbf16, #tpu.memory_space<vmem>>) attributes {dimension_semantics = [#tpu.dimension_semantics<parallel>, #tpu.dimension_semantics<arbitrary>], iteration_bounds = array<i64: 2, 2>, scalar_prefetch = 0 : i64, scratch_operands = 2 : i64, tpu.core_type = #tpu.core_type<tc>, window_params = [{transform_indices = @transform_0, window_bounds = array<i64: 1, 16, 32>}, {transform_indices = @transform_1, window_bounds = array<i64: 1, 1, 32>}, {transform_indices = @transform_2, window_bounds = array<i64: 1, 1, 32>}, {pipeline_mode = #tpu.pipeline_mode<synchronous>, transform_indices = @transform_3, window_bounds = array<i64: 32, 32>}, {pipeline_mode = #tpu.pipeline_mode<synchronous>, transform_indices = @transform_4, window_bounds = array<i64: 1, 32>}, {pipeline_mode = #tpu.pipeline_mode<synchronous>, transform_indices = @transform_5, window_bounds = array<i64: 32, 32>}, {pipeline_mode = #tpu.pipeline_mode<synchronous>, transform_indices = @transform_6, window_bounds = array<i64: 1, 32>}, {pipeline_mode = #tpu.pipeline_mode<synchronous>, transform_indices = @transform_7, window_bounds = array<i64: 32, 32>}, {pipeline_mode = #tpu.pipeline_mode<synchronous>, transform_indices = @transform_8, window_bounds = array<i64: 1, 32>}, {pipeline_mode = #tpu.pipeline_mode<synchronous>, transform_indices = @transform_9, window_bounds = array<i64: 4, 8, 32>}, {pipeline_mode = #tpu.pipeline_mode<synchronous>, transform_indices = @transform_10, window_bounds = array<i64: 1, 32>}, {pipeline_mode = #tpu.pipeline_mode<synchronous>, transform_indices = @transform_11, window_bounds = array<i64: 1, 32>}, {pipeline_mode = #tpu.pipeline_mode<synchronous>, transform_indices = @transform_12, window_bounds = array<i64: 1, 32>}, {pipeline_mode = #tpu.pipeline_mode<synchronous>, transform_indices = @transform_13, window_bounds = array<i64: 32, 128>}, {pipeline_mode = #tpu.pipeline_mode<synchronous>, transform_indices = @transform_14, window_bounds = array<i64: 1, 128>}, {pipeline_mode = #tpu.pipeline_mode<synchronous>, transform_indices = @transform_15, window_bounds = array<i64: 128, 32>}, {pipeline_mode = #tpu.pipeline_mode<synchronous>, transform_indices = @transform_16, window_bounds = array<i64: 1, 32>}, {transform_indices = @transform_17, window_bounds = array<i64: 1, 8, 32>}]} {
    %c0 = arith.constant 0 : index
    %c0_0 = arith.constant 0 : index
    %c0_1 = arith.constant 0 : index
    %0 = vector.load %arg3[%c0, %c0_0, %c0_1] : memref<1x1x32xf32, #tpu.memory_space<vmem>>, vector<1x1x32xf32>
    %1 = vector.shape_cast %0 : vector<1x1x32xf32> to vector<1x32xf32>
    %c0_2 = arith.constant 0 : index
    %c0_3 = arith.constant 0 : index
    %c0_4 = arith.constant 0 : index
    %2 = vector.load %arg4[%c0_2, %c0_3, %c0_4] : memref<1x1x32xf32, #tpu.memory_space<vmem>>, vector<1x1x32xf32>
    %3 = vector.shape_cast %2 : vector<1x1x32xf32> to vector<1x32xf32>
    %c0_i32 = arith.constant 0 : i32
    %4 = arith.cmpi eq, %arg1, %c0_i32 : i32
    %5 = arith.extui %4 : i1 to i32
    %c0_i32_5 = arith.constant 0 : i32
    %6 = arith.cmpi ne, %5, %c0_i32_5 : i32
    scf.if %6 {
      %c0_70 = arith.constant 0 : index
      %c0_71 = arith.constant 0 : index
      %c0_72 = arith.constant 0 : index
      %143 = vector.load %arg2[%c0_70, %c0_71, %c0_72] : memref<1x16x32xf32, #tpu.memory_space<vmem>>, vector<1x16x32xf32>
      %144 = vector.shape_cast %143 : vector<1x16x32xf32> to vector<16x32xf32>
      %cst_73 = arith.constant dense<0.000000e+00> : vector<16xf32>
      %145 = vector.multi_reduction <add>, %144, %cst_73 [1] : vector<16x32xf32> to vector<16xf32>
      %146 = vector.shape_cast %145 : vector<16xf32> to vector<16x1xf32>
      %cst_74 = arith.constant 3.200000e+01 : f32
      %147 = vector.broadcast %cst_74 : f32 to vector<16x1xf32>
      %148 = arith.divf %146, %147 : vector<16x1xf32>
      %149 = vector.broadcast %148 : vector<16x1xf32> to vector<16x32xf32>
      %150 = arith.subf %144, %149 : vector<16x32xf32>
      %151 = arith.mulf %150, %150 : vector<16x32xf32>
      %cst_75 = arith.constant dense<0.000000e+00> : vector<16xf32>
      %152 = vector.multi_reduction <add>, %151, %cst_75 [1] : vector<16x32xf32> to vector<16xf32>
      %153 = vector.shape_cast %152 : vector<16xf32> to vector<16x1xf32>
      %cst_76 = arith.constant 3.200000e+01 : f32
      %154 = vector.broadcast %cst_76 : f32 to vector<16x1xf32>
      %155 = arith.divf %153, %154 : vector<16x1xf32>
      %156 = vector.broadcast %148 : vector<16x1xf32> to vector<16x32xf32>
      %157 = arith.subf %144, %156 : vector<16x32xf32>
      %cst_77 = arith.constant 9.99999974E-6 : f32
      %158 = vector.broadcast %cst_77 : f32 to vector<16x1xf32>
      %159 = arith.addf %155, %158 : vector<16x1xf32>
      %160 = math.rsqrt %159 : vector<16x1xf32>
      %161 = vector.broadcast %160 : vector<16x1xf32> to vector<16x32xf32>
      %162 = arith.mulf %157, %161 : vector<16x32xf32>
      %cst_78 = arith.constant 1.000000e+00 : f32
      %163 = vector.broadcast %cst_78 : f32 to vector<1x32xf32>
      %164 = arith.addf %163, %1 : vector<1x32xf32>
      %165 = vector.broadcast %164 : vector<1x32xf32> to vector<16x32xf32>
      %166 = arith.mulf %162, %165 : vector<16x32xf32>
      %167 = vector.broadcast %3 : vector<1x32xf32> to vector<16x32xf32>
      %168 = arith.addf %166, %167 : vector<16x32xf32>
      %169 = arith.truncf %168 : vector<16x32xf32> to vector<16x32xbf16>
      %c0_79 = arith.constant 0 : index
      %c0_80 = arith.constant 0 : index
      %170 = vector.load %arg7[%c0_79, %c0_80] : memref<32x32xbf16, #tpu.memory_space<vmem>>, vector<32x32xbf16>
      %cst_81 = arith.constant dense<0.000000e+00> : vector<16x32xf32>
      %171 = tpu.matmul %169, %170, %cst_81 {dimension_numbers = #tpu.dot_dimension_numbers<[1], [0], [0], [1], [0, 0, 1, 1], [], []>} : vector<16x32xbf16>, vector<32x32xbf16>, vector<16x32xf32> -> vector<16x32xf32>
      %c0_82 = arith.constant 0 : index
      %c0_83 = arith.constant 0 : index
      %172 = vector.load %arg8[%c0_82, %c0_83] : memref<1x32xf32, #tpu.memory_space<vmem>>, vector<1x32xf32>
      %173 = vector.broadcast %172 : vector<1x32xf32> to vector<16x32xf32>
      %174 = arith.addf %171, %173 : vector<16x32xf32>
      %c0_84 = arith.constant 0 : index
      %c0_85 = arith.constant 0 : index
      %175 = vector.load %arg9[%c0_84, %c0_85] : memref<32x32xbf16, #tpu.memory_space<vmem>>, vector<32x32xbf16>
      %cst_86 = arith.constant dense<0.000000e+00> : vector<16x32xf32>
      %176 = tpu.matmul %169, %175, %cst_86 {dimension_numbers = #tpu.dot_dimension_numbers<[1], [0], [0], [1], [0, 0, 1, 1], [], []>} : vector<16x32xbf16>, vector<32x32xbf16>, vector<16x32xf32> -> vector<16x32xf32>
      %c0_87 = arith.constant 0 : index
      %c0_88 = arith.constant 0 : index
      %177 = vector.load %arg10[%c0_87, %c0_88] : memref<1x32xf32, #tpu.memory_space<vmem>>, vector<1x32xf32>
      %178 = vector.broadcast %177 : vector<1x32xf32> to vector<16x32xf32>
      %179 = arith.addf %176, %178 : vector<16x32xf32>
      %180 = vector.shape_cast %174 : vector<16x32xf32> to vector<16x4x8xf32>
      %181 = tpu.transpose %180, [1, 0, 2] : vector<16x4x8xf32> -> vector<4x16x8xf32>
      %182 = arith.truncf %181 : vector<4x16x8xf32> to vector<4x16x8xbf16>
      %c0_89 = arith.constant 0 : index
      %c0_90 = arith.constant 0 : index
      %c0_91 = arith.constant 0 : index
      %183 = vector.load %arg20[%c0_89, %c0_90, %c0_91] : memref<4x16x8xbf16, #tpu.memory_space<vmem>>, vector<4x16x8xbf16>
      tpu.vector_store %arg20[%c0_89, %c0_90, %c0_91], %182 {strides = array<i32>} : memref<4x16x8xbf16, #tpu.memory_space<vmem>>, vector<4x16x8xbf16>,
      %184 = vector.shape_cast %179 : vector<16x32xf32> to vector<16x4x8xf32>
      %185 = tpu.transpose %184, [1, 0, 2] : vector<16x4x8xf32> -> vector<4x16x8xf32>
      %186 = arith.truncf %185 : vector<4x16x8xf32> to vector<4x16x8xbf16>
      %c0_92 = arith.constant 0 : index
      %c0_93 = arith.constant 0 : index
      %c0_94 = arith.constant 0 : index
      %187 = vector.load %arg21[%c0_92, %c0_93, %c0_94] : memref<4x16x8xbf16, #tpu.memory_space<vmem>>, vector<4x16x8xbf16>
      tpu.vector_store %arg21[%c0_92, %c0_93, %c0_94], %186 {strides = array<i32>} : memref<4x16x8xbf16, #tpu.memory_space<vmem>>, vector<4x16x8xbf16>,
    } else {
    }
    %c8_i32 = arith.constant 8 : i32
    %7 = arith.muli %arg1, %c8_i32 : i32
    %8 = tpu.assume_multiple %7, 8 : i32
    %c0_6 = arith.constant 0 : index
    %9 = arith.index_cast %8 : i32 to index
    %c0_7 = arith.constant 0 : index
    %10 = vector.load %arg2[%c0_6, %9, %c0_7] : memref<1x16x32xf32, #tpu.memory_space<vmem>>, vector<1x8x32xf32>
    %11 = vector.shape_cast %10 : vector<1x8x32xf32> to vector<8x32xf32>
    %cst = arith.constant dense<0.000000e+00> : vector<8xf32>
    %12 = vector.multi_reduction <add>, %11, %cst [1] : vector<8x32xf32> to vector<8xf32>
    %13 = vector.shape_cast %12 : vector<8xf32> to vector<8x1xf32>
    %cst_8 = arith.constant 3.200000e+01 : f32
    %14 = vector.broadcast %cst_8 : f32 to vector<8x1xf32>
    %15 = arith.divf %13, %14 : vector<8x1xf32>
    %16 = vector.broadcast %15 : vector<8x1xf32> to vector<8x32xf32>
    %17 = arith.subf %11, %16 : vector<8x32xf32>
    %18 = arith.mulf %17, %17 : vector<8x32xf32>
    %cst_9 = arith.constant dense<0.000000e+00> : vector<8xf32>
    %19 = vector.multi_reduction <add>, %18, %cst_9 [1] : vector<8x32xf32> to vector<8xf32>
    %20 = vector.shape_cast %19 : vector<8xf32> to vector<8x1xf32>
    %cst_10 = arith.constant 3.200000e+01 : f32
    %21 = vector.broadcast %cst_10 : f32 to vector<8x1xf32>
    %22 = arith.divf %20, %21 : vector<8x1xf32>
    %23 = vector.broadcast %15 : vector<8x1xf32> to vector<8x32xf32>
    %24 = arith.subf %11, %23 : vector<8x32xf32>
    %cst_11 = arith.constant 9.99999974E-6 : f32
    %25 = vector.broadcast %cst_11 : f32 to vector<8x1xf32>
    %26 = arith.addf %22, %25 : vector<8x1xf32>
    %27 = math.rsqrt %26 : vector<8x1xf32>
    %28 = vector.broadcast %27 : vector<8x1xf32> to vector<8x32xf32>
    %29 = arith.mulf %24, %28 : vector<8x32xf32>
    %cst_12 = arith.constant 1.000000e+00 : f32
    %30 = vector.broadcast %cst_12 : f32 to vector<1x32xf32>
    %31 = arith.addf %30, %1 : vector<1x32xf32>
    %32 = vector.broadcast %31 : vector<1x32xf32> to vector<8x32xf32>
    %33 = arith.mulf %29, %32 : vector<8x32xf32>
    %34 = vector.broadcast %3 : vector<1x32xf32> to vector<8x32xf32>
    %35 = arith.addf %33, %34 : vector<8x32xf32>
    %36 = arith.truncf %35 : vector<8x32xf32> to vector<8x32xbf16>
    %c0_13 = arith.constant 0 : index
    %c0_14 = arith.constant 0 : index
    %37 = vector.load %arg5[%c0_13, %c0_14] : memref<32x32xbf16, #tpu.memory_space<vmem>>, vector<32x32xbf16>
    %cst_15 = arith.constant dense<0.000000e+00> : vector<8x32xf32>
    %38 = tpu.matmul %36, %37, %cst_15 {dimension_numbers = #tpu.dot_dimension_numbers<[1], [0], [0], [1], [0, 0, 1, 1], [], []>} : vector<8x32xbf16>, vector<32x32xbf16>, vector<8x32xf32> -> vector<8x32xf32>
    %c0_16 = arith.constant 0 : index
    %c0_17 = arith.constant 0 : index
    %39 = vector.load %arg6[%c0_16, %c0_17] : memref<1x32xf32, #tpu.memory_space<vmem>>, vector<1x32xf32>
    %40 = vector.broadcast %39 : vector<1x32xf32> to vector<8x32xf32>
    %41 = arith.addf %38, %40 : vector<8x32xf32>
    %cst_18 = arith.constant 0.353553385 : f32
    %42 = vector.broadcast %cst_18 : f32 to vector<8x32xf32>
    %43 = arith.mulf %41, %42 : vector<8x32xf32>
    %44 = vector.shape_cast %43 : vector<8x32xf32> to vector<8x4x8xf32>
    %45 = tpu.transpose %44, [1, 0, 2] : vector<8x4x8xf32> -> vector<4x8x8xf32>
    %46 = arith.truncf %45 : vector<4x8x8xf32> to vector<4x8x8xbf16>
    %c0_19 = arith.constant 0 : index
    %c0_20 = arith.constant 0 : index
    %c0_21 = arith.constant 0 : index
    %47 = vector.load %arg20[%c0_19, %c0_20, %c0_21] : memref<4x16x8xbf16, #tpu.memory_space<vmem>>, vector<4x16x8xbf16>
    "tpu.trace_start"() <{level = 10 : i32, message = "hqd,hkd->hqk"}> : () -> ()
    %cst_22 = arith.constant dense<0.000000e+00> : vector<4x8x16xf32>
    %48 = tpu.matmul %46, %47, %cst_22 {dimension_numbers = #tpu.dot_dimension_numbers<[2], [2], [1], [1], [0, 0, 0, 1, 1, 1], [0], [0]>} : vector<4x8x8xbf16>, vector<4x16x8xbf16>, vector<4x8x16xf32> -> vector<4x8x16xf32>
    "tpu.trace_stop"() : () -> ()
    %cst_23 = arith.constant dense<0xFF800000> : vector<4x8xf32>
    %49 = vector.multi_reduction <maximumf>, %48, %cst_23 [2] : vector<4x8x16xf32> to vector<4x8xf32>
    %50 = vector.shape_cast %49 : vector<4x8xf32> to vector<4x8x1xf32>
    %51 = vector.broadcast %50 : vector<4x8x1xf32> to vector<4x8x16xf32>
    %52 = arith.subf %48, %51 : vector<4x8x16xf32>
    %53 = math.exp %52 : vector<4x8x16xf32>
    %cst_24 = arith.constant dense<0.000000e+00> : vector<4x8xf32>
    %54 = vector.multi_reduction <add>, %53, %cst_24 [2] : vector<4x8x16xf32> to vector<4x8xf32>
    %55 = vector.shape_cast %54 : vector<4x8xf32> to vector<4x8x1xf32>
    %56 = tpu.reciprocal %55 {approx = true} : vector<4x8x1xf32> -> vector<4x8x1xf32>
    %57 = vector.broadcast %56 : vector<4x8x1xf32> to vector<4x8x16xf32>
    %58 = arith.mulf %53, %57 : vector<4x8x16xf32>
    %59 = arith.truncf %58 : vector<4x8x16xf32> to vector<4x8x16xbf16>
    %c0_25 = arith.constant 0 : index
    %c0_26 = arith.constant 0 : index
    %c0_27 = arith.constant 0 : index
    %60 = vector.load %arg21[%c0_25, %c0_26, %c0_27] : memref<4x16x8xbf16, #tpu.memory_space<vmem>>, vector<4x16x8xbf16>
    "tpu.trace_start"() <{level = 10 : i32, message = "hqk,hkd->hqd"}> : () -> ()
    %cst_28 = arith.constant dense<0.000000e+00> : vector<4x8x8xf32>
    %61 = tpu.matmul %59, %60, %cst_28 {dimension_numbers = #tpu.dot_dimension_numbers<[2], [1], [1], [2], [0, 0, 0, 1, 1, 2], [0], [0]>} : vector<4x8x16xbf16>, vector<4x16x8xbf16>, vector<4x8x8xf32> -> vector<4x8x8xf32>
    %cst_29 = arith.constant 0.000000e+00 : f32
    "tpu.trace_stop"() : () -> ()
    %62 = vector.broadcast %cst_29 : f32 to vector<8x32xf32>
    %63 = vector.extract_strided_slice %61 {offsets = [0, 0, 0], sizes = [1, 8, 8], strides = [1, 1, 1]} : vector<4x8x8xf32> to vector<1x8x8xf32>
    %64 = vector.shape_cast %63 : vector<1x8x8xf32> to vector<8x8xf32>
    %65 = arith.truncf %64 : vector<8x8xf32> to vector<8x8xbf16>
    %c0_30 = arith.constant 0 : index
    %c0_31 = arith.constant 0 : index
    %c0_32 = arith.constant 0 : index
    %66 = vector.load %arg11[%c0_30, %c0_31, %c0_32] : memref<4x8x32xbf16, #tpu.memory_space<vmem>>, vector<1x8x32xbf16>
    %67 = vector.shape_cast %66 : vector<1x8x32xbf16> to vector<8x32xbf16>
    %cst_33 = arith.constant dense<0.000000e+00> : vector<8x32xf32>
    %68 = tpu.matmul %65, %67, %cst_33 {dimension_numbers = #tpu.dot_dimension_numbers<[1], [0], [0], [1], [0, 0, 1, 1], [], []>} : vector<8x8xbf16>, vector<8x32xbf16>, vector<8x32xf32> -> vector<8x32xf32>
    %69 = arith.addf %62, %68 : vector<8x32xf32>
    %70 = vector.extract_strided_slice %61 {offsets = [1, 0, 0], sizes = [1, 8, 8], strides = [1, 1, 1]} : vector<4x8x8xf32> to vector<1x8x8xf32>
    %71 = vector.shape_cast %70 : vector<1x8x8xf32> to vector<8x8xf32>
    %72 = arith.truncf %71 : vector<8x8xf32> to vector<8x8xbf16>
    %c1 = arith.constant 1 : index
    %c0_34 = arith.constant 0 : index
    %c0_35 = arith.constant 0 : index
    %73 = vector.load %arg11[%c1, %c0_34, %c0_35] : memref<4x8x32xbf16, #tpu.memory_space<vmem>>, vector<1x8x32xbf16>
    %74 = vector.shape_cast %73 : vector<1x8x32xbf16> to vector<8x32xbf16>
    %cst_36 = arith.constant dense<0.000000e+00> : vector<8x32xf32>
    %75 = tpu.matmul %72, %74, %cst_36 {dimension_numbers = #tpu.dot_dimension_numbers<[1], [0], [0], [1], [0, 0, 1, 1], [], []>} : vector<8x8xbf16>, vector<8x32xbf16>, vector<8x32xf32> -> vector<8x32xf32>
    %76 = arith.addf %69, %75 : vector<8x32xf32>
    %77 = vector.extract_strided_slice %61 {offsets = [2, 0, 0], sizes = [1, 8, 8], strides = [1, 1, 1]} : vector<4x8x8xf32> to vector<1x8x8xf32>
    %78 = vector.shape_cast %77 : vector<1x8x8xf32> to vector<8x8xf32>
    %79 = arith.truncf %78 : vector<8x8xf32> to vector<8x8xbf16>
    %c2 = arith.constant 2 : index
    %c0_37 = arith.constant 0 : index
    %c0_38 = arith.constant 0 : index
    %80 = vector.load %arg11[%c2, %c0_37, %c0_38] : memref<4x8x32xbf16, #tpu.memory_space<vmem>>, vector<1x8x32xbf16>
    %81 = vector.shape_cast %80 : vector<1x8x32xbf16> to vector<8x32xbf16>
    %cst_39 = arith.constant dense<0.000000e+00> : vector<8x32xf32>
    %82 = tpu.matmul %79, %81, %cst_39 {dimension_numbers = #tpu.dot_dimension_numbers<[1], [0], [0], [1], [0, 0, 1, 1], [], []>} : vector<8x8xbf16>, vector<8x32xbf16>, vector<8x32xf32> -> vector<8x32xf32>
    %83 = arith.addf %76, %82 : vector<8x32xf32>
    %84 = vector.extract_strided_slice %61 {offsets = [3, 0, 0], sizes = [1, 8, 8], strides = [1, 1, 1]} : vector<4x8x8xf32> to vector<1x8x8xf32>
    %85 = vector.shape_cast %84 : vector<1x8x8xf32> to vector<8x8xf32>
    %86 = arith.truncf %85 : vector<8x8xf32> to vector<8x8xbf16>
    %c3 = arith.constant 3 : index
    %c0_40 = arith.constant 0 : index
    %c0_41 = arith.constant 0 : index
    %87 = vector.load %arg11[%c3, %c0_40, %c0_41] : memref<4x8x32xbf16, #tpu.memory_space<vmem>>, vector<1x8x32xbf16>
    %88 = vector.shape_cast %87 : vector<1x8x32xbf16> to vector<8x32xbf16>
    %cst_42 = arith.constant dense<0.000000e+00> : vector<8x32xf32>
    %89 = tpu.matmul %86, %88, %cst_42 {dimension_numbers = #tpu.dot_dimension_numbers<[1], [0], [0], [1], [0, 0, 1, 1], [], []>} : vector<8x8xbf16>, vector<8x32xbf16>, vector<8x32xf32> -> vector<8x32xf32>
    %90 = arith.addf %83, %89 : vector<8x32xf32>
    %c0_43 = arith.constant 0 : index
    %c0_44 = arith.constant 0 : index
    %91 = vector.load %arg12[%c0_43, %c0_44] : memref<1x32xf32, #tpu.memory_space<vmem>>, vector<1x32xf32>
    %92 = vector.broadcast %91 : vector<1x32xf32> to vector<8x32xf32>
    %93 = arith.addf %90, %92 : vector<8x32xf32>
    %94 = arith.addf %11, %93 : vector<8x32xf32>
    %cst_45 = arith.constant dense<0.000000e+00> : vector<8xf32>
    %95 = vector.multi_reduction <add>, %94, %cst_45 [1] : vector<8x32xf32> to vector<8xf32>
    %96 = vector.shape_cast %95 : vector<8xf32> to vector<8x1xf32>
    %cst_46 = arith.constant 3.200000e+01 : f32
    %97 = vector.broadcast %cst_46 : f32 to vector<8x1xf32>
    %98 = arith.divf %96, %97 : vector<8x1xf32>
    %99 = vector.broadcast %98 : vector<8x1xf32> to vector<8x32xf32>
    %100 = arith.subf %94, %99 : vector<8x32xf32>
    %101 = arith.mulf %100, %100 : vector<8x32xf32>
    %cst_47 = arith.constant dense<0.000000e+00> : vector<8xf32>
    %102 = vector.multi_reduction <add>, %101, %cst_47 [1] : vector<8x32xf32> to vector<8xf32>
    %103 = vector.shape_cast %102 : vector<8xf32> to vector<8x1xf32>
    %cst_48 = arith.constant 3.200000e+01 : f32
    %104 = vector.broadcast %cst_48 : f32 to vector<8x1xf32>
    %105 = arith.divf %103, %104 : vector<8x1xf32>
    %106 = vector.broadcast %98 : vector<8x1xf32> to vector<8x32xf32>
    %107 = arith.subf %94, %106 : vector<8x32xf32>
    %cst_49 = arith.constant 9.99999974E-6 : f32
    %108 = vector.broadcast %cst_49 : f32 to vector<8x1xf32>
    %109 = arith.addf %105, %108 : vector<8x1xf32>
    %110 = math.rsqrt %109 : vector<8x1xf32>
    %111 = vector.broadcast %110 : vector<8x1xf32> to vector<8x32xf32>
    %112 = arith.mulf %107, %111 : vector<8x32xf32>
    %c0_50 = arith.constant 0 : index
    %c0_51 = arith.constant 0 : index
    %113 = vector.load %arg13[%c0_50, %c0_51] : memref<1x32xf32, #tpu.memory_space<vmem>>, vector<1x32xf32>
    %114 = vector.broadcast %113 : vector<1x32xf32> to vector<8x32xf32>
    %115 = arith.mulf %112, %114 : vector<8x32xf32>
    %c0_52 = arith.constant 0 : index
    %c0_53 = arith.constant 0 : index
    %116 = vector.load %arg14[%c0_52, %c0_53] : memref<1x32xf32, #tpu.memory_space<vmem>>, vector<1x32xf32>
    %117 = vector.broadcast %116 : vector<1x32xf32> to vector<8x32xf32>
    %118 = arith.addf %115, %117 : vector<8x32xf32>
    %119 = arith.truncf %118 : vector<8x32xf32> to vector<8x32xbf16>
    %c0_54 = arith.constant 0 : index
    %c0_55 = arith.constant 0 : index
    %120 = vector.load %arg15[%c0_54, %c0_55] : memref<32x128xbf16, #tpu.memory_space<vmem>>, vector<32x128xbf16>
    %cst_56 = arith.constant dense<0.000000e+00> : vector<8x128xf32>
    %121 = tpu.matmul %119, %120, %cst_56 {dimension_numbers = #tpu.dot_dimension_numbers<[1], [0], [0], [1], [0, 0, 1, 1], [], []>} : vector<8x32xbf16>, vector<32x128xbf16>, vector<8x128xf32> -> vector<8x128xf32>
    %c0_57 = arith.constant 0 : index
    %c0_58 = arith.constant 0 : index
    %122 = vector.load %arg16[%c0_57, %c0_58] : memref<1x128xf32, #tpu.memory_space<vmem>>, vector<1x128xf32>
    %123 = vector.broadcast %122 : vector<1x128xf32> to vector<8x128xf32>
    %124 = arith.addf %121, %123 : vector<8x128xf32>
    %cst_59 = arith.constant 5.000000e-01 : f32
    %125 = vector.broadcast %cst_59 : f32 to vector<8x128xf32>
    %126 = arith.mulf %125, %124 : vector<8x128xf32>
    %cst_60 = arith.constant 0.707106769 : f32
    %127 = vector.broadcast %cst_60 : f32 to vector<8x128xf32>
    %128 = arith.mulf %124, %127 : vector<8x128xf32>
    %129 = math.erf %128 : vector<8x128xf32>
    %cst_61 = arith.constant 1.000000e+00 : f32
    %130 = vector.broadcast %cst_61 : f32 to vector<8x128xf32>
    %131 = arith.addf %130, %129 : vector<8x128xf32>
    %132 = arith.mulf %126, %131 : vector<8x128xf32>
    %133 = arith.truncf %132 : vector<8x128xf32> to vector<8x128xbf16>
    %c0_62 = arith.constant 0 : index
    %c0_63 = arith.constant 0 : index
    %134 = vector.load %arg17[%c0_62, %c0_63] : memref<128x32xbf16, #tpu.memory_space<vmem>>, vector<128x32xbf16>
    %cst_64 = arith.constant dense<0.000000e+00> : vector<8x32xf32>
    %135 = tpu.matmul %133, %134, %cst_64 {dimension_numbers = #tpu.dot_dimension_numbers<[1], [0], [0], [1], [0, 0, 1, 1], [], []>} : vector<8x128xbf16>, vector<128x32xbf16>, vector<8x32xf32> -> vector<8x32xf32>
    %c0_65 = arith.constant 0 : index
    %c0_66 = arith.constant 0 : index
    %136 = vector.load %arg18[%c0_65, %c0_66] : memref<1x32xf32, #tpu.memory_space<vmem>>, vector<1x32xf32>
    %137 = vector.broadcast %136 : vector<1x32xf32> to vector<8x32xf32>
    %138 = arith.addf %135, %137 : vector<8x32xf32>
    %139 = arith.addf %94, %138 : vector<8x32xf32>
    %c0_67 = arith.constant 0 : index
    %c0_68 = arith.constant 0 : index
    %c0_69 = arith.constant 0 : index
    %140 = vector.load %arg19[%c0_67, %c0_68, %c0_69] : memref<1x8x32xf32, #tpu.memory_space<vmem>>, vector<1x8x32xf32>
    %141 = vector.shape_cast %140 : vector<1x8x32xf32> to vector<8x32xf32>
    %142 = vector.shape_cast %139 : vector<8x32xf32> to vector<1x8x32xf32>
    tpu.vector_store %arg19[%c0_67, %c0_68, %c0_69], %142 {strides = array<i32>} : memref<1x8x32xf32, #tpu.memory_space<vmem>>, vector<1x8x32xf32>,
    return
  }
  func.func @transform_0(%arg0: i32, %arg1: i32) -> (i32, i32, i32) {
    %c0_i32 = arith.constant 0 : i32
    %c0_i32_0 = arith.constant 0 : i32
    %c0_i32_1 = arith.constant 0 : i32
    return %arg0, %c0_i32, %c0_i32_0 : i32, i32, i32
  }
  func.func @transform_1(%arg0: i32, %arg1: i32) -> (i32, i32, i32) {
    %c0_i32 = arith.constant 0 : i32
    %c0_i32_0 = arith.constant 0 : i32
    %c0_i32_1 = arith.constant 0 : i32
    return %arg0, %c0_i32, %c0_i32_0 : i32, i32, i32
  }
  func.func @transform_2(%arg0: i32, %arg1: i32) -> (i32, i32, i32) {
    %c0_i32 = arith.constant 0 : i32
    %c0_i32_0 = arith.constant 0 : i32
    %c0_i32_1 = arith.constant 0 : i32
    return %arg0, %c0_i32, %c0_i32_0 : i32, i32, i32
  }
  func.func @transform_3(%arg0: i32, %arg1: i32) -> (i32, i32) {
    %c0_i32 = arith.constant 0 : i32
    %c0_i32_0 = arith.constant 0 : i32
    %c0_i32_1 = arith.constant 0 : i32
    return %c0_i32, %c0_i32_0 : i32, i32
  }
  func.func @transform_4(%arg0: i32, %arg1: i32) -> (i32, i32) {
    %c0_i32 = arith.constant 0 : i32
    %c0_i32_0 = arith.constant 0 : i32
    %c0_i32_1 = arith.constant 0 : i32
    return %c0_i32, %c0_i32_0 : i32, i32
  }
  func.func @transform_5(%arg0: i32, %arg1: i32) -> (i32, i32) {
    %c0_i32 = arith.constant 0 : i32
    %c0_i32_0 = arith.constant 0 : i32
    %c0_i32_1 = arith.constant 0 : i32
    return %c0_i32, %c0_i32_0 : i32, i32
  }
  func.func @transform_6(%arg0: i32, %arg1: i32) -> (i32, i32) {
    %c0_i32 = arith.constant 0 : i32
    %c0_i32_0 = arith.constant 0 : i32
    %c0_i32_1 = arith.constant 0 : i32
    return %c0_i32, %c0_i32_0 : i32, i32
  }
  func.func @transform_7(%arg0: i32, %arg1: i32) -> (i32, i32) {
    %c0_i32 = arith.constant 0 : i32
    %c0_i32_0 = arith.constant 0 : i32
    %c0_i32_1 = arith.constant 0 : i32
    return %c0_i32, %c0_i32_0 : i32, i32
  }
  func.func @transform_8(%arg0: i32, %arg1: i32) -> (i32, i32) {
    %c0_i32 = arith.constant 0 : i32
    %c0_i32_0 = arith.constant 0 : i32
    %c0_i32_1 = arith.constant 0 : i32
    return %c0_i32, %c0_i32_0 : i32, i32
  }
  func.func @transform_9(%arg0: i32, %arg1: i32) -> (i32, i32, i32) {
    %c0_i32 = arith.constant 0 : i32
    %c0_i32_0 = arith.constant 0 : i32
    %c0_i32_1 = arith.constant 0 : i32
    %c0_i32_2 = arith.constant 0 : i32
    return %c0_i32, %c0_i32_0, %c0_i32_1 : i32, i32, i32
  }
  func.func @transform_10(%arg0: i32, %arg1: i32) -> (i32, i32) {
    %c0_i32 = arith.constant 0 : i32
    %c0_i32_0 = arith.constant 0 : i32
    %c0_i32_1 = arith.constant 0 : i32
    return %c0_i32, %c0_i32_0 : i32, i32
  }
  func.func @transform_11(%arg0: i32, %arg1: i32) -> (i32, i32) {
    %c0_i32 = arith.constant 0 : i32
    %c0_i32_0 = arith.constant 0 : i32
    %c0_i32_1 = arith.constant 0 : i32
    return %c0_i32, %c0_i32_0 : i32, i32
  }
  func.func @transform_12(%arg0: i32, %arg1: i32) -> (i32, i32) {
    %c0_i32 = arith.constant 0 : i32
    %c0_i32_0 = arith.constant 0 : i32
    %c0_i32_1 = arith.constant 0 : i32
    return %c0_i32, %c0_i32_0 : i32, i32
  }
  func.func @transform_13(%arg0: i32, %arg1: i32) -> (i32, i32) {
    %c0_i32 = arith.constant 0 : i32
    %c0_i32_0 = arith.constant 0 : i32
    %c0_i32_1 = arith.constant 0 : i32
    return %c0_i32, %c0_i32_0 : i32, i32
  }
  func.func @transform_14(%arg0: i32, %arg1: i32) -> (i32, i32) {
    %c0_i32 = arith.constant 0 : i32
    %c0_i32_0 = arith.constant 0 : i32
    %c0_i32_1 = arith.constant 0 : i32
    return %c0_i32, %c0_i32_0 : i32, i32
  }
  func.func @transform_15(%arg0: i32, %arg1: i32) -> (i32, i32) {
    %c0_i32 = arith.constant 0 : i32
    %c0_i32_0 = arith.constant 0 : i32
    %c0_i32_1 = arith.constant 0 : i32
    return %c0_i32, %c0_i32_0 : i32, i32
  }
  func.func @transform_16(%arg0: i32, %arg1: i32) -> (i32, i32) {
    %c0_i32 = arith.constant 0 : i32
    %c0_i32_0 = arith.constant 0 : i32
    %c0_i32_1 = arith.constant 0 : i32
    return %c0_i32, %c0_i32_0 : i32, i32
  }
  func.func @transform_17(%arg0: i32, %arg1: i32) -> (i32, i32, i32) {
    %c0_i32 = arith.constant 0 : i32
    %c0_i32_0 = arith.constant 0 : i32
    return %arg0, %arg1, %c0_i32 : i32, i32, i32
  }
}

</mosaic_0001>

<llo_original>
// kernel: tpu_custom_call.1
$region0: #{tpu_custom_call.1}
  #allocation0 [shape = 'u32[]', space=smem, size = 0x4, offset = 0x4, fixed_abs, tag = 'smem constant byte address 0x4 - core index']
  #allocation1 [shape = 'u32[144,128]{1,0:T(1,128)}', space=vmem, size = 0x12000, scoped, tag = 'internal scratch']
  #allocation2 [shape = 'bf16[4,16,8]{2,1,0:T(16,128)(2,1)}', space=vmem, size = 0x4000, scoped, tag = 'scratch operand']
  #allocation3 [shape = 'bf16[4,16,8]{2,1,0:T(16,128)(2,1)}', space=vmem, size = 0x4000, scoped, tag = 'scratch operand']
  %s0 = inlined_call_operand.hbm [shape: f32[2,16,32], index: 0, kind: input, shape index: {}]
  %s1 = inlined_call_operand.hbm [shape: f32[2,1,32], index: 1, kind: input, shape index: {}]
  %s2 = inlined_call_operand.hbm [shape: f32[2,1,32], index: 2, kind: input, shape index: {}]
  %s3 = inlined_call_operand.hbm [shape: bf16[32,32], index: 3, kind: input, shape index: {}]
  %s4 = inlined_call_operand.hbm [shape: f32[1,32], index: 4, kind: input, shape index: {}]
  %s5 = inlined_call_operand.hbm [shape: bf16[32,32], index: 5, kind: input, shape index: {}]
  %s6 = inlined_call_operand.hbm [shape: f32[1,32], index: 6, kind: input, shape index: {}]
  %s7 = inlined_call_operand.hbm [shape: bf16[32,32], index: 7, kind: input, shape index: {}]
  %s8 = inlined_call_operand.hbm [shape: f32[1,32], index: 8, kind: input, shape index: {}]
  %s9 = inlined_call_operand.hbm [shape: bf16[4,8,32], index: 9, kind: input, shape index: {}]
  %s10 = inlined_call_operand.hbm [shape: f32[1,32], index: 10, kind: input, shape index: {}]
  %s11 = inlined_call_operand.hbm [shape: f32[1,32], index: 11, kind: input, shape index: {}]
  %s12 = inlined_call_operand.hbm [shape: f32[1,32], index: 12, kind: input, shape index: {}]
  %s13 = inlined_call_operand.hbm [shape: bf16[32,128], index: 13, kind: input, shape index: {}]
  %s14 = inlined_call_operand.hbm [shape: f32[1,128], index: 14, kind: input, shape index: {}]
  %s15 = inlined_call_operand.hbm [shape: bf16[128,32], index: 15, kind: input, shape index: {}]
  %s16 = inlined_call_operand.hbm [shape: f32[1,32], index: 16, kind: input, shape index: {}]
  %s17 = inlined_call_operand.hbm [shape: f32[2,16,32], index: 17, kind: output, shape index: {}]
  %s18 = sld [smem:[#allocation0]]
  $region173: #{tpu_custom_call.1} parent=0
    _
  %s20 = ssub.s32 1, %s18
  %s21 = scalar_select 0, %s20, %s18
  $region1: #{tpu_custom_call.1} parent=0
    #allocation4 [shape = 'u8[8192]{0}', space=vmem, size = 0x2000, scoped, tag = 'input window, operand 0, single buffered']
    #allocation5 [shape = 's32[2]{0}', space=sflag, size = 0x8, scoped, tag = 'scoped memory for tpu_custom_call.1']
    #allocation6 [shape = 's32[2]{0}', space=sflag, size = 0x8, scoped, tag = 'scoped memory for tpu_custom_call.1']
    #allocation7 [shape = 'u8[1024]{0}', space=vmem, size = 0x400, scoped, tag = 'input window, operand 1']
    #allocation8 [shape = 's32[2]{0}', space=sflag, size = 0x8, scoped, tag = 'scoped memory for tpu_custom_call.1']
    #allocation9 [shape = 'u8[1024]{0}', space=vmem, size = 0x400, scoped, tag = 'input window, operand 2']
    #allocation10 [shape = 'u8[8192]{0}', space=vmem, size = 0x2000, scoped, tag = 'input window, operand 3, single buffered']
    #allocation11 [shape = 's32[1]{0}', space=sflag, size = 0x4, scoped, tag = 'scoped memory for tpu_custom_call.1']
    #allocation12 [shape = 'u8[512]{0}', space=vmem, size = 0x400, scoped, tag = 'input window, operand 4, single buffered']
    #allocation13 [shape = 'u8[8192]{0}', space=vmem, size = 0x2000, scoped, tag = 'input window, operand 5, single buffered']
    #allocation14 [shape = 's32[1]{0}', space=sflag, size = 0x4, scoped, tag = 'scoped memory for tpu_custom_call.1']
    #allocation15 [shape = 'u8[512]{0}', space=vmem, size = 0x400, scoped, tag = 'input window, operand 6, single buffered']
    #allocation16 [shape = 'u8[8192]{0}', space=vmem, size = 0x2000, scoped, tag = 'input window, operand 7, single buffered']
    #allocation17 [shape = 's32[1]{0}', space=sflag, size = 0x4, scoped, tag = 'scoped memory for tpu_custom_call.1']
    #allocation18 [shape = 'u8[512]{0}', space=vmem, size = 0x400, scoped, tag = 'input window, operand 8, single buffered']
    #allocation19 [shape = 'u8[8192]{0}', space=vmem, size = 0x2000, scoped, tag = 'input window, operand 9, single buffered']
    #allocation20 [shape = 's32[1]{0}', space=sflag, size = 0x4, scoped, tag = 'scoped memory for tpu_custom_call.1']
    #allocation21 [shape = 'u8[512]{0}', space=vmem, size = 0x400, scoped, tag = 'input window, operand 10, single buffered']
    #allocation22 [shape = 'u8[512]{0}', space=vmem, size = 0x400, scoped, tag = 'input window, operand 11, single buffered']
    #allocation23 [shape = 's32[1]{0}', space=sflag, size = 0x4, scoped, tag = 'scoped memory for tpu_custom_call.1']
    #allocation24 [shape = 'u8[512]{0}', space=vmem, size = 0x400, scoped, tag = 'input window, operand 12, single buffered']
    #allocation25 [shape = 'u8[8192]{0}', space=vmem, size = 0x2000, scoped, tag = 'input window, operand 13, single buffered']
    #allocation26 [shape = 's32[1]{0}', space=sflag, size = 0x4, scoped, tag = 'scoped memory for tpu_custom_call.1']
    #allocation27 [shape = 'u8[512]{0}', space=vmem, size = 0x400, scoped, tag = 'input window, operand 14, single buffered']
    #allocation28 [shape = 'u8[32768]{0}', space=vmem, size = 0x8000, scoped, tag = 'input window, operand 15, single buffered']
    #allocation29 [shape = 's32[1]{0}', space=sflag, size = 0x4, scoped, tag = 'scoped memory for tpu_custom_call.1']
    #allocation30 [shape = 'u8[512]{0}', space=vmem, size = 0x400, scoped, tag = 'input window, operand 16, single buffered']
    #allocation31 [shape = 'u8[8192]{0}', space=vmem, size = 0x2000, scoped, tag = 'output window, operand 0']
    %22 = vsyncpa [#allocation5], 0
    %23 = vsyncpa [#allocation8], 0
    %s24 = scalar_lea.sflag [#allocation8], 1
    %25 = vsyncpa %s24, 0
    %26 = vsyncpa [#allocation11], 0
    %27 = vsyncpa [#allocation14], 0
    %28 = vsyncpa [#allocation17], 0
    %29 = vsyncpa [#allocation20], 0
    %30 = vsyncpa [#allocation23], 0
    %31 = vsyncpa [#allocation26], 0
    %32 = vsyncpa [#allocation29], 0
    %33 = vsyncpa [#allocation6], 0
    %s34 = scalar_lea.sflag [#allocation6], 1
    %35 = vsyncpa %s34, 0
    loop: start=0, step=1, limit=6
    $region2: #{tpu_custom_call.1} parent=1 // loop_pre_header
      _
    $region3: #{tpu_custom_call.1} parent=1 // loop_header
      %s37 = sphi 0, %s41
      %p38 = scmp.ge.s32.totalorder %s37, 6
      %s44 = sphi 0, %s56
      %s45 = sphi 0, %s52
      %s46 = sphi 0, %s44
      %s47 = sphi 0, %s45
      %s48 = sphi 0, %s46
      %s49 = sphi 0, %s47
      %s59 = sphi 0, %s61
      %s62 = sphi 0, %s59
      %s63 = sphi 0, %s62
      %s79 = sphi 0, %s63
      %s85 = sphi 0, %s87
      %s88 = sphi 0, %s85
      %s89 = sphi 0, %s88
      %s105 = sphi 0, %s89
      %s111 = sphi 0, %s113
      %s114 = sphi 0, %s111
      %s115 = sphi 0, %s114
      %s131 = sphi 0, %s115
      %s135 = sphi 0, %s135
      %s137 = sphi 0, %s135
      %s138 = sphi 0, %s137
      %s152 = sphi 0, %s138
      %s156 = sphi 0, %s156
      %s158 = sphi 0, %s156
      %s159 = sphi 0, %s158
      %s173 = sphi 0, %s159
      %s177 = sphi 0, %s177
      %s179 = sphi 0, %s177
      %s180 = sphi 0, %s179
      %s194 = sphi 0, %s180
      %s198 = sphi 0, %s198
      %s200 = sphi 0, %s198
      %s201 = sphi 0, %s200
      %s215 = sphi 0, %s201
      %s219 = sphi 0, %s219
      %s221 = sphi 0, %s219
      %s222 = sphi 0, %s221
      %s236 = sphi 0, %s222
      %s240 = sphi 0, %s240
      %s242 = sphi 0, %s240
      %s243 = sphi 0, %s242
      %s257 = sphi 0, %s243
      %s261 = sphi 0, %s261
      %s263 = sphi 0, %s261
      %s264 = sphi 0, %s263
      %s278 = sphi 0, %s264
      %s282 = sphi 0, %s282
      %s284 = sphi 0, %s282
      %s285 = sphi 0, %s284
      %s299 = sphi 0, %s285
      %s303 = sphi 0, %s303
      %s305 = sphi 0, %s303
      %s306 = sphi 0, %s305
      %s320 = sphi 0, %s306
      %s324 = sphi 0, %s324
      %s326 = sphi 0, %s324
      %s327 = sphi 0, %s326
      %s341 = sphi 0, %s327
      %s345 = sphi 0, %s345
      %s347 = sphi 0, %s345
      %s348 = sphi 0, %s347
      %s362 = sphi 0, %s348
      %s366 = sphi 0, %s366
      %s368 = sphi 0, %s366
      %s369 = sphi 0, %s368
      %s383 = sphi 0, %s369
      %s387 = sphi 0, %s387
      %s389 = sphi 0, %s387
      %s390 = sphi 0, %s389
      %s404 = sphi 0, %s390
      %s408 = sphi 0, %s408
      %s410 = sphi 0, %s408
      %s411 = sphi 0, %s410
      %s425 = sphi 0, %s411
      %s433 = sphi 0, %s435
      %s436 = sphi 0, %s433
      %s437 = sphi 0, %s436
      %s453 = sphi 0, %s437
    $region4: #{tpu_custom_call.1} parent=1 // loop_header_branch
      %40 = sbr.rel (%p38) target = $region8
    $region5: #{tpu_custom_call.1} parent=1 // loop_body
      %s42 = ssub.s32 %s37, 1
      %s43 = ssub.s32 %s37, 2
      %s50 = sadd.s32 1, %s45
      %p51 = scmp.ge.s32.totalorder %s50, 2
      %s52 = scalar_select %p51, 0, %s50
      %s53 = sadd.s32 1, %s44
      %s54 = scalar_select %p51, %s53, %s44
      %p55 = scmp.ge.s32.totalorder %s54, 2
      %s56 = scalar_select %p55, 0, %s54
      %s57 = ssub.s32 %s44, %s56
      %p58 = scmp.eq.s32.totalorder %s57, 0
      %s60 = sadd.s32 %s59, 1
      %s61 = scalar_select %p58, %s59, %s60
      %p64 = pneg %p58
      %p65 = scmp.eq.s32.totalorder %s37, 3
      %p66 = por %p64, %p65
      %p67 = scmp.ne.s32.totalorder %s59, %s62
      %p68 = scmp.eq.s32.totalorder %s37, 0
      %p69 = por %p67, %p68
      %p70 = scmp.ne.s32.totalorder %s59, %s62
      %p71 = scmp.eq.s32.totalorder %s42, 3
      %p72 = por %p70, %p71
      %p73 = scmp.ne.s32.totalorder %s62, %s63
      %p74 = scmp.eq.s32.totalorder %s42, 0
      %p75 = por %p73, %p74
      %p76 = scmp.ne.s32.totalorder %s62, %s63
      %p77 = scmp.eq.s32.totalorder %s43, 3
      %p78 = por %p76, %p77
      %p80 = scmp.ne.s32.totalorder %s63, %s79
      %p81 = scmp.eq.s32.totalorder %s43, 0
      %p82 = por %p80, %p81
      %s83 = ssub.s32 %s44, %s56
      %p84 = scmp.eq.s32.totalorder %s83, 0
      %s86 = sadd.s32 %s85, 1
      %s87 = scalar_select %p84, %s85, %s86
      %p90 = pneg %p84
      %p91 = scmp.eq.s32.totalorder %s37, 3
      %p92 = por %p90, %p91
      %p93 = scmp.ne.s32.totalorder %s85, %s88
      %p94 = scmp.eq.s32.totalorder %s37, 0
      %p95 = por %p93, %p94
      %p96 = scmp.ne.s32.totalorder %s85, %s88
      %p97 = scmp.eq.s32.totalorder %s42, 3
      %p98 = por %p96, %p97
      %p99 = scmp.ne.s32.totalorder %s88, %s89
      %p100 = scmp.eq.s32.totalorder %s42, 0
      %p101 = por %p99, %p100
      %p102 = scmp.ne.s32.totalorder %s88, %s89
      %p103 = scmp.eq.s32.totalorder %s43, 3
      %p104 = por %p102, %p103
      %p106 = scmp.ne.s32.totalorder %s89, %s105
      %p107 = scmp.eq.s32.totalorder %s43, 0
      %p108 = por %p106, %p107
      %s109 = ssub.s32 %s44, %s56
      %p110 = scmp.eq.s32.totalorder %s109, 0
      %s112 = sadd.s32 %s111, 1
      %s113 = scalar_select %p110, %s111, %s112
      %p116 = pneg %p110
      %p117 = scmp.eq.s32.totalorder %s37, 3
      %p118 = por %p116, %p117
      %p119 = scmp.ne.s32.totalorder %s111, %s114
      %p120 = scmp.eq.s32.totalorder %s37, 0
      %p121 = por %p119, %p120
      %p122 = scmp.ne.s32.totalorder %s111, %s114
      %p123 = scmp.eq.s32.totalorder %s42, 3
      %p124 = por %p122, %p123
      %p125 = scmp.ne.s32.totalorder %s114, %s115
      %p126 = scmp.eq.s32.totalorder %s42, 0
      %p127 = por %p125, %p126
      %p128 = scmp.ne.s32.totalorder %s114, %s115
      %p129 = scmp.eq.s32.totalorder %s43, 3
      %p130 = por %p128, %p129
      %p132 = scmp.ne.s32.totalorder %s115, %s131
      %p133 = scmp.eq.s32.totalorder %s43, 0
      %p134 = por %p132, %p133
      %s136 = sadd.s32 %s135, 1
      %p139 = scmp.eq.s32.totalorder %s37, 3
      %p140 = scmp.ne.s32.totalorder %s135, %s137
      %p141 = scmp.eq.s32.totalorder %s37, 0
      %p142 = por %p140, %p141
      %p143 = scmp.ne.s32.totalorder %s135, %s137
      %p144 = scmp.eq.s32.totalorder %s42, 3
      %p145 = por %p143, %p144
      %p146 = scmp.ne.s32.totalorder %s137, %s138
      %p147 = scmp.eq.s32.totalorder %s42, 0
      %p148 = por %p146, %p147
      %p149 = scmp.ne.s32.totalorder %s137, %s138
      %p150 = scmp.eq.s32.totalorder %s43, 3
      %p151 = por %p149, %p150
      %p153 = scmp.ne.s32.totalorder %s138, %s152
      %p154 = scmp.eq.s32.totalorder %s43, 0
      %p155 = por %p153, %p154
      %s157 = sadd.s32 %s156, 1
      %p160 = scmp.eq.s32.totalorder %s37, 3
      %p161 = scmp.ne.s32.totalorder %s156, %s158
      %p162 = scmp.eq.s32.totalorder %s37, 0
      %p163 = por %p161, %p162
      %p164 = scmp.ne.s32.totalorder %s156, %s158
      %p165 = scmp.eq.s32.totalorder %s42, 3
      %p166 = por %p164, %p165
      %p167 = scmp.ne.s32.totalorder %s158, %s159
      %p168 = scmp.eq.s32.totalorder %s42, 0
      %p169 = por %p167, %p168
      %p170 = scmp.ne.s32.totalorder %s158, %s159
      %p171 = scmp.eq.s32.totalorder %s43, 3
      %p172 = por %p170, %p171
      %p174 = scmp.ne.s32.totalorder %s159, %s173
      %p175 = scmp.eq.s32.totalorder %s43, 0
      %p176 = por %p174, %p175
      %s178 = sadd.s32 %s177, 1
      %p181 = scmp.eq.s32.totalorder %s37, 3
      %p182 = scmp.ne.s32.totalorder %s177, %s179
      %p183 = scmp.eq.s32.totalorder %s37, 0
      %p184 = por %p182, %p183
      %p185 = scmp.ne.s32.totalorder %s177, %s179
      %p186 = scmp.eq.s32.totalorder %s42, 3
      %p187 = por %p185, %p186
      %p188 = scmp.ne.s32.totalorder %s179, %s180
      %p189 = scmp.eq.s32.totalorder %s42, 0
      %p190 = por %p188, %p189
      %p191 = scmp.ne.s32.totalorder %s179, %s180
      %p192 = scmp.eq.s32.totalorder %s43, 3
      %p193 = por %p191, %p192
      %p195 = scmp.ne.s32.totalorder %s180, %s194
      %p196 = scmp.eq.s32.totalorder %s43, 0
      %p197 = por %p195, %p196
      %s199 = sadd.s32 %s198, 1
      %p202 = scmp.eq.s32.totalorder %s37, 3
      %p203 = scmp.ne.s32.totalorder %s198, %s200
      %p204 = scmp.eq.s32.totalorder %s37, 0
      %p205 = por %p203, %p204
      %p206 = scmp.ne.s32.totalorder %s198, %s200
      %p207 = scmp.eq.s32.totalorder %s42, 3
      %p208 = por %p206, %p207
      %p209 = scmp.ne.s32.totalorder %s200, %s201
      %p210 = scmp.eq.s32.totalorder %s42, 0
      %p211 = por %p209, %p210
      %p212 = scmp.ne.s32.totalorder %s200, %s201
      %p213 = scmp.eq.s32.totalorder %s43, 3
      %p214 = por %p212, %p213
      %p216 = scmp.ne.s32.totalorder %s201, %s215
      %p217 = scmp.eq.s32.totalorder %s43, 0
      %p218 = por %p216, %p217
      %s220 = sadd.s32 %s219, 1
      %p223 = scmp.eq.s32.totalorder %s37, 3
      %p224 = scmp.ne.s32.totalorder %s219, %s221
      %p225 = scmp.eq.s32.totalorder %s37, 0
      %p226 = por %p224, %p225
      %p227 = scmp.ne.s32.totalorder %s219, %s221
      %p228 = scmp.eq.s32.totalorder %s42, 3
      %p229 = por %p227, %p228
      %p230 = scmp.ne.s32.totalorder %s221, %s222
      %p231 = scmp.eq.s32.totalorder %s42, 0
      %p232 = por %p230, %p231
      %p233 = scmp.ne.s32.totalorder %s221, %s222
      %p234 = scmp.eq.s32.totalorder %s43, 3
      %p235 = por %p233, %p234
      %p237 = scmp.ne.s32.totalorder %s222, %s236
      %p238 = scmp.eq.s32.totalorder %s43, 0
      %p239 = por %p237, %p238
      %s241 = sadd.s32 %s240, 1
      %p244 = scmp.eq.s32.totalorder %s37, 3
      %p245 = scmp.ne.s32.totalorder %s240, %s242
      %p246 = scmp.eq.s32.totalorder %s37, 0
      %p247 = por %p245, %p246
      %p248 = scmp.ne.s32.totalorder %s240, %s242
      %p249 = scmp.eq.s32.totalorder %s42, 3
      %p250 = por %p248, %p249
      %p251 = scmp.ne.s32.totalorder %s242, %s243
      %p252 = scmp.eq.s32.totalorder %s42, 0
      %p253 = por %p251, %p252
      %p254 = scmp.ne.s32.totalorder %s242, %s243
      %p255 = scmp.eq.s32.totalorder %s43, 3
      %p256 = por %p254, %p255
      %p258 = scmp.ne.s32.totalorder %s243, %s257
      %p259 = scmp.eq.s32.totalorder %s43, 0
      %p260 = por %p258, %p259
      %s262 = sadd.s32 %s261, 1
      %p265 = scmp.eq.s32.totalorder %s37, 3
      %p266 = scmp.ne.s32.totalorder %s261, %s263
      %p267 = scmp.eq.s32.totalorder %s37, 0
      %p268 = por %p266, %p267
      %p269 = scmp.ne.s32.totalorder %s261, %s263
      %p270 = scmp.eq.s32.totalorder %s42, 3
      %p271 = por %p269, %p270
      %p272 = scmp.ne.s32.totalorder %s263, %s264
      %p273 = scmp.eq.s32.totalorder %s42, 0
      %p274 = por %p272, %p273
      %p275 = scmp.ne.s32.totalorder %s263, %s264
      %p276 = scmp.eq.s32.totalorder %s43, 3
      %p277 = por %p275, %p276
      %p279 = scmp.ne.s32.totalorder %s264, %s278
      %p280 = scmp.eq.s32.totalorder %s43, 0
      %p281 = por %p279, %p280
      %s283 = sadd.s32 %s282, 1
      %p286 = scmp.eq.s32.totalorder %s37, 3
      %p287 = scmp.ne.s32.totalorder %s282, %s284
      %p288 = scmp.eq.s32.totalorder %s37, 0
      %p289 = por %p287, %p288
      %p290 = scmp.ne.s32.totalorder %s282, %s284
      %p291 = scmp.eq.s32.totalorder %s42, 3
      %p292 = por %p290, %p291
      %p293 = scmp.ne.s32.totalorder %s284, %s285
      %p294 = scmp.eq.s32.totalorder %s42, 0
      %p295 = por %p293, %p294
      %p296 = scmp.ne.s32.totalorder %s284, %s285
      %p297 = scmp.eq.s32.totalorder %s43, 3
      %p298 = por %p296, %p297
      %p300 = scmp.ne.s32.totalorder %s285, %s299
      %p301 = scmp.eq.s32.totalorder %s43, 0
      %p302 = por %p300, %p301
      %s304 = sadd.s32 %s303, 1
      %p307 = scmp.eq.s32.totalorder %s37, 3
      %p308 = scmp.ne.s32.totalorder %s303, %s305
      %p309 = scmp.eq.s32.totalorder %s37, 0
      %p310 = por %p308, %p309
      %p311 = scmp.ne.s32.totalorder %s303, %s305
      %p312 = scmp.eq.s32.totalorder %s42, 3
      %p313 = por %p311, %p312
      %p314 = scmp.ne.s32.totalorder %s305, %s306
      %p315 = scmp.eq.s32.totalorder %s42, 0
      %p316 = por %p314, %p315
      %p317 = scmp.ne.s32.totalorder %s305, %s306
      %p318 = scmp.eq.s32.totalorder %s43, 3
      %p319 = por %p317, %p318
      %p321 = scmp.ne.s32.totalorder %s306, %s320
      %p322 = scmp.eq.s32.totalorder %s43, 0
      %p323 = por %p321, %p322
      %s325 = sadd.s32 %s324, 1
      %p328 = scmp.eq.s32.totalorder %s37, 3
      %p329 = scmp.ne.s32.totalorder %s324, %s326
      %p330 = scmp.eq.s32.totalorder %s37, 0
      %p331 = por %p329, %p330
      %p332 = scmp.ne.s32.totalorder %s324, %s326
      %p333 = scmp.eq.s32.totalorder %s42, 3
      %p334 = por %p332, %p333
      %p335 = scmp.ne.s32.totalorder %s326, %s327
      %p336 = scmp.eq.s32.totalorder %s42, 0
      %p337 = por %p335, %p336
      %p338 = scmp.ne.s32.totalorder %s326, %s327
      %p339 = scmp.eq.s32.totalorder %s43, 3
      %p340 = por %p338, %p339
      %p342 = scmp.ne.s32.totalorder %s327, %s341
      %p343 = scmp.eq.s32.totalorder %s43, 0
      %p344 = por %p342, %p343
      %s346 = sadd.s32 %s345, 1
      %p349 = scmp.eq.s32.totalorder %s37, 3
      %p350 = scmp.ne.s32.totalorder %s345, %s347
      %p351 = scmp.eq.s32.totalorder %s37, 0
      %p352 = por %p350, %p351
      %p353 = scmp.ne.s32.totalorder %s345, %s347
      %p354 = scmp.eq.s32.totalorder %s42, 3
      %p355 = por %p353, %p354
      %p356 = scmp.ne.s32.totalorder %s347, %s348
      %p357 = scmp.eq.s32.totalorder %s42, 0
      %p358 = por %p356, %p357
      %p359 = scmp.ne.s32.totalorder %s347, %s348
      %p360 = scmp.eq.s32.totalorder %s43, 3
      %p361 = por %p359, %p360
      %p363 = scmp.ne.s32.totalorder %s348, %s362
      %p364 = scmp.eq.s32.totalorder %s43, 0
      %p365 = por %p363, %p364
      %s367 = sadd.s32 %s366, 1
      %p370 = scmp.eq.s32.totalorder %s37, 3
      %p371 = scmp.ne.s32.totalorder %s366, %s368
      %p372 = scmp.eq.s32.totalorder %s37, 0
      %p373 = por %p371, %p372
      %p374 = scmp.ne.s32.totalorder %s366, %s368
      %p375 = scmp.eq.s32.totalorder %s42, 3
      %p376 = por %p374, %p375
      %p377 = scmp.ne.s32.totalorder %s368, %s369
      %p378 = scmp.eq.s32.totalorder %s42, 0
      %p379 = por %p377, %p378
      %p380 = scmp.ne.s32.totalorder %s368, %s369
      %p381 = scmp.eq.s32.totalorder %s43, 3
      %p382 = por %p380, %p381
      %p384 = scmp.ne.s32.totalorder %s369, %s383
      %p385 = scmp.eq.s32.totalorder %s43, 0
      %p386 = por %p384, %p385
      %s388 = sadd.s32 %s387, 1
      %p391 = scmp.eq.s32.totalorder %s37, 3
      %p392 = scmp.ne.s32.totalorder %s387, %s389
      %p393 = scmp.eq.s32.totalorder %s37, 0
      %p394 = por %p392, %p393
      %p395 = scmp.ne.s32.totalorder %s387, %s389
      %p396 = scmp.eq.s32.totalorder %s42, 3
      %p397 = por %p395, %p396
      %p398 = scmp.ne.s32.totalorder %s389, %s390
      %p399 = scmp.eq.s32.totalorder %s42, 0
      %p400 = por %p398, %p399
      %p401 = scmp.ne.s32.totalorder %s389, %s390
      %p402 = scmp.eq.s32.totalorder %s43, 3
      %p403 = por %p401, %p402
      %p405 = scmp.ne.s32.totalorder %s390, %s404
      %p406 = scmp.eq.s32.totalorder %s43, 0
      %p407 = por %p405, %p406
      %s409 = sadd.s32 %s408, 1
      %p412 = scmp.eq.s32.totalorder %s37, 3
      %p413 = scmp.ne.s32.totalorder %s408, %s410
      %p414 = scmp.eq.s32.totalorder %s37, 0
      %p415 = por %p413, %p414
      %p416 = scmp.ne.s32.totalorder %s408, %s410
      %p417 = scmp.eq.s32.totalorder %s42, 3
      %p418 = por %p416, %p417
      %p419 = scmp.ne.s32.totalorder %s410, %s411
      %p420 = scmp.eq.s32.totalorder %s42, 0
      %p421 = por %p419, %p420
      %p422 = scmp.ne.s32.totalorder %s410, %s411
      %p423 = scmp.eq.s32.totalorder %s43, 3
      %p424 = por %p422, %p423
      %p426 = scmp.ne.s32.totalorder %s411, %s425
      %p427 = scmp.eq.s32.totalorder %s43, 0
      %p428 = por %p426, %p427
      %s429 = ssub.s32 %s44, %s56
      %s430 = ssub.s32 %s45, %s52
      %s431 = sor.u32 %s429, %s430
      %p432 = scmp.eq.s32.totalorder %s431, 0
      %s434 = sadd.s32 %s433, 1
      %s435 = scalar_select %p432, %s433, %s434
      %p438 = pneg %p432
      %p439 = scmp.eq.s32.totalorder %s37, 3
      %p440 = por %p438, %p439
      %p441 = scmp.ne.s32.totalorder %s433, %s436
      %p442 = scmp.eq.s32.totalorder %s37, 0
      %p443 = por %p441, %p442
      %p444 = scmp.ne.s32.totalorder %s433, %s436
      %p445 = scmp.eq.s32.totalorder %s42, 3
      %p446 = por %p444, %p445
      %p447 = scmp.ne.s32.totalorder %s436, %s437
      %p448 = scmp.eq.s32.totalorder %s42, 0
      %p449 = por %p447, %p448
      %p450 = scmp.ne.s32.totalorder %s436, %s437
      %p451 = scmp.eq.s32.totalorder %s43, 3
      %p452 = por %p450, %p451
      %p454 = scmp.ne.s32.totalorder %s437, %s453
      %p455 = scmp.eq.s32.totalorder %s43, 0
      %p456 = por %p454, %p455
      %p457 = scmp.le.s32.totalorder 1, %s37
      %p458 = scmp.lt.s32.totalorder %s37, 5
      %p459 = pnand %p457, %p458
      %p460 = pneg %p459
      // Predicated region
      $region9: #{tpu_custom_call.1} parent=5 // pred_check
        _
      $region10: #{tpu_custom_call.1} parent=5 // pred_check_branch
        %462 = sbr.rel (%p459) target = $region12
      $region11: #{tpu_custom_call.1} parent=5 // pred_region
        %s463 = ssub.s32 %s37, 1
        // Predicated region
        $region13: #{tpu_custom_call.1} parent=11 // pred_check
          %p464 = pneg %p75
        $region14: #{tpu_custom_call.1} parent=11 // pred_check_branch
          %466 = sbr.rel (%p464) target = $region16
        $region15: #{tpu_custom_call.1} parent=11 // pred_region
          %s468 = ssub.s32 256, 256
          %469 = vsyncadd [#allocation5], %s468
          %s470 = smul.addr %s46, 2
          %s471 = smul.addr %s470, 128
          %s472 = scalar_lea.hbm %s0, %s471
          %s473 = sshll.u32 [#allocation4], 4
          %s474 = int_to_ptr.vmem [resolvable:$true] %s473
          %479 = dma.hbm_to_vmem [thread:$0]  %s472, 256, %s474, [#allocation5], 128, 128, 8
        $region16: #{tpu_custom_call.1} parent=11 // pred_fallthru
          _
        // Predicated region
        $region17: #{tpu_custom_call.1} parent=11 // pred_check
          %p480 = pneg %p148
        $region18: #{tpu_custom_call.1} parent=11 // pred_check_branch
          %482 = sbr.rel (%p480) target = $region20
        $region19: #{tpu_custom_call.1} parent=11 // pred_region
          %s484 = ssub.s32 256, 256
          %485 = vsyncadd [#allocation11], %s484
          %s486 = sshll.u32 [#allocation10], 4
          %s487 = int_to_ptr.vmem [resolvable:$true] %s486
          %492 = dma.hbm_to_vmem [thread:$0]  %s3, 256, %s487, [#allocation11], 64, 64, 4
        $region20: #{tpu_custom_call.1} parent=11 // pred_fallthru
          _
        // Predicated region
        $region21: #{tpu_custom_call.1} parent=11 // pred_check
          %p493 = pneg %p169
        $region22: #{tpu_custom_call.1} parent=11 // pred_check_branch
          %495 = sbr.rel (%p493) target = $region24
        $region23: #{tpu_custom_call.1} parent=11 // pred_region
          %s497 = ssub.s32 16, 16
          %498 = vsyncadd [#allocation11], %s497
          %s500 = sshll.u32 [#allocation12], 4
          %s501 = int_to_ptr.vmem [resolvable:$true] %s500
          %503 = dma.hbm_to_vmem [thread:$0]  %s4, 16, %s501, [#allocation11]
        $region24: #{tpu_custom_call.1} parent=11 // pred_fallthru
          _
        // Predicated region
        $region25: #{tpu_custom_call.1} parent=11 // pred_check
          %p504 = pneg %p190
        $region26: #{tpu_custom_call.1} parent=11 // pred_check_branch
          %506 = sbr.rel (%p504) target = $region28
        $region27: #{tpu_custom_call.1} parent=11 // pred_region
          %s508 = ssub.s32 256, 256
          %509 = vsyncadd [#allocation14], %s508
          %s510 = sshll.u32 [#allocation13], 4
          %s511 = int_to_ptr.vmem [resolvable:$true] %s510
          %516 = dma.hbm_to_vmem [thread:$0]  %s5, 256, %s511, [#allocation14], 64, 64, 4
        $region28: #{tpu_custom_call.1} parent=11 // pred_fallthru
          _
        // Predicated region
        $region29: #{tpu_custom_call.1} parent=11 // pred_check
          %p517 = pneg %p211
        $region30: #{tpu_custom_call.1} parent=11 // pred_check_branch
          %519 = sbr.rel (%p517) target = $region32
        $region31: #{tpu_custom_call.1} parent=11 // pred_region
          %s521 = ssub.s32 16, 16
          %522 = vsyncadd [#allocation14], %s521
          %s524 = sshll.u32 [#allocation15], 4
          %s525 = int_to_ptr.vmem [resolvable:$true] %s524
          %527 = dma.hbm_to_vmem [thread:$0]  %s6, 16, %s525, [#allocation14]
        $region32: #{tpu_custom_call.1} parent=11 // pred_fallthru
          _
        // Predicated region
        $region33: #{tpu_custom_call.1} parent=11 // pred_check
          %p528 = pneg %p232
        $region34: #{tpu_custom_call.1} parent=11 // pred_check_branch
          %530 = sbr.rel (%p528) target = $region36
        $region35: #{tpu_custom_call.1} parent=11 // pred_region
          %s532 = ssub.s32 256, 256
          %533 = vsyncadd [#allocation17], %s532
          %s534 = sshll.u32 [#allocation16], 4
          %s535 = int_to_ptr.vmem [resolvable:$true] %s534
          %540 = dma.hbm_to_vmem [thread:$0]  %s7, 256, %s535, [#allocation17], 64, 64, 4
        $region36: #{tpu_custom_call.1} parent=11 // pred_fallthru
          _
        // Predicated region
        $region37: #{tpu_custom_call.1} parent=11 // pred_check
          %p541 = pneg %p253
        $region38: #{tpu_custom_call.1} parent=11 // pred_check_branch
          %543 = sbr.rel (%p541) target = $region40
        $region39: #{tpu_custom_call.1} parent=11 // pred_region
          %s545 = ssub.s32 16, 16
          %546 = vsyncadd [#allocation17], %s545
          %s548 = sshll.u32 [#allocation18], 4
          %s549 = int_to_ptr.vmem [resolvable:$true] %s548
          %551 = dma.hbm_to_vmem [thread:$0]  %s8, 16, %s549, [#allocation17]
        $region40: #{tpu_custom_call.1} parent=11 // pred_fallthru
          _
        // Predicated region
        $region41: #{tpu_custom_call.1} parent=11 // pred_check
          %p552 = pneg %p274
        $region42: #{tpu_custom_call.1} parent=11 // pred_check_branch
          %554 = sbr.rel (%p552) target = $region44
        $region43: #{tpu_custom_call.1} parent=11 // pred_region
          %s556 = ssub.s32 256, 256
          %557 = vsyncadd [#allocation20], %s556
          %s558 = sshll.u32 [#allocation19], 4
          %s559 = int_to_ptr.vmem [resolvable:$true] %s558
          %564 = dma.hbm_to_vmem [thread:$0]  %s9, 256, %s559, [#allocation20], 64, 64, 4
        $region44: #{tpu_custom_call.1} parent=11 // pred_fallthru
          _
        // Predicated region
        $region45: #{tpu_custom_call.1} parent=11 // pred_check
          %p565 = pneg %p295
        $region46: #{tpu_custom_call.1} parent=11 // pred_check_branch
          %567 = sbr.rel (%p565) target = $region48
        $region47: #{tpu_custom_call.1} parent=11 // pred_region
          %s569 = ssub.s32 16, 16
          %570 = vsyncadd [#allocation20], %s569
          %s572 = sshll.u32 [#allocation21], 4
          %s573 = int_to_ptr.vmem [resolvable:$true] %s572
          %575 = dma.hbm_to_vmem [thread:$0]  %s10, 16, %s573, [#allocation20]
        $region48: #{tpu_custom_call.1} parent=11 // pred_fallthru
          _
        // Predicated region
        $region49: #{tpu_custom_call.1} parent=11 // pred_check
          %p576 = pneg %p316
        $region50: #{tpu_custom_call.1} parent=11 // pred_check_branch
          %578 = sbr.rel (%p576) target = $region52
        $region51: #{tpu_custom_call.1} parent=11 // pred_region
          %s580 = ssub.s32 16, 16
          %581 = vsyncadd [#allocation23], %s580
          %s583 = sshll.u32 [#allocation22], 4
          %s584 = int_to_ptr.vmem [resolvable:$true] %s583
          %586 = dma.hbm_to_vmem [thread:$0]  %s11, 16, %s584, [#allocation23]
        $region52: #{tpu_custom_call.1} parent=11 // pred_fallthru
          _
        // Predicated region
        $region53: #{tpu_custom_call.1} parent=11 // pred_check
          %p587 = pneg %p337
        $region54: #{tpu_custom_call.1} parent=11 // pred_check_branch
          %589 = sbr.rel (%p587) target = $region56
        $region55: #{tpu_custom_call.1} parent=11 // pred_region
          %s591 = ssub.s32 16, 16
          %592 = vsyncadd [#allocation23], %s591
          %s594 = sshll.u32 [#allocation24], 4
          %s595 = int_to_ptr.vmem [resolvable:$true] %s594
          %597 = dma.hbm_to_vmem [thread:$0]  %s12, 16, %s595, [#allocation23]
        $region56: #{tpu_custom_call.1} parent=11 // pred_fallthru
          _
        // Predicated region
        $region57: #{tpu_custom_call.1} parent=11 // pred_check
          %p598 = pneg %p358
        $region58: #{tpu_custom_call.1} parent=11 // pred_check_branch
          %600 = sbr.rel (%p598) target = $region60
        $region59: #{tpu_custom_call.1} parent=11 // pred_region
          %s602 = ssub.s32 256, 256
          %603 = vsyncadd [#allocation26], %s602
          %s604 = sshll.u32 [#allocation25], 4
          %s605 = int_to_ptr.vmem [resolvable:$true] %s604
          %610 = dma.hbm_to_vmem [thread:$0]  %s13, 256, %s605, [#allocation26], 64, 64, 4
        $region60: #{tpu_custom_call.1} parent=11 // pred_fallthru
          _
        // Predicated region
        $region61: #{tpu_custom_call.1} parent=11 // pred_check
          %p611 = pneg %p379
        $region62: #{tpu_custom_call.1} parent=11 // pred_check_branch
          %613 = sbr.rel (%p611) target = $region64
        $region63: #{tpu_custom_call.1} parent=11 // pred_region
          %s615 = ssub.s32 16, 16
          %616 = vsyncadd [#allocation26], %s615
          %s618 = sshll.u32 [#allocation27], 4
          %s619 = int_to_ptr.vmem [resolvable:$true] %s618
          %621 = dma.hbm_to_vmem [thread:$0]  %s14, 16, %s619, [#allocation26]
        $region64: #{tpu_custom_call.1} parent=11 // pred_fallthru
          _
        // Predicated region
        $region65: #{tpu_custom_call.1} parent=11 // pred_check
          %p622 = pneg %p400
        $region66: #{tpu_custom_call.1} parent=11 // pred_check_branch
          %624 = sbr.rel (%p622) target = $region68
        $region67: #{tpu_custom_call.1} parent=11 // pred_region
          %s626 = ssub.s32 1024, 1024
          %627 = vsyncadd [#allocation29], %s626
          %s628 = sshll.u32 [#allocation28], 4
          %s629 = int_to_ptr.vmem [resolvable:$true] %s628
          %634 = dma.hbm_to_vmem [thread:$0]  %s15, 1024, %s629, [#allocation29], 64, 64, 4
        $region68: #{tpu_custom_call.1} parent=11 // pred_fallthru
          _
        // Predicated region
        $region69: #{tpu_custom_call.1} parent=11 // pred_check
          %p635 = pneg %p421
        $region70: #{tpu_custom_call.1} parent=11 // pred_check_branch
          %637 = sbr.rel (%p635) target = $region72
        $region71: #{tpu_custom_call.1} parent=11 // pred_region
          %s639 = ssub.s32 16, 16
          %640 = vsyncadd [#allocation29], %s639
          %s642 = sshll.u32 [#allocation30], 4
          %s643 = int_to_ptr.vmem [resolvable:$true] %s642
          %645 = dma.hbm_to_vmem [thread:$0]  %s16, 16, %s643, [#allocation29]
        $region72: #{tpu_custom_call.1} parent=11 // pred_fallthru
          _
      $region12: #{tpu_custom_call.1} parent=5 // pred_fallthru
        _
      %p646 = scmp.lt.s32.totalorder %s37, 4
      // Predicated region
      $region73: #{tpu_custom_call.1} parent=5 // pred_check
        %p647 = pneg %p646
      $region74: #{tpu_custom_call.1} parent=5 // pred_check_branch
        %649 = sbr.rel (%p647) target = $region76
      $region75: #{tpu_custom_call.1} parent=5 // pred_region
        // Predicated region
        $region77: #{tpu_custom_call.1} parent=75 // pred_check
          %p650 = pneg %p95
        $region78: #{tpu_custom_call.1} parent=75 // pred_check_branch
          %652 = sbr.rel (%p650) target = $region80
        $region79: #{tpu_custom_call.1} parent=75 // pred_region
          %s653 = sand.u32 %s37, 1
          %s654 = scalar_lea.sflag [#allocation8], %s653
          %s655 = sand.u32 %s85, 1
          %s656 = scalar_lea.vmem [#allocation7], %s655
          %s658 = ssub.s32 16, 16
          %659 = vsyncadd %s654, %s658
          %s660 = smul.addr %s44, 16
          %s661 = scalar_lea.hbm %s1, %s660
          %s663 = sshll.u32 %s656, 4
          %s664 = int_to_ptr.vmem [resolvable:$true] %s663
          %666 = dma.hbm_to_vmem [thread:$0]  %s661, 16, %s664, %s654
        $region80: #{tpu_custom_call.1} parent=75 // pred_fallthru
          _
        // Predicated region
        $region81: #{tpu_custom_call.1} parent=75 // pred_check
          %p667 = pneg %p121
        $region82: #{tpu_custom_call.1} parent=75 // pred_check_branch
          %669 = sbr.rel (%p667) target = $region84
        $region83: #{tpu_custom_call.1} parent=75 // pred_region
          %s670 = sand.u32 %s37, 1
          %s671 = scalar_lea.sflag [#allocation8], %s670
          %s672 = sand.u32 %s111, 1
          %s673 = scalar_lea.vmem [#allocation9], %s672
          %s675 = ssub.s32 16, 16
          %676 = vsyncadd %s671, %s675
          %s677 = smul.addr %s44, 16
          %s678 = scalar_lea.hbm %s2, %s677
          %s680 = sshll.u32 %s673, 4
          %s681 = int_to_ptr.vmem [resolvable:$true] %s680
          %683 = dma.hbm_to_vmem [thread:$0]  %s678, 16, %s681, %s671
        $region84: #{tpu_custom_call.1} parent=75 // pred_fallthru
          _
      $region76: #{tpu_custom_call.1} parent=5 // pred_fallthru
        _
      %p684 = scmp.le.s32.totalorder 1, %s37
      %p685 = scmp.lt.s32.totalorder %s37, 5
      %p686 = pnand %p684, %p685
      %p687 = pneg %p686
      // Predicated region
      $region85: #{tpu_custom_call.1} parent=5 // pred_check
        _
      $region86: #{tpu_custom_call.1} parent=5 // pred_check_branch
        %689 = sbr.rel (%p686) target = $region88
      $region87: #{tpu_custom_call.1} parent=5 // pred_region
        %s690 = ssub.s32 %s37, 1
        // Predicated region
        $region89: #{tpu_custom_call.1} parent=87 // pred_check
          %p691 = pneg %p75
        $region90: #{tpu_custom_call.1} parent=87 // pred_check_branch
          %693 = sbr.rel (%p691) target = $region92
        $region91: #{tpu_custom_call.1} parent=87 // pred_region
          %694 = dma.done [#allocation5], 256
        $region92: #{tpu_custom_call.1} parent=87 // pred_fallthru
          _
        %s695 = sand.u32 %s42, 1
        %s696 = scalar_lea.sflag [#allocation8], %s695
        %s697 = sand.u32 %s88, 1
        %s698 = scalar_lea.vmem [#allocation7], %s697
        // Predicated region
        $region93: #{tpu_custom_call.1} parent=87 // pred_check
          %p699 = pneg %p101
        $region94: #{tpu_custom_call.1} parent=87 // pred_check_branch
          %701 = sbr.rel (%p699) target = $region96
        $region95: #{tpu_custom_call.1} parent=87 // pred_region
          %702 = dma.done %s696, 16
        $region96: #{tpu_custom_call.1} parent=87 // pred_fallthru
          _
        %s703 = sand.u32 %s42, 1
        %s704 = scalar_lea.sflag [#allocation8], %s703
        %s705 = sand.u32 %s114, 1
        %s706 = scalar_lea.vmem [#allocation9], %s705
        // Predicated region
        $region97: #{tpu_custom_call.1} parent=87 // pred_check
          %p707 = pneg %p127
        $region98: #{tpu_custom_call.1} parent=87 // pred_check_branch
          %709 = sbr.rel (%p707) target = $region100
        $region99: #{tpu_custom_call.1} parent=87 // pred_region
          %710 = dma.done %s704, 16
        $region100: #{tpu_custom_call.1} parent=87 // pred_fallthru
          _
        // Predicated region
        $region101: #{tpu_custom_call.1} parent=87 // pred_check
          %p711 = pneg %p148
        $region102: #{tpu_custom_call.1} parent=87 // pred_check_branch
          %713 = sbr.rel (%p711) target = $region104
        $region103: #{tpu_custom_call.1} parent=87 // pred_region
          %714 = dma.done [#allocation11], 256
        $region104: #{tpu_custom_call.1} parent=87 // pred_fallthru
          _
        // Predicated region
        $region105: #{tpu_custom_call.1} parent=87 // pred_check
          %p715 = pneg %p169
        $region106: #{tpu_custom_call.1} parent=87 // pred_check_branch
          %717 = sbr.rel (%p715) target = $region108
        $region107: #{tpu_custom_call.1} parent=87 // pred_region
          %718 = dma.done [#allocation11], 16
        $region108: #{tpu_custom_call.1} parent=87 // pred_fallthru
          _
        // Predicated region
        $region109: #{tpu_custom_call.1} parent=87 // pred_check
          %p719 = pneg %p190
        $region110: #{tpu_custom_call.1} parent=87 // pred_check_branch
          %721 = sbr.rel (%p719) target = $region112
        $region111: #{tpu_custom_call.1} parent=87 // pred_region
          %722 = dma.done [#allocation14], 256
        $region112: #{tpu_custom_call.1} parent=87 // pred_fallthru
          _
        // Predicated region
        $region113: #{tpu_custom_call.1} parent=87 // pred_check
          %p723 = pneg %p211
        $region114: #{tpu_custom_call.1} parent=87 // pred_check_branch
          %725 = sbr.rel (%p723) target = $region116
        $region115: #{tpu_custom_call.1} parent=87 // pred_region
          %726 = dma.done [#allocation14], 16
        $region116: #{tpu_custom_call.1} parent=87 // pred_fallthru
          _
        // Predicated region
        $region117: #{tpu_custom_call.1} parent=87 // pred_check
          %p727 = pneg %p232
        $region118: #{tpu_custom_call.1} parent=87 // pred_check_branch
          %729 = sbr.rel (%p727) target = $region120
        $region119: #{tpu_custom_call.1} parent=87 // pred_region
          %730 = dma.done [#allocation17], 256
        $region120: #{tpu_custom_call.1} parent=87 // pred_fallthru
          _
        // Predicated region
        $region121: #{tpu_custom_call.1} parent=87 // pred_check
          %p731 = pneg %p253
        $region122: #{tpu_custom_call.1} parent=87 // pred_check_branch
          %733 = sbr.rel (%p731) target = $region124
        $region123: #{tpu_custom_call.1} parent=87 // pred_region
          %734 = dma.done [#allocation17], 16
        $region124: #{tpu_custom_call.1} parent=87 // pred_fallthru
          _
        // Predicated region
        $region125: #{tpu_custom_call.1} parent=87 // pred_check
          %p735 = pneg %p274
        $region126: #{tpu_custom_call.1} parent=87 // pred_check_branch
          %737 = sbr.rel (%p735) target = $region128
        $region127: #{tpu_custom_call.1} parent=87 // pred_region
          %738 = dma.done [#allocation20], 256
        $region128: #{tpu_custom_call.1} parent=87 // pred_fallthru
          _
        // Predicated region
        $region129: #{tpu_custom_call.1} parent=87 // pred_check
          %p739 = pneg %p295
        $region130: #{tpu_custom_call.1} parent=87 // pred_check_branch
          %741 = sbr.rel (%p739) target = $region132
        $region131: #{tpu_custom_call.1} parent=87 // pred_region
          %742 = dma.done [#allocation20], 16
        $region132: #{tpu_custom_call.1} parent=87 // pred_fallthru
          _
        // Predicated region
        $region133: #{tpu_custom_call.1} parent=87 // pred_check
          %p743 = pneg %p316
        $region134: #{tpu_custom_call.1} parent=87 // pred_check_branch
          %745 = sbr.rel (%p743) target = $region136
        $region135: #{tpu_custom_call.1} parent=87 // pred_region
          %746 = dma.done [#allocation23], 16
        $region136: #{tpu_custom_call.1} parent=87 // pred_fallthru
          _
        // Predicated region
        $region137: #{tpu_custom_call.1} parent=87 // pred_check
          %p747 = pneg %p337
        $region138: #{tpu_custom_call.1} parent=87 // pred_check_branch
          %749 = sbr.rel (%p747) target = $region140
        $region139: #{tpu_custom_call.1} parent=87 // pred_region
          %750 = dma.done [#allocation23], 16
        $region140: #{tpu_custom_call.1} parent=87 // pred_fallthru
          _
        // Predicated region
        $region141: #{tpu_custom_call.1} parent=87 // pred_check
          %p751 = pneg %p358
        $region142: #{tpu_custom_call.1} parent=87 // pred_check_branch
          %753 = sbr.rel (%p751) target = $region144
        $region143: #{tpu_custom_call.1} parent=87 // pred_region
          %754 = dma.done [#allocation26], 256
        $region144: #{tpu_custom_call.1} parent=87 // pred_fallthru
          _
        // Predicated region
        $region145: #{tpu_custom_call.1} parent=87 // pred_check
          %p755 = pneg %p379
        $region146: #{tpu_custom_call.1} parent=87 // pred_check_branch
          %757 = sbr.rel (%p755) target = $region148
        $region147: #{tpu_custom_call.1} parent=87 // pred_region
          %758 = dma.done [#allocation26], 16
        $region148: #{tpu_custom_call.1} parent=87 // pred_fallthru
          _
        // Predicated region
        $region149: #{tpu_custom_call.1} parent=87 // pred_check
          %p759 = pneg %p400
        $region150: #{tpu_custom_call.1} parent=87 // pred_check_branch
          %761 = sbr.rel (%p759) target = $region152
        $region151: #{tpu_custom_call.1} parent=87 // pred_region
          %762 = dma.done [#allocation29], 1024
        $region152: #{tpu_custom_call.1} parent=87 // pred_fallthru
          _
        // Predicated region
        $region153: #{tpu_custom_call.1} parent=87 // pred_check
          %p763 = pneg %p421
        $region154: #{tpu_custom_call.1} parent=87 // pred_check_branch
          %765 = sbr.rel (%p763) target = $region156
        $region155: #{tpu_custom_call.1} parent=87 // pred_region
          %766 = dma.done [#allocation29], 16
        $region156: #{tpu_custom_call.1} parent=87 // pred_fallthru
          _
        %p767 = pneg %p75
        %p768 = pneg %p72
        %s769 = sand.u32 %s42, 1
        %s770 = scalar_lea.sflag [#allocation8], %s769
        %s771 = sand.u32 %s88, 1
        %s772 = scalar_lea.vmem [#allocation7], %s771
        %p773 = pneg %p101
        %p774 = pneg %p98
        %s775 = sand.u32 %s42, 1
        %s776 = scalar_lea.sflag [#allocation8], %s775
        %s777 = sand.u32 %s114, 1
        %s778 = scalar_lea.vmem [#allocation9], %s777
        %p779 = pneg %p127
        %p780 = pneg %p124
        %p781 = pneg %p148
        %p782 = pneg %p145
        %p783 = pneg %p169
        %p784 = pneg %p166
        %p785 = pneg %p190
        %p786 = pneg %p187
        %p787 = pneg %p211
        %p788 = pneg %p208
        %p789 = pneg %p232
        %p790 = pneg %p229
        %p791 = pneg %p253
        %p792 = pneg %p250
        %p793 = pneg %p274
        %p794 = pneg %p271
        %p795 = pneg %p295
        %p796 = pneg %p292
        %p797 = pneg %p316
        %p798 = pneg %p313
        %p799 = pneg %p337
        %p800 = pneg %p334
        %p801 = pneg %p358
        %p802 = pneg %p355
        %p803 = pneg %p379
        %p804 = pneg %p376
        %p805 = pneg %p400
        %p806 = pneg %p397
        %p807 = pneg %p421
        %p808 = pneg %p418
        %p809 = pneg %p449
        %p810 = pneg %p446
        %s811 = sand.u32 %s436, 1
        %s812 = scalar_lea.sflag [#allocation6], %s811
        %s813 = sand.u32 %s436, 1
        %s814 = smul.addr %s813, 8
        %s815 = scalar_lea.vmem [#allocation31], %s814
        %v817 = vld [vmem:[%s698] sm:$0x1]
        %v818 = vld [vmem:[%s706] sm:$0x1]
        %p819 = scmp.eq.s32.totalorder %s47, 0
        // Predicated region
        $region157: #{tpu_custom_call.1} parent=87 // pred_check
          %p820 = pneg %p819
        $region158: #{tpu_custom_call.1} parent=87 // pred_check_branch
          %822 = sbr.rel (%p820) target = $region160
        $region159: #{tpu_custom_call.1} parent=87 // pred_region
          %v823 = vld [vmem:[#allocation4] sm:$0xff]
          %v824 = vld [vmem:[#allocation4 + $0x8] sm:$0xff]
          %vm825 = vcmask 261120
          %v826 = vsel %vm825, %v823, 0.0
          %827 = vadd.xlane.f32.xlu0 %v826
          %v828 = vpop.xlane.xlu0 %827
          %v829 = vsel %vm825, %v824, 0.0
          %830 = vadd.xlane.f32.xlu0 %v829
          %v831 = vpop.xlane.xlu0 %830
          %v832 = vrcp.pop 32.0
          %v833 = vmul.f32 %v828, %v832
          %v834 = vmul.f32 %v831, %v832
          %v835 = vsub.f32 %v823, %v833
          %v836 = vsub.f32 %v824, %v834
          %v837 = vmul.f32 %v835, %v835
          %v838 = vmul.f32 %v836, %v836
          %v839 = vsel %vm825, %v837, 0.0
          %840 = vadd.xlane.f32.xlu0 %v839
          %v841 = vpop.xlane.xlu0 %840
          %v842 = vsel %vm825, %v838, 0.0
          %843 = vadd.xlane.f32.xlu0 %v842
          %v844 = vpop.xlane.xlu0 %843
          %v845 = vmul.f32 %v841, %v832
          %v846 = vmul.f32 %v844, %v832
          %v847 = vadd.f32 %v845, 1e-05
          %v848 = vadd.f32 %v846, 1e-05
          %v849 = vrsqrt.pop %v847
          %v850 = vrsqrt.pop %v848
          %v851 = vmul.f32 %v835, %v849
          %v852 = vmul.f32 %v836, %v850
          %v853 = vadd.f32 %v817, 1.0
          %v855 = vlaneseq
          %v856 = vshrl.u32 %v855, 7
          %v857 = vsub.s32 0, %v856
          %v858 = vrot.slane %v853, %v857
          %v860 = vmul.f32 %v851, %v858
          %v861 = vmul.f32 %v852, %v858
          %v863 = vlaneseq
          %v864 = vshrl.u32 %v863, 7
          %v865 = vsub.s32 0, %v864
          %v866 = vrot.slane %v818, %v865
          %v868 = vadd.f32 %v860, %v866
          %v869 = vadd.f32 %v861, %v866
          %v870 = vpack.c.bf16 %v869, %v868
          %v871 = vld [vmem:[#allocation13] sm:$0xf]
          %v872 = vld [vmem:[#allocation13 + $0x4] sm:$0xf]
          %v873 = vld [vmem:[#allocation13 + $0x8] sm:$0xf]
          %v874 = vld [vmem:[#allocation13 + $0xc] sm:$0xf]
          %v875 = vld [vmem:[#allocation15] sm:$0x1]
          %v877 = vlaneseq
          %v878 = vshrl.u32 %v877, 7
          %v879 = vsub.s32 0, %v878
          %v880 = vrot.slane %v875, %v879
          %v886 = vunpack.c.l.b16 %v871
          %v887 = vunpack.c.l.b16 %v872
          %v888 = vunpack.c.l.b16 %v873
          %v889 = vunpack.c.l.b16 %v874
          %v890 = vpack.c.b16 %v887, %v886
          %v891 = vpack.c.b16 %v889, %v888
          %v895 = vsel %vm825, %v870, 0
          %897 = vmatprep.subr.bf16.mxu0 0
          %898 = vmatpush1.bf16.msra.mxu0 %v890
          %899 = vmatprep.subr.bf16.mxu0 0
          %900 = vmatpush1.bf16.msra.mxu0 %v891
          %901 = vmatprep.subr.bf16.mxu0 0
          %902 = vmatpush1.bf16.msra.mxu0 0
          %903 = vmatprep.subr.bf16.mxu0 0
          %904 = vmatpush1.bf16.msra.mxu0 0
          %905 = vmatprep.subr.bf16.mxu0 0
          %906 = vmatpush1.bf16.msra.mxu0 0
          %907 = vmatprep.subr.bf16.mxu0 0
          %908 = vmatpush1.bf16.msra.mxu0 0
          %909 = vmatprep.subr.bf16.mxu0 0
          %910 = vmatpush1.bf16.msra.mxu0 0
          %911 = vmatprep.subr.bf16.mxu0 0
          %912 = vmatpush1.bf16.msra.mxu0 0
          %913 = vmatprep.subr.bf16.mxu0 0
          %914 = vmatpush1.bf16.msra.mxu0 0
          %915 = vmatprep.subr.bf16.mxu0 0
          %916 = vmatpush1.bf16.msra.mxu0 0
          %917 = vmatprep.subr.bf16.mxu0 0
          %918 = vmatpush1.bf16.msra.mxu0 0
          %919 = vmatprep.subr.bf16.mxu0 0
          %920 = vmatpush1.bf16.msra.mxu0 0
          %921 = vmatprep.subr.bf16.mxu0 0
          %922 = vmatpush1.bf16.msra.mxu0 0
          %923 = vmatprep.subr.bf16.mxu0 0
          %924 = vmatpush1.bf16.msra.mxu0 0
          %925 = vmatprep.subr.bf16.mxu0 0
          %926 = vmatpush1.bf16.msra.mxu0 0
          %927 = vmatprep.subr.bf16.mxu0 0
          %928 = vmatpush1.bf16.msra.mxu0 0
          %929 = vmatprep.mubr.bf16.mxu0 0
          %930 = vmatmul.mubr.bf16.gmra.mrb[0].mxu0 %v895
          %v931 = vpop.f32.mrb[0].mxu0
          %v932 = vadd.f32 %v880, %v931
          %v933 = vpop.f32.mrb[0].mxu0
          %v934 = vpop.f32.mrb[0].mxu0
          %v935 = vadd.f32 %v880, %v934
          %v936 = vpop.f32.mrb[0].mxu0
          %937 = vdwg.mxu0
          %v938 = vld [vmem:[#allocation16] sm:$0xf]
          %v939 = vld [vmem:[#allocation16 + $0x4] sm:$0xf]
          %v940 = vld [vmem:[#allocation16 + $0x8] sm:$0xf]
          %v941 = vld [vmem:[#allocation16 + $0xc] sm:$0xf]
          %v942 = vld [vmem:[#allocation18] sm:$0x1]
          %v944 = vlaneseq
          %v945 = vshrl.u32 %v944, 7
          %v946 = vsub.s32 0, %v945
          %v947 = vrot.slane %v942, %v946
          %v953 = vunpack.c.l.b16 %v938
          %v954 = vunpack.c.l.b16 %v939
          %v955 = vunpack.c.l.b16 %v940
          %v956 = vunpack.c.l.b16 %v941
          %v957 = vpack.c.b16 %v954, %v953
          %v958 = vpack.c.b16 %v956, %v955
          %961 = vmatprep.subr.bf16.mxu0 0
          %962 = vmatpush1.bf16.msra.mxu0 %v957
          %963 = vmatprep.subr.bf16.mxu0 0
          %964 = vmatpush1.bf16.msra.mxu0 %v958
          %965 = vmatprep.subr.bf16.mxu0 0
          %966 = vmatpush1.bf16.msra.mxu0 0
          %967 = vmatprep.subr.bf16.mxu0 0
          %968 = vmatpush1.bf16.msra.mxu0 0
          %969 = vmatprep.subr.bf16.mxu0 0
          %970 = vmatpush1.bf16.msra.mxu0 0
          %971 = vmatprep.subr.bf16.mxu0 0
          %972 = vmatpush1.bf16.msra.mxu0 0
          %973 = vmatprep.subr.bf16.mxu0 0
          %974 = vmatpush1.bf16.msra.mxu0 0
          %975 = vmatprep.subr.bf16.mxu0 0
          %976 = vmatpush1.bf16.msra.mxu0 0
          %977 = vmatprep.subr.bf16.mxu0 0
          %978 = vmatpush1.bf16.msra.mxu0 0
          %979 = vmatprep.subr.bf16.mxu0 0
          %980 = vmatpush1.bf16.msra.mxu0 0
          %981 = vmatprep.subr.bf16.mxu0 0
          %982 = vmatpush1.bf16.msra.mxu0 0
          %983 = vmatprep.subr.bf16.mxu0 0
          %984 = vmatpush1.bf16.msra.mxu0 0
          %985 = vmatprep.subr.bf16.mxu0 0
          %986 = vmatpush1.bf16.msra.mxu0 0
          %987 = vmatprep.subr.bf16.mxu0 0
          %988 = vmatpush1.bf16.msra.mxu0 0
          %989 = vmatprep.subr.bf16.mxu0 0
          %990 = vmatpush1.bf16.msra.mxu0 0
          %991 = vmatprep.subr.bf16.mxu0 0
          %992 = vmatpush1.bf16.msra.mxu0 0
          %993 = vmatprep.mubr.bf16.mxu0 0
          %994 = vmatmul.mubr.bf16.gmra.mrb[0].mxu0 %v895
          %v995 = vpop.f32.mrb[0].mxu0
          %v996 = vadd.f32 %v947, %v995
          %v997 = vpop.f32.mrb[0].mxu0
          %v998 = vpop.f32.mrb[0].mxu0
          %v999 = vadd.f32 %v947, %v998
          %v1000 = vpop.f32.mrb[0].mxu0
          %1001 = vdwg.mxu0
          %1004 = vrot.lane.b32.xlu0 %v932, 120
          %v1005 = vpop.permute.xlu0 %1004
          %1006 = vrot.lane.b32.xlu0 %v935, 120
          %v1007 = vpop.permute.xlu0 %1006
          %1010 = vrot.lane.b32.xlu0 %v932, 112
          %v1011 = vpop.permute.xlu0 %1010
          %1012 = vrot.lane.b32.xlu0 %v935, 112
          %v1013 = vpop.permute.xlu0 %1012
          %1016 = vrot.lane.b32.xlu0 %v932, 104
          %v1017 = vpop.permute.xlu0 %1016
          %1018 = vrot.lane.b32.xlu0 %v935, 104
          %v1019 = vpop.permute.xlu0 %1018
          %v1022 = vcombine.low %v932, %v1011
          %v1023 = vcombine.high %v932, %v1011
          %v1025 = vunpack.c.l.s4 1983009808
          %v1026 = vunpack.c.0.s8 %v1025
          %v1027 = vlaneseq
          %v1028 = vshrl.u32 %v1027, 7
          %v1029 = vsub.s32 %v1026, %v1028
          %v1030 = vrot.slane %v1022, %v1029
          %v1032 = vunpack.c.l.s4 1983009808
          %v1033 = vunpack.c.0.s8 %v1032
          %v1034 = vlaneseq
          %v1035 = vshrl.u32 %v1034, 7
          %v1036 = vsub.s32 %v1033, %v1035
          %v1037 = vrot.slane %v1023, %v1036
          %v1038 = vcombine.low %v1005, %v1017
          %v1039 = vcombine.high %v1005, %v1017
          %v1041 = vunpack.c.l.s4 1983009808
          %v1042 = vunpack.c.0.s8 %v1041
          %v1043 = vlaneseq
          %v1044 = vshrl.u32 %v1043, 7
          %v1045 = vsub.s32 %v1042, %v1044
          %v1046 = vrot.slane %v1038, %v1045
          %v1048 = vunpack.c.l.s4 1983009808
          %v1049 = vunpack.c.0.s8 %v1048
          %v1050 = vlaneseq
          %v1051 = vshrl.u32 %v1050, 7
          %v1052 = vsub.s32 %v1049, %v1051
          %v1053 = vrot.slane %v1039, %v1052
          %v1054 = vcombine.low %v1030, %v1046
          %v1055 = vcombine.high %v1030, %v1046
          %v1057 = vunpack.c.l.s4 1934713408
          %v1058 = vunpack.c.0.s8 %v1057
          %v1059 = vlaneseq
          %v1060 = vshrl.u32 %v1059, 7
          %v1061 = vsub.s32 %v1058, %v1060
          %v1062 = vrot.slane %v1054, %v1061
          %v1064 = vunpack.c.l.s4 1934713408
          %v1065 = vunpack.c.0.s8 %v1064
          %v1066 = vlaneseq
          %v1067 = vshrl.u32 %v1066, 7
          %v1068 = vsub.s32 %v1065, %v1067
          %v1069 = vrot.slane %v1055, %v1068
          %v1070 = vcombine.low %v1037, %v1053
          %v1071 = vcombine.high %v1037, %v1053
          %v1073 = vunpack.c.l.s4 1934713408
          %v1074 = vunpack.c.0.s8 %v1073
          %v1075 = vlaneseq
          %v1076 = vshrl.u32 %v1075, 7
          %v1077 = vsub.s32 %v1074, %v1076
          %v1078 = vrot.slane %v1070, %v1077
          %v1080 = vunpack.c.l.s4 1934713408
          %v1081 = vunpack.c.0.s8 %v1080
          %v1082 = vlaneseq
          %v1083 = vshrl.u32 %v1082, 7
          %v1084 = vsub.s32 %v1081, %v1083
          %v1085 = vrot.slane %v1071, %v1084
          %v1086 = vcombine.high %v1062, 0.0
          %v1087 = vcombine.high %v1069, 0.0
          %v1088 = vcombine.high %v1078, 0.0
          %v1089 = vcombine.high %v1085, 0.0
          %v1090 = vcombine.low %v935, %v1013
          %v1091 = vcombine.high %v935, %v1013
          %v1093 = vunpack.c.l.s4 1983009808
          %v1094 = vunpack.c.0.s8 %v1093
          %v1095 = vlaneseq
          %v1096 = vshrl.u32 %v1095, 7
          %v1097 = vsub.s32 %v1094, %v1096
          %v1098 = vrot.slane %v1090, %v1097
          %v1100 = vunpack.c.l.s4 1983009808
          %v1101 = vunpack.c.0.s8 %v1100
          %v1102 = vlaneseq
          %v1103 = vshrl.u32 %v1102, 7
          %v1104 = vsub.s32 %v1101, %v1103
          %v1105 = vrot.slane %v1091, %v1104
          %v1106 = vcombine.low %v1007, %v1019
          %v1107 = vcombine.high %v1007, %v1019
          %v1109 = vunpack.c.l.s4 1983009808
          %v1110 = vunpack.c.0.s8 %v1109
          %v1111 = vlaneseq
          %v1112 = vshrl.u32 %v1111, 7
          %v1113 = vsub.s32 %v1110, %v1112
          %v1114 = vrot.slane %v1106, %v1113
          %v1116 = vunpack.c.l.s4 1983009808
          %v1117 = vunpack.c.0.s8 %v1116
          %v1118 = vlaneseq
          %v1119 = vshrl.u32 %v1118, 7
          %v1120 = vsub.s32 %v1117, %v1119
          %v1121 = vrot.slane %v1107, %v1120
          %v1122 = vcombine.low %v1098, %v1114
          %v1123 = vcombine.high %v1098, %v1114
          %v1125 = vunpack.c.l.s4 1934713408
          %v1126 = vunpack.c.0.s8 %v1125
          %v1127 = vlaneseq
          %v1128 = vshrl.u32 %v1127, 7
          %v1129 = vsub.s32 %v1126, %v1128
          %v1130 = vrot.slane %v1122, %v1129
          %v1132 = vunpack.c.l.s4 1934713408
          %v1133 = vunpack.c.0.s8 %v1132
          %v1134 = vlaneseq
          %v1135 = vshrl.u32 %v1134, 7
          %v1136 = vsub.s32 %v1133, %v1135
          %v1137 = vrot.slane %v1123, %v1136
          %v1138 = vcombine.low %v1105, %v1121
          %v1139 = vcombine.high %v1105, %v1121
          %v1141 = vunpack.c.l.s4 1934713408
          %v1142 = vunpack.c.0.s8 %v1141
          %v1143 = vlaneseq
          %v1144 = vshrl.u32 %v1143, 7
          %v1145 = vsub.s32 %v1142, %v1144
          %v1146 = vrot.slane %v1138, %v1145
          %v1148 = vunpack.c.l.s4 1934713408
          %v1149 = vunpack.c.0.s8 %v1148
          %v1150 = vlaneseq
          %v1151 = vshrl.u32 %v1150, 7
          %v1152 = vsub.s32 %v1149, %v1151
          %v1153 = vrot.slane %v1139, %v1152
          %v1154 = vcombine.high %v1130, 0.0
          %v1155 = vcombine.high %v1137, 0.0
          %v1156 = vcombine.high %v1146, 0.0
          %v1157 = vcombine.high %v1153, 0.0
          %v1158 = vcombine.low %v1062, %v1069
          %v1160 = vunpack.c.l.s4 1983009808
          %v1161 = vunpack.c.0.s8 %v1160
          %v1162 = vlaneseq
          %v1163 = vshrl.u32 %v1162, 7
          %v1164 = vsub.s32 %v1161, %v1163
          %v1165 = vrot.slane %v1158, %v1164
          %v1166 = vcombine.low %v1086, %v1087
          %v1168 = vunpack.c.l.s4 1983009808
          %v1169 = vunpack.c.0.s8 %v1168
          %v1170 = vlaneseq
          %v1171 = vshrl.u32 %v1170, 7
          %v1172 = vsub.s32 %v1169, %v1171
          %v1173 = vrot.slane %v1166, %v1172
          %v1174 = vcombine.low %v1078, %v1085
          %v1176 = vunpack.c.l.s4 1983009808
          %v1177 = vunpack.c.0.s8 %v1176
          %v1178 = vlaneseq
          %v1179 = vshrl.u32 %v1178, 7
          %v1180 = vsub.s32 %v1177, %v1179
          %v1181 = vrot.slane %v1174, %v1180
          %v1182 = vcombine.low %v1088, %v1089
          %v1184 = vunpack.c.l.s4 1983009808
          %v1185 = vunpack.c.0.s8 %v1184
          %v1186 = vlaneseq
          %v1187 = vshrl.u32 %v1186, 7
          %v1188 = vsub.s32 %v1185, %v1187
          %v1189 = vrot.slane %v1182, %v1188
          %v1190 = vcombine.low %v1165, %v1173
          %v1191 = vcombine.high %v1165, %v1173
          %v1193 = vunpack.c.l.s4 1934713408
          %v1194 = vunpack.c.0.s8 %v1193
          %v1195 = vlaneseq
          %v1196 = vshrl.u32 %v1195, 7
          %v1197 = vsub.s32 %v1194, %v1196
          %v1198 = vrot.slane %v1190, %v1197
          %v1200 = vunpack.c.l.s4 1934713408
          %v1201 = vunpack.c.0.s8 %v1200
          %v1202 = vlaneseq
          %v1203 = vshrl.u32 %v1202, 7
          %v1204 = vsub.s32 %v1201, %v1203
          %v1205 = vrot.slane %v1191, %v1204
          %v1206 = vcombine.low %v1181, %v1189
          %v1207 = vcombine.high %v1181, %v1189
          %v1209 = vunpack.c.l.s4 1934713408
          %v1210 = vunpack.c.0.s8 %v1209
          %v1211 = vlaneseq
          %v1212 = vshrl.u32 %v1211, 7
          %v1213 = vsub.s32 %v1210, %v1212
          %v1214 = vrot.slane %v1206, %v1213
          %v1216 = vunpack.c.l.s4 1934713408
          %v1217 = vunpack.c.0.s8 %v1216
          %v1218 = vlaneseq
          %v1219 = vshrl.u32 %v1218, 7
          %v1220 = vsub.s32 %v1217, %v1219
          %v1221 = vrot.slane %v1207, %v1220
          %v1222 = vcombine.low %v1198, %v1214
          %v1223 = vcombine.high %v1198, %v1214
          %v1224 = vcombine.low %v1205, %v1221
          %v1225 = vcombine.high %v1205, %v1221
          %v1226 = vcombine.low %v1130, %v1137
          %v1228 = vunpack.c.l.s4 1983009808
          %v1229 = vunpack.c.0.s8 %v1228
          %v1230 = vlaneseq
          %v1231 = vshrl.u32 %v1230, 7
          %v1232 = vsub.s32 %v1229, %v1231
          %v1233 = vrot.slane %v1226, %v1232
          %v1234 = vcombine.low %v1154, %v1155
          %v1236 = vunpack.c.l.s4 1983009808
          %v1237 = vunpack.c.0.s8 %v1236
          %v1238 = vlaneseq
          %v1239 = vshrl.u32 %v1238, 7
          %v1240 = vsub.s32 %v1237, %v1239
          %v1241 = vrot.slane %v1234, %v1240
          %v1242 = vcombine.low %v1146, %v1153
          %v1244 = vunpack.c.l.s4 1983009808
          %v1245 = vunpack.c.0.s8 %v1244
          %v1246 = vlaneseq
          %v1247 = vshrl.u32 %v1246, 7
          %v1248 = vsub.s32 %v1245, %v1247
          %v1249 = vrot.slane %v1242, %v1248
          %v1250 = vcombine.low %v1156, %v1157
          %v1252 = vunpack.c.l.s4 1983009808
          %v1253 = vunpack.c.0.s8 %v1252
          %v1254 = vlaneseq
          %v1255 = vshrl.u32 %v1254, 7
          %v1256 = vsub.s32 %v1253, %v1255
          %v1257 = vrot.slane %v1250, %v1256
          %v1258 = vcombine.low %v1233, %v1241
          %v1259 = vcombine.high %v1233, %v1241
          %v1261 = vunpack.c.l.s4 1934713408
          %v1262 = vunpack.c.0.s8 %v1261
          %v1263 = vlaneseq
          %v1264 = vshrl.u32 %v1263, 7
          %v1265 = vsub.s32 %v1262, %v1264
          %v1266 = vrot.slane %v1258, %v1265
          %v1268 = vunpack.c.l.s4 1934713408
          %v1269 = vunpack.c.0.s8 %v1268
          %v1270 = vlaneseq
          %v1271 = vshrl.u32 %v1270, 7
          %v1272 = vsub.s32 %v1269, %v1271
          %v1273 = vrot.slane %v1259, %v1272
          %v1274 = vcombine.low %v1249, %v1257
          %v1275 = vcombine.high %v1249, %v1257
          %v1277 = vunpack.c.l.s4 1934713408
          %v1278 = vunpack.c.0.s8 %v1277
          %v1279 = vlaneseq
          %v1280 = vshrl.u32 %v1279, 7
          %v1281 = vsub.s32 %v1278, %v1280
          %v1282 = vrot.slane %v1274, %v1281
          %v1284 = vunpack.c.l.s4 1934713408
          %v1285 = vunpack.c.0.s8 %v1284
          %v1286 = vlaneseq
          %v1287 = vshrl.u32 %v1286, 7
          %v1288 = vsub.s32 %v1285, %v1287
          %v1289 = vrot.slane %v1275, %v1288
          %v1290 = vcombine.low %v1266, %v1282
          %v1291 = vcombine.high %v1266, %v1282
          %v1292 = vcombine.low %v1273, %v1289
          %v1293 = vcombine.high %v1273, %v1289
          %v1294 = vpack.c.bf16 %v1290, %v1222
          %v1295 = vpack.c.bf16 %v1291, %v1223
          %v1296 = vpack.c.bf16 %v1292, %v1224
          %v1297 = vpack.c.bf16 %v1293, %v1225
          %vm1298 = vcmask 64512
          %1299 = vst.msk [vmem:[#allocation2] sm:$0xff] %vm1298, %v1294
          %1300 = vst.msk [vmem:[#allocation2 + $0x8] sm:$0xff] %vm1298, %v1295
          %1301 = vst.msk [vmem:[#allocation2 + $0x10] sm:$0xff] %vm1298, %v1296
          %1302 = vst.msk [vmem:[#allocation2 + $0x18] sm:$0xff] %vm1298, %v1297
          %1305 = vrot.lane.b32.xlu0 %v996, 120
          %v1306 = vpop.permute.xlu0 %1305
          %1307 = vrot.lane.b32.xlu0 %v999, 120
          %v1308 = vpop.permute.xlu0 %1307
          %1311 = vrot.lane.b32.xlu0 %v996, 112
          %v1312 = vpop.permute.xlu0 %1311
          %1313 = vrot.lane.b32.xlu0 %v999, 112
          %v1314 = vpop.permute.xlu0 %1313
          %1317 = vrot.lane.b32.xlu0 %v996, 104
          %v1318 = vpop.permute.xlu0 %1317
          %1319 = vrot.lane.b32.xlu0 %v999, 104
          %v1320 = vpop.permute.xlu0 %1319
          %v1323 = vcombine.low %v996, %v1312
          %v1324 = vcombine.high %v996, %v1312
          %v1326 = vunpack.c.l.s4 1983009808
          %v1327 = vunpack.c.0.s8 %v1326
          %v1328 = vlaneseq
          %v1329 = vshrl.u32 %v1328, 7
          %v1330 = vsub.s32 %v1327, %v1329
          %v1331 = vrot.slane %v1323, %v1330
          %v1333 = vunpack.c.l.s4 1983009808
          %v1334 = vunpack.c.0.s8 %v1333
          %v1335 = vlaneseq
          %v1336 = vshrl.u32 %v1335, 7
          %v1337 = vsub.s32 %v1334, %v1336
          %v1338 = vrot.slane %v1324, %v1337
          %v1339 = vcombine.low %v1306, %v1318
          %v1340 = vcombine.high %v1306, %v1318
          %v1342 = vunpack.c.l.s4 1983009808
          %v1343 = vunpack.c.0.s8 %v1342
          %v1344 = vlaneseq
          %v1345 = vshrl.u32 %v1344, 7
          %v1346 = vsub.s32 %v1343, %v1345
          %v1347 = vrot.slane %v1339, %v1346
          %v1349 = vunpack.c.l.s4 1983009808
          %v1350 = vunpack.c.0.s8 %v1349
          %v1351 = vlaneseq
          %v1352 = vshrl.u32 %v1351, 7
          %v1353 = vsub.s32 %v1350, %v1352
          %v1354 = vrot.slane %v1340, %v1353
          %v1355 = vcombine.low %v1331, %v1347
          %v1356 = vcombine.high %v1331, %v1347
          %v1358 = vunpack.c.l.s4 1934713408
          %v1359 = vunpack.c.0.s8 %v1358
          %v1360 = vlaneseq
          %v1361 = vshrl.u32 %v1360, 7
          %v1362 = vsub.s32 %v1359, %v1361
          %v1363 = vrot.slane %v1355, %v1362
          %v1365 = vunpack.c.l.s4 1934713408
          %v1366 = vunpack.c.0.s8 %v1365
          %v1367 = vlaneseq
          %v1368 = vshrl.u32 %v1367, 7
          %v1369 = vsub.s32 %v1366, %v1368
          %v1370 = vrot.slane %v1356, %v1369
          %v1371 = vcombine.low %v1338, %v1354
          %v1372 = vcombine.high %v1338, %v1354
          %v1374 = vunpack.c.l.s4 1934713408
          %v1375 = vunpack.c.0.s8 %v1374
          %v1376 = vlaneseq
          %v1377 = vshrl.u32 %v1376, 7
          %v1378 = vsub.s32 %v1375, %v1377
          %v1379 = vrot.slane %v1371, %v1378
          %v1381 = vunpack.c.l.s4 1934713408
          %v1382 = vunpack.c.0.s8 %v1381
          %v1383 = vlaneseq
          %v1384 = vshrl.u32 %v1383, 7
          %v1385 = vsub.s32 %v1382, %v1384
          %v1386 = vrot.slane %v1372, %v1385
          %v1387 = vcombine.high %v1363, 0.0
          %v1388 = vcombine.high %v1370, 0.0
          %v1389 = vcombine.high %v1379, 0.0
          %v1390 = vcombine.high %v1386, 0.0
          %v1391 = vcombine.low %v999, %v1314
          %v1392 = vcombine.high %v999, %v1314
          %v1394 = vunpack.c.l.s4 1983009808
          %v1395 = vunpack.c.0.s8 %v1394
          %v1396 = vlaneseq
          %v1397 = vshrl.u32 %v1396, 7
          %v1398 = vsub.s32 %v1395, %v1397
          %v1399 = vrot.slane %v1391, %v1398
          %v1401 = vunpack.c.l.s4 1983009808
          %v1402 = vunpack.c.0.s8 %v1401
          %v1403 = vlaneseq
          %v1404 = vshrl.u32 %v1403, 7
          %v1405 = vsub.s32 %v1402, %v1404
          %v1406 = vrot.slane %v1392, %v1405
          %v1407 = vcombine.low %v1308, %v1320
          %v1408 = vcombine.high %v1308, %v1320
          %v1410 = vunpack.c.l.s4 1983009808
          %v1411 = vunpack.c.0.s8 %v1410
          %v1412 = vlaneseq
          %v1413 = vshrl.u32 %v1412, 7
          %v1414 = vsub.s32 %v1411, %v1413
          %v1415 = vrot.slane %v1407, %v1414
          %v1417 = vunpack.c.l.s4 1983009808
          %v1418 = vunpack.c.0.s8 %v1417
          %v1419 = vlaneseq
          %v1420 = vshrl.u32 %v1419, 7
          %v1421 = vsub.s32 %v1418, %v1420
          %v1422 = vrot.slane %v1408, %v1421
          %v1423 = vcombine.low %v1399, %v1415
          %v1424 = vcombine.high %v1399, %v1415
          %v1426 = vunpack.c.l.s4 1934713408
          %v1427 = vunpack.c.0.s8 %v1426
          %v1428 = vlaneseq
          %v1429 = vshrl.u32 %v1428, 7
          %v1430 = vsub.s32 %v1427, %v1429
          %v1431 = vrot.slane %v1423, %v1430
          %v1433 = vunpack.c.l.s4 1934713408
          %v1434 = vunpack.c.0.s8 %v1433
          %v1435 = vlaneseq
          %v1436 = vshrl.u32 %v1435, 7
          %v1437 = vsub.s32 %v1434, %v1436
          %v1438 = vrot.slane %v1424, %v1437
          %v1439 = vcombine.low %v1406, %v1422
          %v1440 = vcombine.high %v1406, %v1422
          %v1442 = vunpack.c.l.s4 1934713408
          %v1443 = vunpack.c.0.s8 %v1442
          %v1444 = vlaneseq
          %v1445 = vshrl.u32 %v1444, 7
          %v1446 = vsub.s32 %v1443, %v1445
          %v1447 = vrot.slane %v1439, %v1446
          %v1449 = vunpack.c.l.s4 1934713408
          %v1450 = vunpack.c.0.s8 %v1449
          %v1451 = vlaneseq
          %v1452 = vshrl.u32 %v1451, 7
          %v1453 = vsub.s32 %v1450, %v1452
          %v1454 = vrot.slane %v1440, %v1453
          %v1455 = vcombine.high %v1431, 0.0
          %v1456 = vcombine.high %v1438, 0.0
          %v1457 = vcombine.high %v1447, 0.0
          %v1458 = vcombine.high %v1454, 0.0
          %v1459 = vcombine.low %v1363, %v1370
          %v1461 = vunpack.c.l.s4 1983009808
          %v1462 = vunpack.c.0.s8 %v1461
          %v1463 = vlaneseq
          %v1464 = vshrl.u32 %v1463, 7
          %v1465 = vsub.s32 %v1462, %v1464
          %v1466 = vrot.slane %v1459, %v1465
          %v1467 = vcombine.low %v1387, %v1388
          %v1469 = vunpack.c.l.s4 1983009808
          %v1470 = vunpack.c.0.s8 %v1469
          %v1471 = vlaneseq
          %v1472 = vshrl.u32 %v1471, 7
          %v1473 = vsub.s32 %v1470, %v1472
          %v1474 = vrot.slane %v1467, %v1473
          %v1475 = vcombine.low %v1379, %v1386
          %v1477 = vunpack.c.l.s4 1983009808
          %v1478 = vunpack.c.0.s8 %v1477
          %v1479 = vlaneseq
          %v1480 = vshrl.u32 %v1479, 7
          %v1481 = vsub.s32 %v1478, %v1480
          %v1482 = vrot.slane %v1475, %v1481
          %v1483 = vcombine.low %v1389, %v1390
          %v1485 = vunpack.c.l.s4 1983009808
          %v1486 = vunpack.c.0.s8 %v1485
          %v1487 = vlaneseq
          %v1488 = vshrl.u32 %v1487, 7
          %v1489 = vsub.s32 %v1486, %v1488
          %v1490 = vrot.slane %v1483, %v1489
          %v1491 = vcombine.low %v1466, %v1474
          %v1492 = vcombine.high %v1466, %v1474
          %v1494 = vunpack.c.l.s4 1934713408
          %v1495 = vunpack.c.0.s8 %v1494
          %v1496 = vlaneseq
          %v1497 = vshrl.u32 %v1496, 7
          %v1498 = vsub.s32 %v1495, %v1497
          %v1499 = vrot.slane %v1491, %v1498
          %v1501 = vunpack.c.l.s4 1934713408
          %v1502 = vunpack.c.0.s8 %v1501
          %v1503 = vlaneseq
          %v1504 = vshrl.u32 %v1503, 7
          %v1505 = vsub.s32 %v1502, %v1504
          %v1506 = vrot.slane %v1492, %v1505
          %v1507 = vcombine.low %v1482, %v1490
          %v1508 = vcombine.high %v1482, %v1490
          %v1510 = vunpack.c.l.s4 1934713408
          %v1511 = vunpack.c.0.s8 %v1510
          %v1512 = vlaneseq
          %v1513 = vshrl.u32 %v1512, 7
          %v1514 = vsub.s32 %v1511, %v1513
          %v1515 = vrot.slane %v1507, %v1514
          %v1517 = vunpack.c.l.s4 1934713408
          %v1518 = vunpack.c.0.s8 %v1517
          %v1519 = vlaneseq
          %v1520 = vshrl.u32 %v1519, 7
          %v1521 = vsub.s32 %v1518, %v1520
          %v1522 = vrot.slane %v1508, %v1521
          %v1523 = vcombine.low %v1499, %v1515
          %v1524 = vcombine.high %v1499, %v1515
          %v1525 = vcombine.low %v1506, %v1522
          %v1526 = vcombine.high %v1506, %v1522
          %v1527 = vcombine.low %v1431, %v1438
          %v1529 = vunpack.c.l.s4 1983009808
          %v1530 = vunpack.c.0.s8 %v1529
          %v1531 = vlaneseq
          %v1532 = vshrl.u32 %v1531, 7
          %v1533 = vsub.s32 %v1530, %v1532
          %v1534 = vrot.slane %v1527, %v1533
          %v1535 = vcombine.low %v1455, %v1456
          %v1537 = vunpack.c.l.s4 1983009808
          %v1538 = vunpack.c.0.s8 %v1537
          %v1539 = vlaneseq
          %v1540 = vshrl.u32 %v1539, 7
          %v1541 = vsub.s32 %v1538, %v1540
          %v1542 = vrot.slane %v1535, %v1541
          %v1543 = vcombine.low %v1447, %v1454
          %v1545 = vunpack.c.l.s4 1983009808
          %v1546 = vunpack.c.0.s8 %v1545
          %v1547 = vlaneseq
          %v1548 = vshrl.u32 %v1547, 7
          %v1549 = vsub.s32 %v1546, %v1548
          %v1550 = vrot.slane %v1543, %v1549
          %v1551 = vcombine.low %v1457, %v1458
          %v1553 = vunpack.c.l.s4 1983009808
          %v1554 = vunpack.c.0.s8 %v1553
          %v1555 = vlaneseq
          %v1556 = vshrl.u32 %v1555, 7
          %v1557 = vsub.s32 %v1554, %v1556
          %v1558 = vrot.slane %v1551, %v1557
          %v1559 = vcombine.low %v1534, %v1542
          %v1560 = vcombine.high %v1534, %v1542
          %v1562 = vunpack.c.l.s4 1934713408
          %v1563 = vunpack.c.0.s8 %v1562
          %v1564 = vlaneseq
          %v1565 = vshrl.u32 %v1564, 7
          %v1566 = vsub.s32 %v1563, %v1565
          %v1567 = vrot.slane %v1559, %v1566
          %v1569 = vunpack.c.l.s4 1934713408
          %v1570 = vunpack.c.0.s8 %v1569
          %v1571 = vlaneseq
          %v1572 = vshrl.u32 %v1571, 7
          %v1573 = vsub.s32 %v1570, %v1572
          %v1574 = vrot.slane %v1560, %v1573
          %v1575 = vcombine.low %v1550, %v1558
          %v1576 = vcombine.high %v1550, %v1558
          %v1578 = vunpack.c.l.s4 1934713408
          %v1579 = vunpack.c.0.s8 %v1578
          %v1580 = vlaneseq
          %v1581 = vshrl.u32 %v1580, 7
          %v1582 = vsub.s32 %v1579, %v1581
          %v1583 = vrot.slane %v1575, %v1582
          %v1585 = vunpack.c.l.s4 1934713408
          %v1586 = vunpack.c.0.s8 %v1585
          %v1587 = vlaneseq
          %v1588 = vshrl.u32 %v1587, 7
          %v1589 = vsub.s32 %v1586, %v1588
          %v1590 = vrot.slane %v1576, %v1589
          %v1591 = vcombine.low %v1567, %v1583
          %v1592 = vcombine.high %v1567, %v1583
          %v1593 = vcombine.low %v1574, %v1590
          %v1594 = vcombine.high %v1574, %v1590
          %v1595 = vpack.c.bf16 %v1591, %v1523
          %v1596 = vpack.c.bf16 %v1592, %v1524
          %v1597 = vpack.c.bf16 %v1593, %v1525
          %v1598 = vpack.c.bf16 %v1594, %v1526
          %1599 = vst.msk [vmem:[#allocation3] sm:$0xff] %vm1298, %v1595
          %1600 = vst.msk [vmem:[#allocation3 + $0x8] sm:$0xff] %vm1298, %v1596
          %1601 = vst.msk [vmem:[#allocation3 + $0x10] sm:$0xff] %vm1298, %v1597
          %1602 = vst.msk [vmem:[#allocation3 + $0x18] sm:$0xff] %vm1298, %v1598
        $region160: #{tpu_custom_call.1} parent=87 // pred_fallthru
          _
        %s1603 = smul.u32 %s47, 8
        %s1604 = scalar_lea.vmem [#allocation4], %s1603
        %v1605 = vld [vmem:[%s1604] sm:$0xff]
        %vm1606 = vcmask 261120
        %v1607 = vsel %vm1606, %v1605, 0.0
        %1608 = vadd.xlane.f32.xlu0 %v1607
        %v1609 = vpop.xlane.xlu0 %1608
        %v1610 = vrcp.pop 32.0
        %v1611 = vmul.f32 %v1609, %v1610
        %v1612 = vsub.f32 %v1605, %v1611
        %v1613 = vmul.f32 %v1612, %v1612
        %v1614 = vsel %vm1606, %v1613, 0.0
        %1615 = vadd.xlane.f32.xlu0 %v1614
        %v1616 = vpop.xlane.xlu0 %1615
        %v1617 = vmul.f32 %v1616, %v1610
        %v1618 = vadd.f32 %v1617, 1e-05
        %v1619 = vrsqrt.pop %v1618
        %v1620 = vmul.f32 %v1612, %v1619
        %v1621 = vadd.f32 %v817, 1.0
        %v1623 = vlaneseq
        %v1624 = vshrl.u32 %v1623, 7
        %v1625 = vsub.s32 0, %v1624
        %v1626 = vrot.slane %v1621, %v1625
        %v1628 = vmul.f32 %v1620, %v1626
        %v1630 = vlaneseq
        %v1631 = vshrl.u32 %v1630, 7
        %v1632 = vsub.s32 0, %v1631
        %v1633 = vrot.slane %v818, %v1632
        %v1635 = vadd.f32 %v1628, %v1633
        %v1636 = vpack.c.bf16 %v1635, %v1635
        %v1637 = vld [vmem:[#allocation10] sm:$0xf]
        %v1638 = vld [vmem:[#allocation10 + $0x4] sm:$0xf]
        %v1639 = vld [vmem:[#allocation10 + $0x8] sm:$0xf]
        %v1640 = vld [vmem:[#allocation10 + $0xc] sm:$0xf]
        %v1641 = vld [vmem:[#allocation12] sm:$0x1]
        %v1643 = vlaneseq
        %v1644 = vshrl.u32 %v1643, 7
        %v1645 = vsub.s32 0, %v1644
        %v1646 = vrot.slane %v1641, %v1645
        %v1652 = vunpack.c.l.b16 %v1637
        %v1653 = vunpack.c.l.b16 %v1638
        %v1654 = vunpack.c.l.b16 %v1639
        %v1655 = vunpack.c.l.b16 %v1640
        %v1656 = vpack.c.b16 %v1653, %v1652
        %v1657 = vpack.c.b16 %v1655, %v1654
        %v1661 = vsel %vm1606, %v1636, 0
        %1663 = vmatprep.subr.bf16.mxu0 0
        %1664 = vmatpush1.bf16.msra.mxu0 %v1656
        %1665 = vmatprep.subr.bf16.mxu0 0
        %1666 = vmatpush1.bf16.msra.mxu0 %v1657
        %1667 = vmatprep.subr.bf16.mxu0 0
        %1668 = vmatpush1.bf16.msra.mxu0 0
        %1669 = vmatprep.subr.bf16.mxu0 0
        %1670 = vmatpush1.bf16.msra.mxu0 0
        %1671 = vmatprep.subr.bf16.mxu0 0
        %1672 = vmatpush1.bf16.msra.mxu0 0
        %1673 = vmatprep.subr.bf16.mxu0 0
        %1674 = vmatpush1.bf16.msra.mxu0 0
        %1675 = vmatprep.subr.bf16.mxu0 0
        %1676 = vmatpush1.bf16.msra.mxu0 0
        %1677 = vmatprep.subr.bf16.mxu0 0
        %1678 = vmatpush1.bf16.msra.mxu0 0
        %1679 = vmatprep.subr.bf16.mxu0 0
        %1680 = vmatpush1.bf16.msra.mxu0 0
        %1681 = vmatprep.subr.bf16.mxu0 0
        %1682 = vmatpush1.bf16.msra.mxu0 0
        %1683 = vmatprep.subr.bf16.mxu0 0
        %1684 = vmatpush1.bf16.msra.mxu0 0
        %1685 = vmatprep.subr.bf16.mxu0 0
        %1686 = vmatpush1.bf16.msra.mxu0 0
        %1687 = vmatprep.subr.bf16.mxu0 0
        %1688 = vmatpush1.bf16.msra.mxu0 0
        %1689 = vmatprep.subr.bf16.mxu0 0
        %1690 = vmatpush1.bf16.msra.mxu0 0
        %1691 = vmatprep.subr.bf16.mxu0 0
        %1692 = vmatpush1.bf16.msra.mxu0 0
        %1693 = vmatprep.subr.bf16.mxu0 0
        %1694 = vmatpush1.bf16.msra.mxu0 0
        %1695 = vmatprep.mubr.bf16.mxu0 0
        %1696 = vmatmul.mubr.bf16.gmra.mrb[0].mxu0 %v1661
        %v1697 = vpop.f32.mrb[0].mxu0
        %v1698 = vadd.f32 %v1646, %v1697
        %v1699 = vpop.f32.mrb[0].mxu0
        %v1700 = vpop.f32.mrb[0].mxu0
        %v1701 = vpop.f32.mrb[0].mxu0
        %1702 = vdwg.mxu0
        %v1703 = vmul.f32 %v1698, 0.35355338
        %1705 = vrot.lane.b32.xlu0 %v1703, 120
        %v1706 = vpop.permute.xlu0 %1705
        %1708 = vrot.lane.b32.xlu0 %v1703, 112
        %v1709 = vpop.permute.xlu0 %1708
        %1711 = vrot.lane.b32.xlu0 %v1703, 104
        %v1712 = vpop.permute.xlu0 %1711
        %v1714 = vcombine.low %v1703, %v1709
        %v1715 = vcombine.high %v1703, %v1709
        %v1717 = vunpack.c.l.s4 1983009808
        %v1718 = vunpack.c.0.s8 %v1717
        %v1719 = vlaneseq
        %v1720 = vshrl.u32 %v1719, 7
        %v1721 = vsub.s32 %v1718, %v1720
        %v1722 = vrot.slane %v1714, %v1721
        %v1724 = vunpack.c.l.s4 1983009808
        %v1725 = vunpack.c.0.s8 %v1724
        %v1726 = vlaneseq
        %v1727 = vshrl.u32 %v1726, 7
        %v1728 = vsub.s32 %v1725, %v1727
        %v1729 = vrot.slane %v1715, %v1728
        %v1730 = vcombine.low %v1706, %v1712
        %v1731 = vcombine.high %v1706, %v1712
        %v1733 = vunpack.c.l.s4 1983009808
        %v1734 = vunpack.c.0.s8 %v1733
        %v1735 = vlaneseq
        %v1736 = vshrl.u32 %v1735, 7
        %v1737 = vsub.s32 %v1734, %v1736
        %v1738 = vrot.slane %v1730, %v1737
        %v1740 = vunpack.c.l.s4 1983009808
        %v1741 = vunpack.c.0.s8 %v1740
        %v1742 = vlaneseq
        %v1743 = vshrl.u32 %v1742, 7
        %v1744 = vsub.s32 %v1741, %v1743
        %v1745 = vrot.slane %v1731, %v1744
        %v1746 = vcombine.low %v1722, %v1738
        %v1747 = vcombine.high %v1722, %v1738
        %v1749 = vunpack.c.l.s4 1934713408
        %v1750 = vunpack.c.0.s8 %v1749
        %v1751 = vlaneseq
        %v1752 = vshrl.u32 %v1751, 7
        %v1753 = vsub.s32 %v1750, %v1752
        %v1754 = vrot.slane %v1746, %v1753
        %v1756 = vunpack.c.l.s4 1934713408
        %v1757 = vunpack.c.0.s8 %v1756
        %v1758 = vlaneseq
        %v1759 = vshrl.u32 %v1758, 7
        %v1760 = vsub.s32 %v1757, %v1759
        %v1761 = vrot.slane %v1747, %v1760
        %v1762 = vcombine.low %v1729, %v1745
        %v1763 = vcombine.high %v1729, %v1745
        %v1765 = vunpack.c.l.s4 1934713408
        %v1766 = vunpack.c.0.s8 %v1765
        %v1767 = vlaneseq
        %v1768 = vshrl.u32 %v1767, 7
        %v1769 = vsub.s32 %v1766, %v1768
        %v1770 = vrot.slane %v1762, %v1769
        %v1772 = vunpack.c.l.s4 1934713408
        %v1773 = vunpack.c.0.s8 %v1772
        %v1774 = vlaneseq
        %v1775 = vshrl.u32 %v1774, 7
        %v1776 = vsub.s32 %v1773, %v1775
        %v1777 = vrot.slane %v1763, %v1776
        %v1778 = vcombine.high %v1754, 0.0
        %v1779 = vcombine.high %v1761, 0.0
        %v1780 = vcombine.high %v1770, 0.0
        %v1781 = vcombine.high %v1777, 0.0
        %v1782 = vcombine.low %v1754, %v1761
        %v1784 = vunpack.c.l.s4 1983009808
        %v1785 = vunpack.c.0.s8 %v1784
        %v1786 = vlaneseq
        %v1787 = vshrl.u32 %v1786, 7
        %v1788 = vsub.s32 %v1785, %v1787
        %v1789 = vrot.slane %v1782, %v1788
        %v1790 = vcombine.low %v1778, %v1779
        %v1792 = vunpack.c.l.s4 1983009808
        %v1793 = vunpack.c.0.s8 %v1792
        %v1794 = vlaneseq
        %v1795 = vshrl.u32 %v1794, 7
        %v1796 = vsub.s32 %v1793, %v1795
        %v1797 = vrot.slane %v1790, %v1796
        %v1798 = vcombine.low %v1770, %v1777
        %v1800 = vunpack.c.l.s4 1983009808
        %v1801 = vunpack.c.0.s8 %v1800
        %v1802 = vlaneseq
        %v1803 = vshrl.u32 %v1802, 7
        %v1804 = vsub.s32 %v1801, %v1803
        %v1805 = vrot.slane %v1798, %v1804
        %v1806 = vcombine.low %v1780, %v1781
        %v1808 = vunpack.c.l.s4 1983009808
        %v1809 = vunpack.c.0.s8 %v1808
        %v1810 = vlaneseq
        %v1811 = vshrl.u32 %v1810, 7
        %v1812 = vsub.s32 %v1809, %v1811
        %v1813 = vrot.slane %v1806, %v1812
        %v1814 = vcombine.low %v1789, %v1797
        %v1815 = vcombine.high %v1789, %v1797
        %v1817 = vunpack.c.l.s4 1934713408
        %v1818 = vunpack.c.0.s8 %v1817
        %v1819 = vlaneseq
        %v1820 = vshrl.u32 %v1819, 7
        %v1821 = vsub.s32 %v1818, %v1820
        %v1822 = vrot.slane %v1814, %v1821
        %v1824 = vunpack.c.l.s4 1934713408
        %v1825 = vunpack.c.0.s8 %v1824
        %v1826 = vlaneseq
        %v1827 = vshrl.u32 %v1826, 7
        %v1828 = vsub.s32 %v1825, %v1827
        %v1829 = vrot.slane %v1815, %v1828
        %v1830 = vcombine.low %v1805, %v1813
        %v1831 = vcombine.high %v1805, %v1813
        %v1833 = vunpack.c.l.s4 1934713408
        %v1834 = vunpack.c.0.s8 %v1833
        %v1835 = vlaneseq
        %v1836 = vshrl.u32 %v1835, 7
        %v1837 = vsub.s32 %v1834, %v1836
        %v1838 = vrot.slane %v1830, %v1837
        %v1840 = vunpack.c.l.s4 1934713408
        %v1841 = vunpack.c.0.s8 %v1840
        %v1842 = vlaneseq
        %v1843 = vshrl.u32 %v1842, 7
        %v1844 = vsub.s32 %v1841, %v1843
        %v1845 = vrot.slane %v1831, %v1844
        %v1846 = vcombine.low %v1822, %v1838
        %v1847 = vcombine.high %v1822, %v1838
        %v1848 = vcombine.low %v1829, %v1845
        %v1849 = vcombine.high %v1829, %v1845
        %v1850 = vpack.c.bf16 %v1846, %v1846
        %v1851 = vpack.c.bf16 %v1847, %v1847
        %v1852 = vpack.c.bf16 %v1848, %v1848
        %v1853 = vpack.c.bf16 %v1849, %v1849
        %v1854 = vld [vmem:[#allocation2] sm:$0xff]
        %v1855 = vld [vmem:[#allocation2 + $0x8] sm:$0xff]
        %v1856 = vld [vmem:[#allocation2 + $0x10] sm:$0xff]
        %v1857 = vld [vmem:[#allocation2 + $0x18] sm:$0xff]
        %vm1858 = vcmask 64512
        %v1860 = vsel %vm1858, %v1850, 0
        %v1863 = vsel %vm1858, %v1854, 0
        %1865 = vmatprep.subr.bf16.mxu0 0
        %1866 = vmatpush1.bf16.xpose.msra.mxu0 %v1863
        %1867 = vmatprep.subr.bf16.mxu0 0
        %1868 = vmatpush1.bf16.xpose.msra.mxu0 0
        %1869 = vmatprep.subr.bf16.mxu0 0
        %1870 = vmatpush1.bf16.xpose.msra.mxu0 0
        %1871 = vmatprep.subr.bf16.mxu0 0
        %1872 = vmatpush1.bf16.xpose.msra.mxu0 0
        %1873 = vmatprep.subr.bf16.mxu0 0
        %1874 = vmatpush1.bf16.xpose.msra.mxu0 0
        %1875 = vmatprep.subr.bf16.mxu0 0
        %1876 = vmatpush1.bf16.xpose.msra.mxu0 0
        %1877 = vmatprep.subr.bf16.mxu0 0
        %1878 = vmatpush1.bf16.xpose.msra.mxu0 0
        %1879 = vmatprep.subr.bf16.mxu0 0
        %1880 = vmatpush1.bf16.xpose.msra.mxu0 0
        %1881 = vmatprep.subr.bf16.mxu0 0
        %1882 = vmatpush1.bf16.xpose.msra.mxu0 0
        %1883 = vmatprep.subr.bf16.mxu0 0
        %1884 = vmatpush1.bf16.xpose.msra.mxu0 0
        %1885 = vmatprep.subr.bf16.mxu0 0
        %1886 = vmatpush1.bf16.xpose.msra.mxu0 0
        %1887 = vmatprep.subr.bf16.mxu0 0
        %1888 = vmatpush1.bf16.xpose.msra.mxu0 0
        %1889 = vmatprep.subr.bf16.mxu0 0
        %1890 = vmatpush1.bf16.xpose.msra.mxu0 0
        %1891 = vmatprep.subr.bf16.mxu0 0
        %1892 = vmatpush1.bf16.xpose.msra.mxu0 0
        %1893 = vmatprep.subr.bf16.mxu0 0
        %1894 = vmatpush1.bf16.xpose.msra.mxu0 0
        %1895 = vmatprep.subr.bf16.mxu0 0
        %1896 = vmatpush1.bf16.xpose.msra.mxu0 0
        %1897 = vmatprep.mubr.bf16.mxu0 0
        %1898 = vmatmul.mubr.bf16.gmra.mrb[0].mxu0 %v1860
        %v1899 = vpop.f32.mrb[0].mxu0
        %v1900 = vadd.f32 0.0, %v1899
        %v1901 = vpop.f32.mrb[0].mxu0
        %v1902 = vpop.f32.mrb[0].mxu0
        %v1903 = vpop.f32.mrb[0].mxu0
        %1904 = vdwg.mxu0
        %v1906 = vsel %vm1858, %v1851, 0
        %v1909 = vsel %vm1858, %v1855, 0
        %1911 = vmatprep.subr.bf16.mxu0 0
        %1912 = vmatpush1.bf16.xpose.msra.mxu0 %v1909
        %1913 = vmatprep.subr.bf16.mxu0 0
        %1914 = vmatpush1.bf16.xpose.msra.mxu0 0
        %1915 = vmatprep.subr.bf16.mxu0 0
        %1916 = vmatpush1.bf16.xpose.msra.mxu0 0
        %1917 = vmatprep.subr.bf16.mxu0 0
        %1918 = vmatpush1.bf16.xpose.msra.mxu0 0
        %1919 = vmatprep.subr.bf16.mxu0 0
        %1920 = vmatpush1.bf16.xpose.msra.mxu0 0
        %1921 = vmatprep.subr.bf16.mxu0 0
        %1922 = vmatpush1.bf16.xpose.msra.mxu0 0
        %1923 = vmatprep.subr.bf16.mxu0 0
        %1924 = vmatpush1.bf16.xpose.msra.mxu0 0
        %1925 = vmatprep.subr.bf16.mxu0 0
        %1926 = vmatpush1.bf16.xpose.msra.mxu0 0
        %1927 = vmatprep.subr.bf16.mxu0 0
        %1928 = vmatpush1.bf16.xpose.msra.mxu0 0
        %1929 = vmatprep.subr.bf16.mxu0 0
        %1930 = vmatpush1.bf16.xpose.msra.mxu0 0
        %1931 = vmatprep.subr.bf16.mxu0 0
        %1932 = vmatpush1.bf16.xpose.msra.mxu0 0
        %1933 = vmatprep.subr.bf16.mxu0 0
        %1934 = vmatpush1.bf16.xpose.msra.mxu0 0
        %1935 = vmatprep.subr.bf16.mxu0 0
        %1936 = vmatpush1.bf16.xpose.msra.mxu0 0
        %1937 = vmatprep.subr.bf16.mxu0 0
        %1938 = vmatpush1.bf16.xpose.msra.mxu0 0
        %1939 = vmatprep.subr.bf16.mxu0 0
        %1940 = vmatpush1.bf16.xpose.msra.mxu0 0
        %1941 = vmatprep.subr.bf16.mxu0 0
        %1942 = vmatpush1.bf16.xpose.msra.mxu0 0
        %1943 = vmatprep.mubr.bf16.mxu0 0
        %1944 = vmatmul.mubr.bf16.gmra.mrb[0].mxu0 %v1906
        %v1945 = vpop.f32.mrb[0].mxu0
        %v1946 = vadd.f32 0.0, %v1945
        %v1947 = vpop.f32.mrb[0].mxu0
        %v1948 = vpop.f32.mrb[0].mxu0
        %v1949 = vpop.f32.mrb[0].mxu0
        %1950 = vdwg.mxu0
        %v1952 = vsel %vm1858, %v1852, 0
        %v1955 = vsel %vm1858, %v1856, 0
        %1957 = vmatprep.subr.bf16.mxu0 0
        %1958 = vmatpush1.bf16.xpose.msra.mxu0 %v1955
        %1959 = vmatprep.subr.bf16.mxu0 0
        %1960 = vmatpush1.bf16.xpose.msra.mxu0 0
        %1961 = vmatprep.subr.bf16.mxu0 0
        %1962 = vmatpush1.bf16.xpose.msra.mxu0 0
        %1963 = vmatprep.subr.bf16.mxu0 0
        %1964 = vmatpush1.bf16.xpose.msra.mxu0 0
        %1965 = vmatprep.subr.bf16.mxu0 0
        %1966 = vmatpush1.bf16.xpose.msra.mxu0 0
        %1967 = vmatprep.subr.bf16.mxu0 0
        %1968 = vmatpush1.bf16.xpose.msra.mxu0 0
        %1969 = vmatprep.subr.bf16.mxu0 0
        %1970 = vmatpush1.bf16.xpose.msra.mxu0 0
        %1971 = vmatprep.subr.bf16.mxu0 0
        %1972 = vmatpush1.bf16.xpose.msra.mxu0 0
        %1973 = vmatprep.subr.bf16.mxu0 0
        %1974 = vmatpush1.bf16.xpose.msra.mxu0 0
        %1975 = vmatprep.subr.bf16.mxu0 0
        %1976 = vmatpush1.bf16.xpose.msra.mxu0 0
        %1977 = vmatprep.subr.bf16.mxu0 0
        %1978 = vmatpush1.bf16.xpose.msra.mxu0 0
        %1979 = vmatprep.subr.bf16.mxu0 0
        %1980 = vmatpush1.bf16.xpose.msra.mxu0 0
        %1981 = vmatprep.subr.bf16.mxu0 0
        %1982 = vmatpush1.bf16.xpose.msra.mxu0 0
        %1983 = vmatprep.subr.bf16.mxu0 0
        %1984 = vmatpush1.bf16.xpose.msra.mxu0 0
        %1985 = vmatprep.subr.bf16.mxu0 0
        %1986 = vmatpush1.bf16.xpose.msra.mxu0 0
        %1987 = vmatprep.subr.bf16.mxu0 0
        %1988 = vmatpush1.bf16.xpose.msra.mxu0 0
        %1989 = vmatprep.mubr.bf16.mxu0 0
        %1990 = vmatmul.mubr.bf16.gmra.mrb[0].mxu0 %v1952
        %v1991 = vpop.f32.mrb[0].mxu0
        %v1992 = vadd.f32 0.0, %v1991
        %v1993 = vpop.f32.mrb[0].mxu0
        %v1994 = vpop.f32.mrb[0].mxu0
        %v1995 = vpop.f32.mrb[0].mxu0
        %1996 = vdwg.mxu0
        %v1998 = vsel %vm1858, %v1853, 0
        %v2001 = vsel %vm1858, %v1857, 0
        %2003 = vmatprep.subr.bf16.mxu0 0
        %2004 = vmatpush1.bf16.xpose.msra.mxu0 %v2001
        %2005 = vmatprep.subr.bf16.mxu0 0
        %2006 = vmatpush1.bf16.xpose.msra.mxu0 0
        %2007 = vmatprep.subr.bf16.mxu0 0
        %2008 = vmatpush1.bf16.xpose.msra.mxu0 0
        %2009 = vmatprep.subr.bf16.mxu0 0
        %2010 = vmatpush1.bf16.xpose.msra.mxu0 0
        %2011 = vmatprep.subr.bf16.mxu0 0
        %2012 = vmatpush1.bf16.xpose.msra.mxu0 0
        %2013 = vmatprep.subr.bf16.mxu0 0
        %2014 = vmatpush1.bf16.xpose.msra.mxu0 0
        %2015 = vmatprep.subr.bf16.mxu0 0
        %2016 = vmatpush1.bf16.xpose.msra.mxu0 0
        %2017 = vmatprep.subr.bf16.mxu0 0
        %2018 = vmatpush1.bf16.xpose.msra.mxu0 0
        %2019 = vmatprep.subr.bf16.mxu0 0
        %2020 = vmatpush1.bf16.xpose.msra.mxu0 0
        %2021 = vmatprep.subr.bf16.mxu0 0
        %2022 = vmatpush1.bf16.xpose.msra.mxu0 0
        %2023 = vmatprep.subr.bf16.mxu0 0
        %2024 = vmatpush1.bf16.xpose.msra.mxu0 0
        %2025 = vmatprep.subr.bf16.mxu0 0
        %2026 = vmatpush1.bf16.xpose.msra.mxu0 0
        %2027 = vmatprep.subr.bf16.mxu0 0
        %2028 = vmatpush1.bf16.xpose.msra.mxu0 0
        %2029 = vmatprep.subr.bf16.mxu0 0
        %2030 = vmatpush1.bf16.xpose.msra.mxu0 0
        %2031 = vmatprep.subr.bf16.mxu0 0
        %2032 = vmatpush1.bf16.xpose.msra.mxu0 0
        %2033 = vmatprep.subr.bf16.mxu0 0
        %2034 = vmatpush1.bf16.xpose.msra.mxu0 0
        %2035 = vmatprep.mubr.bf16.mxu0 0
        %2036 = vmatmul.mubr.bf16.gmra.mrb[0].mxu0 %v1998
        %v2037 = vpop.f32.mrb[0].mxu0
        %v2038 = vadd.f32 0.0, %v2037
        %v2039 = vpop.f32.mrb[0].mxu0
        %v2040 = vpop.f32.mrb[0].mxu0
        %v2041 = vpop.f32.mrb[0].mxu0
        %2042 = vdwg.mxu0
        %vm2043 = vcmask 130048
        %v2044 = vsel %vm2043, %v1900, -inf
        %2045 = vmax.xlane.f32.xlu0 %v2044
        %v2046 = vpop.xlane.xlu0 %2045
        %v2047 = vsel %vm2043, %v1946, -inf
        %2048 = vmax.xlane.f32.xlu0 %v2047
        %v2049 = vpop.xlane.xlu0 %2048
        %v2050 = vsel %vm2043, %v1992, -inf
        %2051 = vmax.xlane.f32.xlu0 %v2050
        %v2052 = vpop.xlane.xlu0 %2051
        %v2053 = vsel %vm2043, %v2038, -inf
        %2054 = vmax.xlane.f32.xlu0 %v2053
        %v2055 = vpop.xlane.xlu0 %2054
        %v2056 = vsub.f32 %v1900, %v2046
        %v2057 = vsub.f32 %v1946, %v2049
        %v2058 = vsub.f32 %v1992, %v2052
        %v2059 = vsub.f32 %v2038, %v2055
        %v2060 = vmul.f32 %v2056, 1.442695
        %v2061 = vpow.pop %v2060
        %v2062 = vmul.f32 %v2057, 1.442695
        %v2063 = vpow.pop %v2062
        %v2064 = vmul.f32 %v2058, 1.442695
        %v2065 = vpow.pop %v2064
        %v2066 = vmul.f32 %v2059, 1.442695
        %v2067 = vpow.pop %v2066
        %v2068 = vsel %vm2043, %v2061, 0.0
        %2069 = vadd.xlane.f32.xlu0 %v2068
        %v2070 = vpop.xlane.xlu0 %2069
        %v2071 = vsel %vm2043, %v2063, 0.0
        %2072 = vadd.xlane.f32.xlu0 %v2071
        %v2073 = vpop.xlane.xlu0 %2072
        %v2074 = vsel %vm2043, %v2065, 0.0
        %2075 = vadd.xlane.f32.xlu0 %v2074
        %v2076 = vpop.xlane.xlu0 %2075
        %v2077 = vsel %vm2043, %v2067, 0.0
        %2078 = vadd.xlane.f32.xlu0 %v2077
        %v2079 = vpop.xlane.xlu0 %2078
        %v2080 = vrcp.pop %v2070
        %v2081 = vrcp.pop %v2073
        %v2082 = vrcp.pop %v2076
        %v2083 = vrcp.pop %v2079
        %v2084 = vmul.f32 %v2061, %v2080
        %v2085 = vmul.f32 %v2063, %v2081
        %v2086 = vmul.f32 %v2065, %v2082
        %v2087 = vmul.f32 %v2067, %v2083
        %v2088 = vpack.c.bf16 %v2084, %v2084
        %v2089 = vpack.c.bf16 %v2085, %v2085
        %v2090 = vpack.c.bf16 %v2086, %v2086
        %v2091 = vpack.c.bf16 %v2087, %v2087
        %v2092 = vld [vmem:[#allocation3] sm:$0xff]
        %v2093 = vld [vmem:[#allocation3 + $0x8] sm:$0xff]
        %v2094 = vld [vmem:[#allocation3 + $0x10] sm:$0xff]
        %v2095 = vld [vmem:[#allocation3 + $0x18] sm:$0xff]
        %v2097 = vsel %vm2043, %v2088, 0
        %2099 = vmatprep.subr.bf16.mxu0 0
        %2100 = vmatpush1.bf16.msra.mxu0 %v2092
        %2101 = vmatprep.subr.bf16.mxu0 0
        %2102 = vmatpush1.bf16.msra.mxu0 0
        %2103 = vmatprep.subr.bf16.mxu0 0
        %2104 = vmatpush1.bf16.msra.mxu0 0
        %2105 = vmatprep.subr.bf16.mxu0 0
        %2106 = vmatpush1.bf16.msra.mxu0 0
        %2107 = vmatprep.subr.bf16.mxu0 0
        %2108 = vmatpush1.bf16.msra.mxu0 0
        %2109 = vmatprep.subr.bf16.mxu0 0
        %2110 = vmatpush1.bf16.msra.mxu0 0
        %2111 = vmatprep.subr.bf16.mxu0 0
        %2112 = vmatpush1.bf16.msra.mxu0 0
        %2113 = vmatprep.subr.bf16.mxu0 0
        %2114 = vmatpush1.bf16.msra.mxu0 0
        %2115 = vmatprep.subr.bf16.mxu0 0
        %2116 = vmatpush1.bf16.msra.mxu0 0
        %2117 = vmatprep.subr.bf16.mxu0 0
        %2118 = vmatpush1.bf16.msra.mxu0 0
        %2119 = vmatprep.subr.bf16.mxu0 0
        %2120 = vmatpush1.bf16.msra.mxu0 0
        %2121 = vmatprep.subr.bf16.mxu0 0
        %2122 = vmatpush1.bf16.msra.mxu0 0
        %2123 = vmatprep.subr.bf16.mxu0 0
        %2124 = vmatpush1.bf16.msra.mxu0 0
        %2125 = vmatprep.subr.bf16.mxu0 0
        %2126 = vmatpush1.bf16.msra.mxu0 0
        %2127 = vmatprep.subr.bf16.mxu0 0
        %2128 = vmatpush1.bf16.msra.mxu0 0
        %2129 = vmatprep.subr.bf16.mxu0 0
        %2130 = vmatpush1.bf16.msra.mxu0 0
        %2131 = vmatprep.mubr.bf16.mxu0 0
        %2132 = vmatmul.mubr.bf16.gmra.mrb[0].mxu0 %v2097
        %v2133 = vpop.f32.mrb[0].mxu0
        %v2134 = vadd.f32 0.0, %v2133
        %v2135 = vpop.f32.mrb[0].mxu0
        %v2136 = vpop.f32.mrb[0].mxu0
        %v2137 = vpop.f32.mrb[0].mxu0
        %2138 = vdwg.mxu0
        %v2140 = vsel %vm2043, %v2089, 0
        %2142 = vmatprep.subr.bf16.mxu0 0
        %2143 = vmatpush1.bf16.msra.mxu0 %v2093
        %2144 = vmatprep.subr.bf16.mxu0 0
        %2145 = vmatpush1.bf16.msra.mxu0 0
        %2146 = vmatprep.subr.bf16.mxu0 0
        %2147 = vmatpush1.bf16.msra.mxu0 0
        %2148 = vmatprep.subr.bf16.mxu0 0
        %2149 = vmatpush1.bf16.msra.mxu0 0
        %2150 = vmatprep.subr.bf16.mxu0 0
        %2151 = vmatpush1.bf16.msra.mxu0 0
        %2152 = vmatprep.subr.bf16.mxu0 0
        %2153 = vmatpush1.bf16.msra.mxu0 0
        %2154 = vmatprep.subr.bf16.mxu0 0
        %2155 = vmatpush1.bf16.msra.mxu0 0
        %2156 = vmatprep.subr.bf16.mxu0 0
        %2157 = vmatpush1.bf16.msra.mxu0 0
        %2158 = vmatprep.subr.bf16.mxu0 0
        %2159 = vmatpush1.bf16.msra.mxu0 0
        %2160 = vmatprep.subr.bf16.mxu0 0
        %2161 = vmatpush1.bf16.msra.mxu0 0
        %2162 = vmatprep.subr.bf16.mxu0 0
        %2163 = vmatpush1.bf16.msra.mxu0 0
        %2164 = vmatprep.subr.bf16.mxu0 0
        %2165 = vmatpush1.bf16.msra.mxu0 0
        %2166 = vmatprep.subr.bf16.mxu0 0
        %2167 = vmatpush1.bf16.msra.mxu0 0
        %2168 = vmatprep.subr.bf16.mxu0 0
        %2169 = vmatpush1.bf16.msra.mxu0 0
        %2170 = vmatprep.subr.bf16.mxu0 0
        %2171 = vmatpush1.bf16.msra.mxu0 0
        %2172 = vmatprep.subr.bf16.mxu0 0
        %2173 = vmatpush1.bf16.msra.mxu0 0
        %2174 = vmatprep.mubr.bf16.mxu0 0
        %2175 = vmatmul.mubr.bf16.gmra.mrb[0].mxu0 %v2140
        %v2176 = vpop.f32.mrb[0].mxu0
        %v2177 = vadd.f32 0.0, %v2176
        %v2178 = vpop.f32.mrb[0].mxu0
        %v2179 = vpop.f32.mrb[0].mxu0
        %v2180 = vpop.f32.mrb[0].mxu0
        %2181 = vdwg.mxu0
        %v2183 = vsel %vm2043, %v2090, 0
        %2185 = vmatprep.subr.bf16.mxu0 0
        %2186 = vmatpush1.bf16.msra.mxu0 %v2094
        %2187 = vmatprep.subr.bf16.mxu0 0
        %2188 = vmatpush1.bf16.msra.mxu0 0
        %2189 = vmatprep.subr.bf16.mxu0 0
        %2190 = vmatpush1.bf16.msra.mxu0 0
        %2191 = vmatprep.subr.bf16.mxu0 0
        %2192 = vmatpush1.bf16.msra.mxu0 0
        %2193 = vmatprep.subr.bf16.mxu0 0
        %2194 = vmatpush1.bf16.msra.mxu0 0
        %2195 = vmatprep.subr.bf16.mxu0 0
        %2196 = vmatpush1.bf16.msra.mxu0 0
        %2197 = vmatprep.subr.bf16.mxu0 0
        %2198 = vmatpush1.bf16.msra.mxu0 0
        %2199 = vmatprep.subr.bf16.mxu0 0
        %2200 = vmatpush1.bf16.msra.mxu0 0
        %2201 = vmatprep.subr.bf16.mxu0 0
        %2202 = vmatpush1.bf16.msra.mxu0 0
        %2203 = vmatprep.subr.bf16.mxu0 0
        %2204 = vmatpush1.bf16.msra.mxu0 0
        %2205 = vmatprep.subr.bf16.mxu0 0
        %2206 = vmatpush1.bf16.msra.mxu0 0
        %2207 = vmatprep.subr.bf16.mxu0 0
        %2208 = vmatpush1.bf16.msra.mxu0 0
        %2209 = vmatprep.subr.bf16.mxu0 0
        %2210 = vmatpush1.bf16.msra.mxu0 0
        %2211 = vmatprep.subr.bf16.mxu0 0
        %2212 = vmatpush1.bf16.msra.mxu0 0
        %2213 = vmatprep.subr.bf16.mxu0 0
        %2214 = vmatpush1.bf16.msra.mxu0 0
        %2215 = vmatprep.subr.bf16.mxu0 0
        %2216 = vmatpush1.bf16.msra.mxu0 0
        %2217 = vmatprep.mubr.bf16.mxu0 0
        %2218 = vmatmul.mubr.bf16.gmra.mrb[0].mxu0 %v2183
        %v2219 = vpop.f32.mrb[0].mxu0
        %v2220 = vadd.f32 0.0, %v2219
        %v2221 = vpop.f32.mrb[0].mxu0
        %v2222 = vpop.f32.mrb[0].mxu0
        %v2223 = vpop.f32.mrb[0].mxu0
        %2224 = vdwg.mxu0
        %v2226 = vsel %vm2043, %v2091, 0
        %2228 = vmatprep.subr.bf16.mxu0 0
        %2229 = vmatpush1.bf16.msra.mxu0 %v2095
        %2230 = vmatprep.subr.bf16.mxu0 0
        %2231 = vmatpush1.bf16.msra.mxu0 0
        %2232 = vmatprep.subr.bf16.mxu0 0
        %2233 = vmatpush1.bf16.msra.mxu0 0
        %2234 = vmatprep.subr.bf16.mxu0 0
        %2235 = vmatpush1.bf16.msra.mxu0 0
        %2236 = vmatprep.subr.bf16.mxu0 0
        %2237 = vmatpush1.bf16.msra.mxu0 0
        %2238 = vmatprep.subr.bf16.mxu0 0
        %2239 = vmatpush1.bf16.msra.mxu0 0
        %2240 = vmatprep.subr.bf16.mxu0 0
        %2241 = vmatpush1.bf16.msra.mxu0 0
        %2242 = vmatprep.subr.bf16.mxu0 0
        %2243 = vmatpush1.bf16.msra.mxu0 0
        %2244 = vmatprep.subr.bf16.mxu0 0
        %2245 = vmatpush1.bf16.msra.mxu0 0
        %2246 = vmatprep.subr.bf16.mxu0 0
        %2247 = vmatpush1.bf16.msra.mxu0 0
        %2248 = vmatprep.subr.bf16.mxu0 0
        %2249 = vmatpush1.bf16.msra.mxu0 0
        %2250 = vmatprep.subr.bf16.mxu0 0
        %2251 = vmatpush1.bf16.msra.mxu0 0
        %2252 = vmatprep.subr.bf16.mxu0 0
        %2253 = vmatpush1.bf16.msra.mxu0 0
        %2254 = vmatprep.subr.bf16.mxu0 0
        %2255 = vmatpush1.bf16.msra.mxu0 0
        %2256 = vmatprep.subr.bf16.mxu0 0
        %2257 = vmatpush1.bf16.msra.mxu0 0
        %2258 = vmatprep.subr.bf16.mxu0 0
        %2259 = vmatpush1.bf16.msra.mxu0 0
        %2260 = vmatprep.mubr.bf16.mxu0 0
        %2261 = vmatmul.mubr.bf16.gmra.mrb[0].mxu0 %v2226
        %v2262 = vpop.f32.mrb[0].mxu0
        %v2263 = vadd.f32 0.0, %v2262
        %v2264 = vpop.f32.mrb[0].mxu0
        %v2265 = vpop.f32.mrb[0].mxu0
        %v2266 = vpop.f32.mrb[0].mxu0
        %2267 = vdwg.mxu0
        %v2268 = vpack.c.bf16 %v2134, %v2134
        %v2269 = vld [vmem:[#allocation19] sm:$0xf]
        %v2270 = vpack.c.bf16 %v2177, %v2177
        %s2271 = scalar_lea.vmem [#allocation19], 4
        %v2272 = vld [vmem:[%s2271] sm:$0xf]
        %v2274 = vsel %vm1858, %v2270, 0
        %vm2276 = vcmask 1043456
        %v2278 = vsel %vm2276, %v2272, 0
        %2280 = vmatprep.subr.bf16.mxu0 0
        %2281 = vmatpush1.bf16.msra.mxu0 %v2278
        %2282 = vmatprep.subr.bf16.mxu0 0
        %2283 = vmatpush1.bf16.msra.mxu0 0
        %2284 = vmatprep.subr.bf16.mxu0 0
        %2285 = vmatpush1.bf16.msra.mxu0 0
        %2286 = vmatprep.subr.bf16.mxu0 0
        %2287 = vmatpush1.bf16.msra.mxu0 0
        %2288 = vmatprep.subr.bf16.mxu0 0
        %2289 = vmatpush1.bf16.msra.mxu0 0
        %2290 = vmatprep.subr.bf16.mxu0 0
        %2291 = vmatpush1.bf16.msra.mxu0 0
        %2292 = vmatprep.subr.bf16.mxu0 0
        %2293 = vmatpush1.bf16.msra.mxu0 0
        %2294 = vmatprep.subr.bf16.mxu0 0
        %2295 = vmatpush1.bf16.msra.mxu0 0
        %2296 = vmatprep.subr.bf16.mxu0 0
        %2297 = vmatpush1.bf16.msra.mxu0 0
        %2298 = vmatprep.subr.bf16.mxu0 0
        %2299 = vmatpush1.bf16.msra.mxu0 0
        %2300 = vmatprep.subr.bf16.mxu0 0
        %2301 = vmatpush1.bf16.msra.mxu0 0
        %2302 = vmatprep.subr.bf16.mxu0 0
        %2303 = vmatpush1.bf16.msra.mxu0 0
        %2304 = vmatprep.subr.bf16.mxu0 0
        %2305 = vmatpush1.bf16.msra.mxu0 0
        %2306 = vmatprep.subr.bf16.mxu0 0
        %2307 = vmatpush1.bf16.msra.mxu0 0
        %2308 = vmatprep.subr.bf16.mxu0 0
        %2309 = vmatpush1.bf16.msra.mxu0 0
        %2310 = vmatprep.subr.bf16.mxu0 0
        %2311 = vmatpush1.bf16.msra.mxu0 0
        %2312 = vmatprep.mubr.bf16.mxu0 0
        %2313 = vmatmul.mubr.bf16.gmra.mrb[0].mxu0 %v2274
        %v2314 = vpop.f32.mrb[0].mxu0
        %v2315 = vadd.f32 0.0, %v2314
        %v2316 = vpop.f32.mrb[0].mxu0
        %v2317 = vpop.f32.mrb[0].mxu0
        %v2318 = vpop.f32.mrb[0].mxu0
        %2319 = vdwg.mxu0
        %v2321 = vsel %vm1858, %v2268, 0
        %v2324 = vsel %vm2276, %v2269, 0
        %2326 = vmatprep.subr.bf16.mxu0 0
        %2327 = vmatpush1.bf16.msra.mxu0 %v2324
        %2328 = vmatprep.subr.bf16.mxu0 0
        %2329 = vmatpush1.bf16.msra.mxu0 0
        %2330 = vmatprep.subr.bf16.mxu0 0
        %2331 = vmatpush1.bf16.msra.mxu0 0
        %2332 = vmatprep.subr.bf16.mxu0 0
        %2333 = vmatpush1.bf16.msra.mxu0 0
        %2334 = vmatprep.subr.bf16.mxu0 0
        %2335 = vmatpush1.bf16.msra.mxu0 0
        %2336 = vmatprep.subr.bf16.mxu0 0
        %2337 = vmatpush1.bf16.msra.mxu0 0
        %2338 = vmatprep.subr.bf16.mxu0 0
        %2339 = vmatpush1.bf16.msra.mxu0 0
        %2340 = vmatprep.subr.bf16.mxu0 0
        %2341 = vmatpush1.bf16.msra.mxu0 0
        %2342 = vmatprep.subr.bf16.mxu0 0
        %2343 = vmatpush1.bf16.msra.mxu0 0
        %2344 = vmatprep.subr.bf16.mxu0 0
        %2345 = vmatpush1.bf16.msra.mxu0 0
        %2346 = vmatprep.subr.bf16.mxu0 0
        %2347 = vmatpush1.bf16.msra.mxu0 0
        %2348 = vmatprep.subr.bf16.mxu0 0
        %2349 = vmatpush1.bf16.msra.mxu0 0
        %2350 = vmatprep.subr.bf16.mxu0 0
        %2351 = vmatpush1.bf16.msra.mxu0 0
        %2352 = vmatprep.subr.bf16.mxu0 0
        %2353 = vmatpush1.bf16.msra.mxu0 0
        %2354 = vmatprep.subr.bf16.mxu0 0
        %2355 = vmatpush1.bf16.msra.mxu0 0
        %2356 = vmatprep.subr.bf16.mxu0 0
        %2357 = vmatpush1.bf16.msra.mxu0 0
        %2358 = vmatprep.mubr.bf16.mxu0 0
        %2359 = vmatmul.mubr.bf16.gmra.mrb[0].mxu0 %v2321
        %v2360 = vpop.f32.mrb[0].mxu0
        %v2361 = vadd.f32 %v2315, %v2360
        %v2362 = vpop.f32.mrb[0].mxu0
        %v2363 = vpop.f32.mrb[0].mxu0
        %v2364 = vpop.f32.mrb[0].mxu0
        %2365 = vdwg.mxu0
        %v2366 = vpack.c.bf16 %v2220, %v2220
        %s2367 = scalar_lea.vmem [#allocation19], 8
        %v2368 = vld [vmem:[%s2367] sm:$0xf]
        %v2370 = vsel %vm1858, %v2366, 0
        %v2373 = vsel %vm2276, %v2368, 0
        %2375 = vmatprep.subr.bf16.mxu0 0
        %2376 = vmatpush1.bf16.msra.mxu0 %v2373
        %2377 = vmatprep.subr.bf16.mxu0 0
        %2378 = vmatpush1.bf16.msra.mxu0 0
        %2379 = vmatprep.subr.bf16.mxu0 0
        %2380 = vmatpush1.bf16.msra.mxu0 0
        %2381 = vmatprep.subr.bf16.mxu0 0
        %2382 = vmatpush1.bf16.msra.mxu0 0
        %2383 = vmatprep.subr.bf16.mxu0 0
        %2384 = vmatpush1.bf16.msra.mxu0 0
        %2385 = vmatprep.subr.bf16.mxu0 0
        %2386 = vmatpush1.bf16.msra.mxu0 0
        %2387 = vmatprep.subr.bf16.mxu0 0
        %2388 = vmatpush1.bf16.msra.mxu0 0
        %2389 = vmatprep.subr.bf16.mxu0 0
        %2390 = vmatpush1.bf16.msra.mxu0 0
        %2391 = vmatprep.subr.bf16.mxu0 0
        %2392 = vmatpush1.bf16.msra.mxu0 0
        %2393 = vmatprep.subr.bf16.mxu0 0
        %2394 = vmatpush1.bf16.msra.mxu0 0
        %2395 = vmatprep.subr.bf16.mxu0 0
        %2396 = vmatpush1.bf16.msra.mxu0 0
        %2397 = vmatprep.subr.bf16.mxu0 0
        %2398 = vmatpush1.bf16.msra.mxu0 0
        %2399 = vmatprep.subr.bf16.mxu0 0
        %2400 = vmatpush1.bf16.msra.mxu0 0
        %2401 = vmatprep.subr.bf16.mxu0 0
        %2402 = vmatpush1.bf16.msra.mxu0 0
        %2403 = vmatprep.subr.bf16.mxu0 0
        %2404 = vmatpush1.bf16.msra.mxu0 0
        %2405 = vmatprep.subr.bf16.mxu0 0
        %2406 = vmatpush1.bf16.msra.mxu0 0
        %2407 = vmatprep.mubr.bf16.mxu0 0
        %2408 = vmatmul.mubr.bf16.gmra.mrb[0].mxu0 %v2370
        %v2409 = vpop.f32.mrb[0].mxu0
        %v2410 = vadd.f32 0.0, %v2409
        %v2411 = vpop.f32.mrb[0].mxu0
        %v2412 = vpop.f32.mrb[0].mxu0
        %v2413 = vpop.f32.mrb[0].mxu0
        %2414 = vdwg.mxu0
        %v2415 = vadd.f32 %v2361, %v2410
        %v2416 = vpack.c.bf16 %v2263, %v2263
        %s2417 = scalar_lea.vmem [#allocation19], 12
        %v2418 = vld [vmem:[%s2417] sm:$0xf]
        %v2420 = vsel %vm1858, %v2416, 0
        %v2423 = vsel %vm2276, %v2418, 0
        %2425 = vmatprep.subr.bf16.mxu0 0
        %2426 = vmatpush1.bf16.msra.mxu0 %v2423
        %2427 = vmatprep.subr.bf16.mxu0 0
        %2428 = vmatpush1.bf16.msra.mxu0 0
        %2429 = vmatprep.subr.bf16.mxu0 0
        %2430 = vmatpush1.bf16.msra.mxu0 0
        %2431 = vmatprep.subr.bf16.mxu0 0
        %2432 = vmatpush1.bf16.msra.mxu0 0
        %2433 = vmatprep.subr.bf16.mxu0 0
        %2434 = vmatpush1.bf16.msra.mxu0 0
        %2435 = vmatprep.subr.bf16.mxu0 0
        %2436 = vmatpush1.bf16.msra.mxu0 0
        %2437 = vmatprep.subr.bf16.mxu0 0
        %2438 = vmatpush1.bf16.msra.mxu0 0
        %2439 = vmatprep.subr.bf16.mxu0 0
        %2440 = vmatpush1.bf16.msra.mxu0 0
        %2441 = vmatprep.subr.bf16.mxu0 0
        %2442 = vmatpush1.bf16.msra.mxu0 0
        %2443 = vmatprep.subr.bf16.mxu0 0
        %2444 = vmatpush1.bf16.msra.mxu0 0
        %2445 = vmatprep.subr.bf16.mxu0 0
        %2446 = vmatpush1.bf16.msra.mxu0 0
        %2447 = vmatprep.subr.bf16.mxu0 0
        %2448 = vmatpush1.bf16.msra.mxu0 0
        %2449 = vmatprep.subr.bf16.mxu0 0
        %2450 = vmatpush1.bf16.msra.mxu0 0
        %2451 = vmatprep.subr.bf16.mxu0 0
        %2452 = vmatpush1.bf16.msra.mxu0 0
        %2453 = vmatprep.subr.bf16.mxu0 0
        %2454 = vmatpush1.bf16.msra.mxu0 0
        %2455 = vmatprep.subr.bf16.mxu0 0
        %2456 = vmatpush1.bf16.msra.mxu0 0
        %2457 = vmatprep.mubr.bf16.mxu0 0
        %2458 = vmatmul.mubr.bf16.gmra.mrb[0].mxu0 %v2420
        %v2459 = vpop.f32.mrb[0].mxu0
        %v2460 = vadd.f32 0.0, %v2459
        %v2461 = vpop.f32.mrb[0].mxu0
        %v2462 = vpop.f32.mrb[0].mxu0
        %v2463 = vpop.f32.mrb[0].mxu0
        %2464 = vdwg.mxu0
        %v2465 = vadd.f32 %v2415, %v2460
        %v2466 = vld [vmem:[#allocation21] sm:$0x1]
        %v2468 = vlaneseq
        %v2469 = vshrl.u32 %v2468, 7
        %v2470 = vsub.s32 0, %v2469
        %v2471 = vrot.slane %v2466, %v2470
        %v2473 = vadd.f32 %v2465, %v2471
        %v2474 = vadd.f32 %v1605, %v2473
        %v2475 = vsel %vm1606, %v2474, 0.0
        %2476 = vadd.xlane.f32.xlu0 %v2475
        %v2477 = vpop.xlane.xlu0 %2476
        %v2478 = vmul.f32 %v2477, %v1610
        %v2479 = vsub.f32 %v2474, %v2478
        %v2480 = vmul.f32 %v2479, %v2479
        %v2481 = vsel %vm1606, %v2480, 0.0
        %2482 = vadd.xlane.f32.xlu0 %v2481
        %v2483 = vpop.xlane.xlu0 %2482
        %v2484 = vmul.f32 %v2483, %v1610
        %v2485 = vadd.f32 %v2484, 1e-05
        %v2486 = vrsqrt.pop %v2485
        %v2487 = vmul.f32 %v2479, %v2486
        %v2488 = vld [vmem:[#allocation22] sm:$0x1]
        %v2490 = vlaneseq
        %v2491 = vshrl.u32 %v2490, 7
        %v2492 = vsub.s32 0, %v2491
        %v2493 = vrot.slane %v2488, %v2492
        %v2495 = vmul.f32 %v2487, %v2493
        %v2496 = vld [vmem:[#allocation24] sm:$0x1]
        %v2498 = vlaneseq
        %v2499 = vshrl.u32 %v2498, 7
        %v2500 = vsub.s32 0, %v2499
        %v2501 = vrot.slane %v2496, %v2500
        %v2503 = vadd.f32 %v2495, %v2501
        %v2504 = vpack.c.bf16 %v2503, %v2503
        %v2505 = vld [vmem:[#allocation25] sm:$0xf]
        %v2506 = vld [vmem:[#allocation25 + $0x4] sm:$0xf]
        %v2507 = vld [vmem:[#allocation25 + $0x8] sm:$0xf]
        %v2508 = vld [vmem:[#allocation25 + $0xc] sm:$0xf]
        %v2509 = vld [vmem:[#allocation27] sm:$0x1]
        %v2511 = vlaneseq
        %v2512 = vshrl.u32 %v2511, 7
        %v2513 = vsub.s32 0, %v2512
        %v2514 = vrot.slane %v2509, %v2513
        %v2520 = vunpack.c.l.b16 %v2505
        %v2521 = vunpack.c.l.b16 %v2506
        %v2522 = vunpack.c.l.b16 %v2507
        %v2523 = vunpack.c.l.b16 %v2508
        %v2524 = vpack.c.b16 %v2521, %v2520
        %v2525 = vpack.c.b16 %v2523, %v2522
        %v2529 = vsel %vm1606, %v2504, 0
        %2531 = vmatprep.subr.bf16.mxu0 0
        %2532 = vmatpush1.bf16.msra.mxu0 %v2524
        %2533 = vmatprep.subr.bf16.mxu0 0
        %2534 = vmatpush1.bf16.msra.mxu0 %v2525
        %2535 = vmatprep.subr.bf16.mxu0 0
        %2536 = vmatpush1.bf16.msra.mxu0 0
        %2537 = vmatprep.subr.bf16.mxu0 0
        %2538 = vmatpush1.bf16.msra.mxu0 0
        %2539 = vmatprep.subr.bf16.mxu0 0
        %2540 = vmatpush1.bf16.msra.mxu0 0
        %2541 = vmatprep.subr.bf16.mxu0 0
        %2542 = vmatpush1.bf16.msra.mxu0 0
        %2543 = vmatprep.subr.bf16.mxu0 0
        %2544 = vmatpush1.bf16.msra.mxu0 0
        %2545 = vmatprep.subr.bf16.mxu0 0
        %2546 = vmatpush1.bf16.msra.mxu0 0
        %2547 = vmatprep.subr.bf16.mxu0 0
        %2548 = vmatpush1.bf16.msra.mxu0 0
        %2549 = vmatprep.subr.bf16.mxu0 0
        %2550 = vmatpush1.bf16.msra.mxu0 0
        %2551 = vmatprep.subr.bf16.mxu0 0
        %2552 = vmatpush1.bf16.msra.mxu0 0
        %2553 = vmatprep.subr.bf16.mxu0 0
        %2554 = vmatpush1.bf16.msra.mxu0 0
        %2555 = vmatprep.subr.bf16.mxu0 0
        %2556 = vmatpush1.bf16.msra.mxu0 0
        %2557 = vmatprep.subr.bf16.mxu0 0
        %2558 = vmatpush1.bf16.msra.mxu0 0
        %2559 = vmatprep.subr.bf16.mxu0 0
        %2560 = vmatpush1.bf16.msra.mxu0 0
        %2561 = vmatprep.subr.bf16.mxu0 0
        %2562 = vmatpush1.bf16.msra.mxu0 0
        %2563 = vmatprep.mubr.bf16.mxu0 0
        %2564 = vmatmul.mubr.bf16.gmra.mrb[0].mxu0 %v2529
        %v2565 = vpop.f32.mrb[0].mxu0
        %v2566 = vadd.f32 %v2514, %v2565
        %v2567 = vpop.f32.mrb[0].mxu0
        %v2568 = vpop.f32.mrb[0].mxu0
        %v2569 = vpop.f32.mrb[0].mxu0
        %2570 = vdwg.mxu0
        %v2571 = vmul.f32 %v2566, 0.5
        %v2572 = vmul.f32 %v2566, 0.70710677
        %v2573 = verf.f32.pop %v2572
        %v2574 = vadd.f32 %v2573, 1.0
        %v2575 = vmul.f32 %v2571, %v2574
        %v2576 = vpack.c.bf16 %v2575, %v2575
        %v2577 = vld [vmem:[#allocation28] sm:$0xf]
        %v2578 = vld [vmem:[#allocation28 + $0x4] sm:$0xf]
        %v2579 = vld [vmem:[#allocation28 + $0x8] sm:$0xf]
        %v2580 = vld [vmem:[#allocation28 + $0xc] sm:$0xf]
        %v2581 = vld [vmem:[#allocation28 + $0x10] sm:$0xf]
        %v2582 = vld [vmem:[#allocation28 + $0x14] sm:$0xf]
        %v2583 = vld [vmem:[#allocation28 + $0x18] sm:$0xf]
        %v2584 = vld [vmem:[#allocation28 + $0x1c] sm:$0xf]
        %v2585 = vld [vmem:[#allocation28 + $0x20] sm:$0xf]
        %v2586 = vld [vmem:[#allocation28 + $0x24] sm:$0xf]
        %v2587 = vld [vmem:[#allocation28 + $0x28] sm:$0xf]
        %v2588 = vld [vmem:[#allocation28 + $0x2c] sm:$0xf]
        %v2589 = vld [vmem:[#allocation28 + $0x30] sm:$0xf]
        %v2590 = vld [vmem:[#allocation28 + $0x34] sm:$0xf]
        %v2591 = vld [vmem:[#allocation28 + $0x38] sm:$0xf]
        %v2592 = vld [vmem:[#allocation28 + $0x3c] sm:$0xf]
        %v2593 = vld [vmem:[#allocation30] sm:$0x1]
        %v2595 = vlaneseq
        %v2596 = vshrl.u32 %v2595, 7
        %v2597 = vsub.s32 0, %v2596
        %v2598 = vrot.slane %v2593, %v2597
        %v2616 = vunpack.c.l.b16 %v2577
        %v2617 = vunpack.c.l.b16 %v2578
        %v2618 = vunpack.c.l.b16 %v2579
        %v2619 = vunpack.c.l.b16 %v2580
        %v2620 = vunpack.c.l.b16 %v2581
        %v2621 = vunpack.c.l.b16 %v2582
        %v2622 = vunpack.c.l.b16 %v2583
        %v2623 = vunpack.c.l.b16 %v2584
        %v2624 = vunpack.c.l.b16 %v2585
        %v2625 = vunpack.c.l.b16 %v2586
        %v2626 = vunpack.c.l.b16 %v2587
        %v2627 = vunpack.c.l.b16 %v2588
        %v2628 = vunpack.c.l.b16 %v2589
        %v2629 = vunpack.c.l.b16 %v2590
        %v2630 = vunpack.c.l.b16 %v2591
        %v2631 = vunpack.c.l.b16 %v2592
        %v2632 = vpack.c.b16 %v2617, %v2616
        %v2633 = vpack.c.b16 %v2619, %v2618
        %v2634 = vpack.c.b16 %v2621, %v2620
        %v2635 = vpack.c.b16 %v2623, %v2622
        %v2636 = vpack.c.b16 %v2625, %v2624
        %v2637 = vpack.c.b16 %v2627, %v2626
        %v2638 = vpack.c.b16 %v2629, %v2628
        %v2639 = vpack.c.b16 %v2631, %v2630
        %2648 = vmatprep.subr.bf16.mxu0 0
        %2649 = vmatpush1.bf16.msra.mxu0 %v2632
        %2650 = vmatprep.subr.bf16.mxu0 0
        %2651 = vmatpush1.bf16.msra.mxu0 %v2633
        %2652 = vmatprep.subr.bf16.mxu0 0
        %2653 = vmatpush1.bf16.msra.mxu0 %v2634
        %2654 = vmatprep.subr.bf16.mxu0 0
        %2655 = vmatpush1.bf16.msra.mxu0 %v2635
        %2656 = vmatprep.subr.bf16.mxu0 0
        %2657 = vmatpush1.bf16.msra.mxu0 %v2636
        %2658 = vmatprep.subr.bf16.mxu0 0
        %2659 = vmatpush1.bf16.msra.mxu0 %v2637
        %2660 = vmatprep.subr.bf16.mxu0 0
        %2661 = vmatpush1.bf16.msra.mxu0 %v2638
        %2662 = vmatprep.subr.bf16.mxu0 0
        %2663 = vmatpush1.bf16.msra.mxu0 %v2639
        %2664 = vmatprep.subr.bf16.mxu0 0
        %2665 = vmatpush1.bf16.msra.mxu0 0
        %2666 = vmatprep.subr.bf16.mxu0 0
        %2667 = vmatpush1.bf16.msra.mxu0 0
        %2668 = vmatprep.subr.bf16.mxu0 0
        %2669 = vmatpush1.bf16.msra.mxu0 0
        %2670 = vmatprep.subr.bf16.mxu0 0
        %2671 = vmatpush1.bf16.msra.mxu0 0
        %2672 = vmatprep.subr.bf16.mxu0 0
        %2673 = vmatpush1.bf16.msra.mxu0 0
        %2674 = vmatprep.subr.bf16.mxu0 0
        %2675 = vmatpush1.bf16.msra.mxu0 0
        %2676 = vmatprep.subr.bf16.mxu0 0
        %2677 = vmatpush1.bf16.msra.mxu0 0
        %2678 = vmatprep.subr.bf16.mxu0 0
        %2679 = vmatpush1.bf16.msra.mxu0 0
        %2680 = vmatprep.mubr.bf16.mxu0 0
        %2681 = vmatmul.mubr.bf16.gmra.mrb[0].mxu0 %v2576
        %v2682 = vpop.f32.mrb[0].mxu0
        %v2683 = vadd.f32 %v2598, %v2682
        %v2684 = vpop.f32.mrb[0].mxu0
        %v2685 = vpop.f32.mrb[0].mxu0
        %v2686 = vpop.f32.mrb[0].mxu0
        %2687 = vdwg.mxu0
        %v2688 = vadd.f32 %v2474, %v2683
        %2689 = vst.msk [vmem:[%s815] sm:$0xff] %vm1606, %v2688
        %s2690 = sand.u32 %s436, 1
        %s2691 = scalar_lea.sflag [#allocation6], %s2690
        %s2692 = sand.u32 %s436, 1
        %s2693 = smul.addr %s2692, 8
        %s2694 = scalar_lea.vmem [#allocation31], %s2693
        // Predicated region
        $region161: #{tpu_custom_call.1} parent=87 // pred_check
          %p2695 = pneg %p446
        $region162: #{tpu_custom_call.1} parent=87 // pred_check_branch
          %2697 = sbr.rel (%p2695) target = $region164
        $region163: #{tpu_custom_call.1} parent=87 // pred_region
          %s2699 = ssub.s32 128, 128
          %2700 = vsyncadd %s2691, %s2699
          %s2701 = smul.addr %s46, 2
          %s2702 = sadd.s32 %s47, %s2701
          %s2703 = smul.addr %s2702, 128
          %s2704 = scalar_lea.hbm %s17, %s2703
          %s2706 = sshll.u32 %s2694, 4
          %s2707 = int_to_ptr.vmem [resolvable:$true] %s2706
          %2709 = dma.vmem_to_hbm [thread:$0]  %s2707, 128, %s2704, %s2691
        $region164: #{tpu_custom_call.1} parent=87 // pred_fallthru
          _
      $region88: #{tpu_custom_call.1} parent=5 // pred_fallthru
        _
      %p2710 = scmp.le.s32.totalorder 2, %s37
      // Predicated region
      $region165: #{tpu_custom_call.1} parent=5 // pred_check
        %p2711 = pneg %p2710
      $region166: #{tpu_custom_call.1} parent=5 // pred_check_branch
        %2713 = sbr.rel (%p2711) target = $region168
      $region167: #{tpu_custom_call.1} parent=5 // pred_region
        %s2714 = ssub.s32 %s37, 2
        // Predicated region
        $region169: #{tpu_custom_call.1} parent=167 // pred_check
          %p2715 = pneg %p452
        $region170: #{tpu_custom_call.1} parent=167 // pred_check_branch
          %2717 = sbr.rel (%p2715) target = $region172
        $region171: #{tpu_custom_call.1} parent=167 // pred_region
          %s2718 = sand.u32 %s437, 1
          %s2719 = scalar_lea.sflag [#allocation6], %s2718
          %s2720 = sand.u32 %s437, 1
          %s2721 = smul.addr %s2720, 8
          %s2722 = scalar_lea.vmem [#allocation31], %s2721
          %2723 = dma.done %s2719, 128
        $region172: #{tpu_custom_call.1} parent=167 // pred_fallthru
          _
      $region168: #{tpu_custom_call.1} parent=5 // pred_fallthru
        _
    $region6: #{tpu_custom_call.1} parent=1 // loop_footer
      %s41 = sadd.s32 1, %s37
    $region7: #{tpu_custom_call.1} parent=1 // loop_footer_branch
      %36 = sbr.rel target = $region3
    $region8: #{tpu_custom_call.1} parent=1 // loop_exit
      _
    %2724 = vsyncpa [#allocation5], 1
    %s2725 = scalar_lea.sflag [#allocation5], 1
    %2726 = vsyncpa %s2725, 1
    %2727 = vsyncpa [#allocation8], 1
    %s2728 = scalar_lea.sflag [#allocation8], 1
    %2729 = vsyncpa %s2728, 1
    %2730 = vsyncpa [#allocation11], 1
    %2731 = vsyncpa [#allocation14], 1
    %2732 = vsyncpa [#allocation17], 1
    %2733 = vsyncpa [#allocation20], 1
    %2734 = vsyncpa [#allocation23], 1
    %2735 = vsyncpa [#allocation26], 1
    %2736 = vsyncpa [#allocation29], 1
    %2737 = vsyncpa [#allocation6], 1
    %s2738 = scalar_lea.sflag [#allocation6], 1
    %2739 = vsyncpa %s2738, 1

// kernel: tpu_custom_call.1
$region0: #{tpu_custom_call.1}
  #allocation0 [shape = 'u32[]', space=smem, size = 0x4, offset = 0x4, fixed_abs, tag = 'smem constant byte address 0x4 - core index']
  #allocation1 [shape = 'u32[144,128]{1,0:T(1,128)}', space=vmem, size = 0x12000, scoped, tag = 'internal scratch']
  #allocation2 [shape = 'bf16[4,16,8]{2,1,0:T(16,128)(2,1)}', space=vmem, size = 0x4000, scoped, tag = 'scratch operand']
  #allocation3 [shape = 'bf16[4,16,8]{2,1,0:T(16,128)(2,1)}', space=vmem, size = 0x4000, scoped, tag = 'scratch operand']
  %s0 = inlined_call_operand.hbm [shape: f32[2,16,32], index: 0, kind: input, shape index: {}]
  %s1 = inlined_call_operand.hbm [shape: f32[2,1,32], index: 1, kind: input, shape index: {}]
  %s2 = inlined_call_operand.hbm [shape: f32[2,1,32], index: 2, kind: input, shape index: {}]
  %s3 = inlined_call_operand.hbm [shape: bf16[32,32], index: 3, kind: input, shape index: {}]
  %s4 = inlined_call_operand.hbm [shape: f32[1,32], index: 4, kind: input, shape index: {}]
  %s5 = inlined_call_operand.hbm [shape: bf16[32,32], index: 5, kind: input, shape index: {}]
  %s6 = inlined_call_operand.hbm [shape: f32[1,32], index: 6, kind: input, shape index: {}]
  %s7 = inlined_call_operand.hbm [shape: bf16[32,32], index: 7, kind: input, shape index: {}]
  %s8 = inlined_call_operand.hbm [shape: f32[1,32], index: 8, kind: input, shape index: {}]
  %s9 = inlined_call_operand.hbm [shape: bf16[4,8,32], index: 9, kind: input, shape index: {}]
  %s10 = inlined_call_operand.hbm [shape: f32[1,32], index: 10, kind: input, shape index: {}]
  %s11 = inlined_call_operand.hbm [shape: f32[1,32], index: 11, kind: input, shape index: {}]
  %s12 = inlined_call_operand.hbm [shape: f32[1,32], index: 12, kind: input, shape index: {}]
  %s13 = inlined_call_operand.hbm [shape: bf16[32,128], index: 13, kind: input, shape index: {}]
  %s14 = inlined_call_operand.hbm [shape: f32[1,128], index: 14, kind: input, shape index: {}]
  %s15 = inlined_call_operand.hbm [shape: bf16[128,32], index: 15, kind: input, shape index: {}]
  %s16 = inlined_call_operand.hbm [shape: f32[1,32], index: 16, kind: input, shape index: {}]
  %s17 = inlined_call_operand.hbm [shape: f32[2,16,32], index: 17, kind: output, shape index: {}]
  %s18 = sld [smem:[#allocation0]]
  $region173: #{tpu_custom_call.1} parent=0
    _
  %s20 = ssub.s32 1, %s18
  %s21 = scalar_select 0, %s20, %s18
  $region1: #{tpu_custom_call.1} parent=0
    #allocation4 [shape = 'u8[16384]{0}', space=vmem, size = 0x4000, scoped, tag = 'input window, operand 0']
    #allocation5 [shape = 's32[2]{0}', space=sflag, size = 0x8, scoped, tag = 'scoped memory for tpu_custom_call.1']
    #allocation6 [shape = 's32[2]{0}', space=sflag, size = 0x8, scoped, tag = 'scoped memory for tpu_custom_call.1']
    #allocation7 [shape = 'u8[1024]{0}', space=vmem, size = 0x400, scoped, tag = 'input window, operand 1']
    #allocation8 [shape = 's32[2]{0}', space=sflag, size = 0x8, scoped, tag = 'scoped memory for tpu_custom_call.1']
    #allocation9 [shape = 'u8[1024]{0}', space=vmem, size = 0x400, scoped, tag = 'input window, operand 2']
    #allocation10 [shape = 'u8[8192]{0}', space=vmem, size = 0x2000, scoped, tag = 'input window, operand 3, single buffered']
    #allocation11 [shape = 's32[1]{0}', space=sflag, size = 0x4, scoped, tag = 'scoped memory for tpu_custom_call.1']
    #allocation12 [shape = 'u8[512]{0}', space=vmem, size = 0x400, scoped, tag = 'input window, operand 4, single buffered']
    #allocation13 [shape = 'u8[8192]{0}', space=vmem, size = 0x2000, scoped, tag = 'input window, operand 5, single buffered']
    #allocation14 [shape = 's32[1]{0}', space=sflag, size = 0x4, scoped, tag = 'scoped memory for tpu_custom_call.1']
    #allocation15 [shape = 'u8[512]{0}', space=vmem, size = 0x400, scoped, tag = 'input window, operand 6, single buffered']
    #allocation16 [shape = 'u8[8192]{0}', space=vmem, size = 0x2000, scoped, tag = 'input window, operand 7, single buffered']
    #allocation17 [shape = 's32[1]{0}', space=sflag, size = 0x4, scoped, tag = 'scoped memory for tpu_custom_call.1']
    #allocation18 [shape = 'u8[512]{0}', space=vmem, size = 0x400, scoped, tag = 'input window, operand 8, single buffered']
    #allocation19 [shape = 'u8[8192]{0}', space=vmem, size = 0x2000, scoped, tag = 'input window, operand 9, single buffered']
    #allocation20 [shape = 's32[1]{0}', space=sflag, size = 0x4, scoped, tag = 'scoped memory for tpu_custom_call.1']
    #allocation21 [shape = 'u8[512]{0}', space=vmem, size = 0x400, scoped, tag = 'input window, operand 10, single buffered']
    #allocation22 [shape = 'u8[512]{0}', space=vmem, size = 0x400, scoped, tag = 'input window, operand 11, single buffered']
    #allocation23 [shape = 's32[1]{0}', space=sflag, size = 0x4, scoped, tag = 'scoped memory for tpu_custom_call.1']
    #allocation24 [shape = 'u8[512]{0}', space=vmem, size = 0x400, scoped, tag = 'input window, operand 12, single buffered']
    #allocation25 [shape = 'u8[8192]{0}', space=vmem, size = 0x2000, scoped, tag = 'input window, operand 13, single buffered']
    #allocation26 [shape = 's32[1]{0}', space=sflag, size = 0x4, scoped, tag = 'scoped memory for tpu_custom_call.1']
    #allocation27 [shape = 'u8[512]{0}', space=vmem, size = 0x400, scoped, tag = 'input window, operand 14, single buffered']
    #allocation28 [shape = 'u8[32768]{0}', space=vmem, size = 0x8000, scoped, tag = 'input window, operand 15, single buffered']
    #allocation29 [shape = 's32[1]{0}', space=sflag, size = 0x4, scoped, tag = 'scoped memory for tpu_custom_call.1']
    #allocation30 [shape = 'u8[512]{0}', space=vmem, size = 0x400, scoped, tag = 'input window, operand 16, single buffered']
    #allocation31 [shape = 'u8[8192]{0}', space=vmem, size = 0x2000, scoped, tag = 'output window, operand 0']
    %22 = vsyncpa [#allocation5], 0
    %s23 = scalar_lea.sflag [#allocation5], 1
    %24 = vsyncpa %s23, 0
    %25 = vsyncpa [#allocation8], 0
    %s26 = scalar_lea.sflag [#allocation8], 1
    %27 = vsyncpa %s26, 0
    %28 = vsyncpa [#allocation11], 0
    %29 = vsyncpa [#allocation14], 0
    %30 = vsyncpa [#allocation17], 0
    %31 = vsyncpa [#allocation20], 0
    %32 = vsyncpa [#allocation23], 0
    %33 = vsyncpa [#allocation26], 0
    %34 = vsyncpa [#allocation29], 0
    %35 = vsyncpa [#allocation6], 0
    %s36 = scalar_lea.sflag [#allocation6], 1
    %37 = vsyncpa %s36, 0
    loop: start=0, step=1, limit=6
    $region2: #{tpu_custom_call.1} parent=1 // loop_pre_header
      _
    $region3: #{tpu_custom_call.1} parent=1 // loop_header
      %s39 = sphi 0, %s43
      %p40 = scmp.ge.s32.totalorder %s39, 6
      %s46 = sphi 0, %s58
      %s47 = sphi 0, %s54
      %s48 = sphi 0, %s46
      %s49 = sphi 0, %s47
      %s50 = sphi 0, %s48
      %s51 = sphi 0, %s49
      %s61 = sphi 0, %s63
      %s64 = sphi 0, %s61
      %s65 = sphi 0, %s64
      %s81 = sphi 0, %s65
      %s87 = sphi 0, %s89
      %s90 = sphi 0, %s87
      %s91 = sphi 0, %s90
      %s107 = sphi 0, %s91
      %s113 = sphi 0, %s115
      %s116 = sphi 0, %s113
      %s117 = sphi 0, %s116
      %s133 = sphi 0, %s117
      %s137 = sphi 0, %s137
      %s139 = sphi 0, %s137
      %s140 = sphi 0, %s139
      %s154 = sphi 0, %s140
      %s158 = sphi 0, %s158
      %s160 = sphi 0, %s158
      %s161 = sphi 0, %s160
      %s175 = sphi 0, %s161
      %s179 = sphi 0, %s179
      %s181 = sphi 0, %s179
      %s182 = sphi 0, %s181
      %s196 = sphi 0, %s182
      %s200 = sphi 0, %s200
      %s202 = sphi 0, %s200
      %s203 = sphi 0, %s202
      %s217 = sphi 0, %s203
      %s221 = sphi 0, %s221
      %s223 = sphi 0, %s221
      %s224 = sphi 0, %s223
      %s238 = sphi 0, %s224
      %s242 = sphi 0, %s242
      %s244 = sphi 0, %s242
      %s245 = sphi 0, %s244
      %s259 = sphi 0, %s245
      %s263 = sphi 0, %s263
      %s265 = sphi 0, %s263
      %s266 = sphi 0, %s265
      %s280 = sphi 0, %s266
      %s284 = sphi 0, %s284
      %s286 = sphi 0, %s284
      %s287 = sphi 0, %s286
      %s301 = sphi 0, %s287
      %s305 = sphi 0, %s305
      %s307 = sphi 0, %s305
      %s308 = sphi 0, %s307
      %s322 = sphi 0, %s308
      %s326 = sphi 0, %s326
      %s328 = sphi 0, %s326
      %s329 = sphi 0, %s328
      %s343 = sphi 0, %s329
      %s347 = sphi 0, %s347
      %s349 = sphi 0, %s347
      %s350 = sphi 0, %s349
      %s364 = sphi 0, %s350
      %s368 = sphi 0, %s368
      %s370 = sphi 0, %s368
      %s371 = sphi 0, %s370
      %s385 = sphi 0, %s371
      %s389 = sphi 0, %s389
      %s391 = sphi 0, %s389
      %s392 = sphi 0, %s391
      %s406 = sphi 0, %s392
      %s410 = sphi 0, %s410
      %s412 = sphi 0, %s410
      %s413 = sphi 0, %s412
      %s427 = sphi 0, %s413
      %s435 = sphi 0, %s437
      %s438 = sphi 0, %s435
      %s439 = sphi 0, %s438
      %s455 = sphi 0, %s439
    $region4: #{tpu_custom_call.1} parent=1 // loop_header_branch
      %42 = sbr.rel (%p40) target = $region8
    $region5: #{tpu_custom_call.1} parent=1 // loop_body
      %s44 = ssub.s32 %s39, 1
      %s45 = ssub.s32 %s39, 2
      %s52 = sadd.s32 1, %s47
      %p53 = scmp.ge.s32.totalorder %s52, 2
      %s54 = scalar_select %p53, 0, %s52
      %s55 = sadd.s32 1, %s46
      %s56 = scalar_select %p53, %s55, %s46
      %p57 = scmp.ge.s32.totalorder %s56, 2
      %s58 = scalar_select %p57, 0, %s56
      %s59 = ssub.s32 %s46, %s58
      %p60 = scmp.eq.s32.totalorder %s59, 0
      %s62 = sadd.s32 %s61, 1
      %s63 = scalar_select %p60, %s61, %s62
      %p66 = pneg %p60
      %p67 = scmp.eq.s32.totalorder %s39, 3
      %p68 = por %p66, %p67
      %p69 = scmp.ne.s32.totalorder %s61, %s64
      %p70 = scmp.eq.s32.totalorder %s39, 0
      %p71 = por %p69, %p70
      %p72 = scmp.ne.s32.totalorder %s61, %s64
      %p73 = scmp.eq.s32.totalorder %s44, 3
      %p74 = por %p72, %p73
      %p75 = scmp.ne.s32.totalorder %s64, %s65
      %p76 = scmp.eq.s32.totalorder %s44, 0
      %p77 = por %p75, %p76
      %p78 = scmp.ne.s32.totalorder %s64, %s65
      %p79 = scmp.eq.s32.totalorder %s45, 3
      %p80 = por %p78, %p79
      %p82 = scmp.ne.s32.totalorder %s65, %s81
      %p83 = scmp.eq.s32.totalorder %s45, 0
      %p84 = por %p82, %p83
      %s85 = ssub.s32 %s46, %s58
      %p86 = scmp.eq.s32.totalorder %s85, 0
      %s88 = sadd.s32 %s87, 1
      %s89 = scalar_select %p86, %s87, %s88
      %p92 = pneg %p86
      %p93 = scmp.eq.s32.totalorder %s39, 3
      %p94 = por %p92, %p93
      %p95 = scmp.ne.s32.totalorder %s87, %s90
      %p96 = scmp.eq.s32.totalorder %s39, 0
      %p97 = por %p95, %p96
      %p98 = scmp.ne.s32.totalorder %s87, %s90
      %p99 = scmp.eq.s32.totalorder %s44, 3
      %p100 = por %p98, %p99
      %p101 = scmp.ne.s32.totalorder %s90, %s91
      %p102 = scmp.eq.s32.totalorder %s44, 0
      %p103 = por %p101, %p102
      %p104 = scmp.ne.s32.totalorder %s90, %s91
      %p105 = scmp.eq.s32.totalorder %s45, 3
      %p106 = por %p104, %p105
      %p108 = scmp.ne.s32.totalorder %s91, %s107
      %p109 = scmp.eq.s32.totalorder %s45, 0
      %p110 = por %p108, %p109
      %s111 = ssub.s32 %s46, %s58
      %p112 = scmp.eq.s32.totalorder %s111, 0
      %s114 = sadd.s32 %s113, 1
      %s115 = scalar_select %p112, %s113, %s114
      %p118 = pneg %p112
      %p119 = scmp.eq.s32.totalorder %s39, 3
      %p120 = por %p118, %p119
      %p121 = scmp.ne.s32.totalorder %s113, %s116
      %p122 = scmp.eq.s32.totalorder %s39, 0
      %p123 = por %p121, %p122
      %p124 = scmp.ne.s32.totalorder %s113, %s116
      %p125 = scmp.eq.s32.totalorder %s44, 3
      %p126 = por %p124, %p125
      %p127 = scmp.ne.s32.totalorder %s116, %s117
      %p128 = scmp.eq.s32.totalorder %s44, 0
      %p129 = por %p127, %p128
      %p130 = scmp.ne.s32.totalorder %s116, %s117
      %p131 = scmp.eq.s32.totalorder %s45, 3
      %p132 = por %p130, %p131
      %p134 = scmp.ne.s32.totalorder %s117, %s133
      %p135 = scmp.eq.s32.totalorder %s45, 0
      %p136 = por %p134, %p135
      %s138 = sadd.s32 %s137, 1
      %p141 = scmp.eq.s32.totalorder %s39, 3
      %p142 = scmp.ne.s32.totalorder %s137, %s139
      %p143 = scmp.eq.s32.totalorder %s39, 0
      %p144 = por %p142, %p143
      %p145 = scmp.ne.s32.totalorder %s137, %s139
      %p146 = scmp.eq.s32.totalorder %s44, 3
      %p147 = por %p145, %p146
      %p148 = scmp.ne.s32.totalorder %s139, %s140
      %p149 = scmp.eq.s32.totalorder %s44, 0
      %p150 = por %p148, %p149
      %p151 = scmp.ne.s32.totalorder %s139, %s140
      %p152 = scmp.eq.s32.totalorder %s45, 3
      %p153 = por %p151, %p152
      %p155 = scmp.ne.s32.totalorder %s140, %s154
      %p156 = scmp.eq.s32.totalorder %s45, 0
      %p157 = por %p155, %p156
      %s159 = sadd.s32 %s158, 1
      %p162 = scmp.eq.s32.totalorder %s39, 3
      %p163 = scmp.ne.s32.totalorder %s158, %s160
      %p164 = scmp.eq.s32.totalorder %s39, 0
      %p165 = por %p163, %p164
      %p166 = scmp.ne.s32.totalorder %s158, %s160
      %p167 = scmp.eq.s32.totalorder %s44, 3
      %p168 = por %p166, %p167
      %p169 = scmp.ne.s32.totalorder %s160, %s161
      %p170 = scmp.eq.s32.totalorder %s44, 0
      %p171 = por %p169, %p170
      %p172 = scmp.ne.s32.totalorder %s160, %s161
      %p173 = scmp.eq.s32.totalorder %s45, 3
      %p174 = por %p172, %p173
      %p176 = scmp.ne.s32.totalorder %s161, %s175
      %p177 = scmp.eq.s32.totalorder %s45, 0
      %p178 = por %p176, %p177
      %s180 = sadd.s32 %s179, 1
      %p183 = scmp.eq.s32.totalorder %s39, 3
      %p184 = scmp.ne.s32.totalorder %s179, %s181
      %p185 = scmp.eq.s32.totalorder %s39, 0
      %p186 = por %p184, %p185
      %p187 = scmp.ne.s32.totalorder %s179, %s181
      %p188 = scmp.eq.s32.totalorder %s44, 3
      %p189 = por %p187, %p188
      %p190 = scmp.ne.s32.totalorder %s181, %s182
      %p191 = scmp.eq.s32.totalorder %s44, 0
      %p192 = por %p190, %p191
      %p193 = scmp.ne.s32.totalorder %s181, %s182
      %p194 = scmp.eq.s32.totalorder %s45, 3
      %p195 = por %p193, %p194
      %p197 = scmp.ne.s32.totalorder %s182, %s196
      %p198 = scmp.eq.s32.totalorder %s45, 0
      %p199 = por %p197, %p198
      %s201 = sadd.s32 %s200, 1
      %p204 = scmp.eq.s32.totalorder %s39, 3
      %p205 = scmp.ne.s32.totalorder %s200, %s202
      %p206 = scmp.eq.s32.totalorder %s39, 0
      %p207 = por %p205, %p206
      %p208 = scmp.ne.s32.totalorder %s200, %s202
      %p209 = scmp.eq.s32.totalorder %s44, 3
      %p210 = por %p208, %p209
      %p211 = scmp.ne.s32.totalorder %s202, %s203
      %p212 = scmp.eq.s32.totalorder %s44, 0
      %p213 = por %p211, %p212
      %p214 = scmp.ne.s32.totalorder %s202, %s203
      %p215 = scmp.eq.s32.totalorder %s45, 3
      %p216 = por %p214, %p215
      %p218 = scmp.ne.s32.totalorder %s203, %s217
      %p219 = scmp.eq.s32.totalorder %s45, 0
      %p220 = por %p218, %p219
      %s222 = sadd.s32 %s221, 1
      %p225 = scmp.eq.s32.totalorder %s39, 3
      %p226 = scmp.ne.s32.totalorder %s221, %s223
      %p227 = scmp.eq.s32.totalorder %s39, 0
      %p228 = por %p226, %p227
      %p229 = scmp.ne.s32.totalorder %s221, %s223
      %p230 = scmp.eq.s32.totalorder %s44, 3
      %p231 = por %p229, %p230
      %p232 = scmp.ne.s32.totalorder %s223, %s224
      %p233 = scmp.eq.s32.totalorder %s44, 0
      %p234 = por %p232, %p233
      %p235 = scmp.ne.s32.totalorder %s223, %s224
      %p236 = scmp.eq.s32.totalorder %s45, 3
      %p237 = por %p235, %p236
      %p239 = scmp.ne.s32.totalorder %s224, %s238
      %p240 = scmp.eq.s32.totalorder %s45, 0
      %p241 = por %p239, %p240
      %s243 = sadd.s32 %s242, 1
      %p246 = scmp.eq.s32.totalorder %s39, 3
      %p247 = scmp.ne.s32.totalorder %s242, %s244
      %p248 = scmp.eq.s32.totalorder %s39, 0
      %p249 = por %p247, %p248
      %p250 = scmp.ne.s32.totalorder %s242, %s244
      %p251 = scmp.eq.s32.totalorder %s44, 3
      %p252 = por %p250, %p251
      %p253 = scmp.ne.s32.totalorder %s244, %s245
      %p254 = scmp.eq.s32.totalorder %s44, 0
      %p255 = por %p253, %p254
      %p256 = scmp.ne.s32.totalorder %s244, %s245
      %p257 = scmp.eq.s32.totalorder %s45, 3
      %p258 = por %p256, %p257
      %p260 = scmp.ne.s32.totalorder %s245, %s259
      %p261 = scmp.eq.s32.totalorder %s45, 0
      %p262 = por %p260, %p261
      %s264 = sadd.s32 %s263, 1
      %p267 = scmp.eq.s32.totalorder %s39, 3
      %p268 = scmp.ne.s32.totalorder %s263, %s265
      %p269 = scmp.eq.s32.totalorder %s39, 0
      %p270 = por %p268, %p269
      %p271 = scmp.ne.s32.totalorder %s263, %s265
      %p272 = scmp.eq.s32.totalorder %s44, 3
      %p273 = por %p271, %p272
      %p274 = scmp.ne.s32.totalorder %s265, %s266
      %p275 = scmp.eq.s32.totalorder %s44, 0
      %p276 = por %p274, %p275
      %p277 = scmp.ne.s32.totalorder %s265, %s266
      %p278 = scmp.eq.s32.totalorder %s45, 3
      %p279 = por %p277, %p278
      %p281 = scmp.ne.s32.totalorder %s266, %s280
      %p282 = scmp.eq.s32.totalorder %s45, 0
      %p283 = por %p281, %p282
      %s285 = sadd.s32 %s284, 1
      %p288 = scmp.eq.s32.totalorder %s39, 3
      %p289 = scmp.ne.s32.totalorder %s284, %s286
      %p290 = scmp.eq.s32.totalorder %s39, 0
      %p291 = por %p289, %p290
      %p292 = scmp.ne.s32.totalorder %s284, %s286
      %p293 = scmp.eq.s32.totalorder %s44, 3
      %p294 = por %p292, %p293
      %p295 = scmp.ne.s32.totalorder %s286, %s287
      %p296 = scmp.eq.s32.totalorder %s44, 0
      %p297 = por %p295, %p296
      %p298 = scmp.ne.s32.totalorder %s286, %s287
      %p299 = scmp.eq.s32.totalorder %s45, 3
      %p300 = por %p298, %p299
      %p302 = scmp.ne.s32.totalorder %s287, %s301
      %p303 = scmp.eq.s32.totalorder %s45, 0
      %p304 = por %p302, %p303
      %s306 = sadd.s32 %s305, 1
      %p309 = scmp.eq.s32.totalorder %s39, 3
      %p310 = scmp.ne.s32.totalorder %s305, %s307
      %p311 = scmp.eq.s32.totalorder %s39, 0
      %p312 = por %p310, %p311
      %p313 = scmp.ne.s32.totalorder %s305, %s307
      %p314 = scmp.eq.s32.totalorder %s44, 3
      %p315 = por %p313, %p314
      %p316 = scmp.ne.s32.totalorder %s307, %s308
      %p317 = scmp.eq.s32.totalorder %s44, 0
      %p318 = por %p316, %p317
      %p319 = scmp.ne.s32.totalorder %s307, %s308
      %p320 = scmp.eq.s32.totalorder %s45, 3
      %p321 = por %p319, %p320
      %p323 = scmp.ne.s32.totalorder %s308, %s322
      %p324 = scmp.eq.s32.totalorder %s45, 0
      %p325 = por %p323, %p324
      %s327 = sadd.s32 %s326, 1
      %p330 = scmp.eq.s32.totalorder %s39, 3
      %p331 = scmp.ne.s32.totalorder %s326, %s328
      %p332 = scmp.eq.s32.totalorder %s39, 0
      %p333 = por %p331, %p332
      %p334 = scmp.ne.s32.totalorder %s326, %s328
      %p335 = scmp.eq.s32.totalorder %s44, 3
      %p336 = por %p334, %p335
      %p337 = scmp.ne.s32.totalorder %s328, %s329
      %p338 = scmp.eq.s32.totalorder %s44, 0
      %p339 = por %p337, %p338
      %p340 = scmp.ne.s32.totalorder %s328, %s329
      %p341 = scmp.eq.s32.totalorder %s45, 3
      %p342 = por %p340, %p341
      %p344 = scmp.ne.s32.totalorder %s329, %s343
      %p345 = scmp.eq.s32.totalorder %s45, 0
      %p346 = por %p344, %p345
      %s348 = sadd.s32 %s347, 1
      %p351 = scmp.eq.s32.totalorder %s39, 3
      %p352 = scmp.ne.s32.totalorder %s347, %s349
      %p353 = scmp.eq.s32.totalorder %s39, 0
      %p354 = por %p352, %p353
      %p355 = scmp.ne.s32.totalorder %s347, %s349
      %p356 = scmp.eq.s32.totalorder %s44, 3
      %p357 = por %p355, %p356
      %p358 = scmp.ne.s32.totalorder %s349, %s350
      %p359 = scmp.eq.s32.totalorder %s44, 0
      %p360 = por %p358, %p359
      %p361 = scmp.ne.s32.totalorder %s349, %s350
      %p362 = scmp.eq.s32.totalorder %s45, 3
      %p363 = por %p361, %p362
      %p365 = scmp.ne.s32.totalorder %s350, %s364
      %p366 = scmp.eq.s32.totalorder %s45, 0
      %p367 = por %p365, %p366
      %s369 = sadd.s32 %s368, 1
      %p372 = scmp.eq.s32.totalorder %s39, 3
      %p373 = scmp.ne.s32.totalorder %s368, %s370
      %p374 = scmp.eq.s32.totalorder %s39, 0
      %p375 = por %p373, %p374
      %p376 = scmp.ne.s32.totalorder %s368, %s370
      %p377 = scmp.eq.s32.totalorder %s44, 3
      %p378 = por %p376, %p377
      %p379 = scmp.ne.s32.totalorder %s370, %s371
      %p380 = scmp.eq.s32.totalorder %s44, 0
      %p381 = por %p379, %p380
      %p382 = scmp.ne.s32.totalorder %s370, %s371
      %p383 = scmp.eq.s32.totalorder %s45, 3
      %p384 = por %p382, %p383
      %p386 = scmp.ne.s32.totalorder %s371, %s385
      %p387 = scmp.eq.s32.totalorder %s45, 0
      %p388 = por %p386, %p387
      %s390 = sadd.s32 %s389, 1
      %p393 = scmp.eq.s32.totalorder %s39, 3
      %p394 = scmp.ne.s32.totalorder %s389, %s391
      %p395 = scmp.eq.s32.totalorder %s39, 0
      %p396 = por %p394, %p395
      %p397 = scmp.ne.s32.totalorder %s389, %s391
      %p398 = scmp.eq.s32.totalorder %s44, 3
      %p399 = por %p397, %p398
      %p400 = scmp.ne.s32.totalorder %s391, %s392
      %p401 = scmp.eq.s32.totalorder %s44, 0
      %p402 = por %p400, %p401
      %p403 = scmp.ne.s32.totalorder %s391, %s392
      %p404 = scmp.eq.s32.totalorder %s45, 3
      %p405 = por %p403, %p404
      %p407 = scmp.ne.s32.totalorder %s392, %s406
      %p408 = scmp.eq.s32.totalorder %s45, 0
      %p409 = por %p407, %p408
      %s411 = sadd.s32 %s410, 1
      %p414 = scmp.eq.s32.totalorder %s39, 3
      %p415 = scmp.ne.s32.totalorder %s410, %s412
      %p416 = scmp.eq.s32.totalorder %s39, 0
      %p417 = por %p415, %p416
      %p418 = scmp.ne.s32.totalorder %s410, %s412
      %p419 = scmp.eq.s32.totalorder %s44, 3
      %p420 = por %p418, %p419
      %p421 = scmp.ne.s32.totalorder %s412, %s413
      %p422 = scmp.eq.s32.totalorder %s44, 0
      %p423 = por %p421, %p422
      %p424 = scmp.ne.s32.totalorder %s412, %s413
      %p425 = scmp.eq.s32.totalorder %s45, 3
      %p426 = por %p424, %p425
      %p428 = scmp.ne.s32.totalorder %s413, %s427
      %p429 = scmp.eq.s32.totalorder %s45, 0
      %p430 = por %p428, %p429
      %s431 = ssub.s32 %s46, %s58
      %s432 = ssub.s32 %s47, %s54
      %s433 = sor.u32 %s431, %s432
      %p434 = scmp.eq.s32.totalorder %s433, 0
      %s436 = sadd.s32 %s435, 1
      %s437 = scalar_select %p434, %s435, %s436
      %p440 = pneg %p434
      %p441 = scmp.eq.s32.totalorder %s39, 3
      %p442 = por %p440, %p441
      %p443 = scmp.ne.s32.totalorder %s435, %s438
      %p444 = scmp.eq.s32.totalorder %s39, 0
      %p445 = por %p443, %p444
      %p446 = scmp.ne.s32.totalorder %s435, %s438
      %p447 = scmp.eq.s32.totalorder %s44, 3
      %p448 = por %p446, %p447
      %p449 = scmp.ne.s32.totalorder %s438, %s439
      %p450 = scmp.eq.s32.totalorder %s44, 0
      %p451 = por %p449, %p450
      %p452 = scmp.ne.s32.totalorder %s438, %s439
      %p453 = scmp.eq.s32.totalorder %s45, 3
      %p454 = por %p452, %p453
      %p456 = scmp.ne.s32.totalorder %s439, %s455
      %p457 = scmp.eq.s32.totalorder %s45, 0
      %p458 = por %p456, %p457
      %p459 = scmp.le.s32.totalorder 1, %s39
      %p460 = scmp.lt.s32.totalorder %s39, 5
      %p461 = pnand %p459, %p460
      %p462 = pneg %p461
      // Predicated region
      $region9: #{tpu_custom_call.1} parent=5 // pred_check
        _
      $region10: #{tpu_custom_call.1} parent=5 // pred_check_branch
        %464 = sbr.rel (%p461) target = $region12
      $region11: #{tpu_custom_call.1} parent=5 // pred_region
        %s465 = ssub.s32 %s39, 1
        // Predicated region
        $region13: #{tpu_custom_call.1} parent=11 // pred_check
          %p466 = pneg %p150
        $region14: #{tpu_custom_call.1} parent=11 // pred_check_branch
          %468 = sbr.rel (%p466) target = $region16
        $region15: #{tpu_custom_call.1} parent=11 // pred_region
          %s470 = ssub.s32 256, 256
          %471 = vsyncadd [#allocation11], %s470
          %s472 = sshll.u32 [#allocation10], 4
          %s473 = int_to_ptr.vmem [resolvable:$true] %s472
          %478 = dma.hbm_to_vmem [thread:$0]  %s3, 256, %s473, [#allocation11], 64, 64, 4
        $region16: #{tpu_custom_call.1} parent=11 // pred_fallthru
          _
        // Predicated region
        $region17: #{tpu_custom_call.1} parent=11 // pred_check
          %p479 = pneg %p171
        $region18: #{tpu_custom_call.1} parent=11 // pred_check_branch
          %481 = sbr.rel (%p479) target = $region20
        $region19: #{tpu_custom_call.1} parent=11 // pred_region
          %s483 = ssub.s32 16, 16
          %484 = vsyncadd [#allocation11], %s483
          %s486 = sshll.u32 [#allocation12], 4
          %s487 = int_to_ptr.vmem [resolvable:$true] %s486
          %489 = dma.hbm_to_vmem [thread:$0]  %s4, 16, %s487, [#allocation11]
        $region20: #{tpu_custom_call.1} parent=11 // pred_fallthru
          _
        // Predicated region
        $region21: #{tpu_custom_call.1} parent=11 // pred_check
          %p490 = pneg %p192
        $region22: #{tpu_custom_call.1} parent=11 // pred_check_branch
          %492 = sbr.rel (%p490) target = $region24
        $region23: #{tpu_custom_call.1} parent=11 // pred_region
          %s494 = ssub.s32 256, 256
          %495 = vsyncadd [#allocation14], %s494
          %s496 = sshll.u32 [#allocation13], 4
          %s497 = int_to_ptr.vmem [resolvable:$true] %s496
          %502 = dma.hbm_to_vmem [thread:$0]  %s5, 256, %s497, [#allocation14], 64, 64, 4
        $region24: #{tpu_custom_call.1} parent=11 // pred_fallthru
          _
        // Predicated region
        $region25: #{tpu_custom_call.1} parent=11 // pred_check
          %p503 = pneg %p213
        $region26: #{tpu_custom_call.1} parent=11 // pred_check_branch
          %505 = sbr.rel (%p503) target = $region28
        $region27: #{tpu_custom_call.1} parent=11 // pred_region
          %s507 = ssub.s32 16, 16
          %508 = vsyncadd [#allocation14], %s507
          %s510 = sshll.u32 [#allocation15], 4
          %s511 = int_to_ptr.vmem [resolvable:$true] %s510
          %513 = dma.hbm_to_vmem [thread:$0]  %s6, 16, %s511, [#allocation14]
        $region28: #{tpu_custom_call.1} parent=11 // pred_fallthru
          _
        // Predicated region
        $region29: #{tpu_custom_call.1} parent=11 // pred_check
          %p514 = pneg %p234
        $region30: #{tpu_custom_call.1} parent=11 // pred_check_branch
          %516 = sbr.rel (%p514) target = $region32
        $region31: #{tpu_custom_call.1} parent=11 // pred_region
          %s518 = ssub.s32 256, 256
          %519 = vsyncadd [#allocation17], %s518
          %s520 = sshll.u32 [#allocation16], 4
          %s521 = int_to_ptr.vmem [resolvable:$true] %s520
          %526 = dma.hbm_to_vmem [thread:$0]  %s7, 256, %s521, [#allocation17], 64, 64, 4
        $region32: #{tpu_custom_call.1} parent=11 // pred_fallthru
          _
        // Predicated region
        $region33: #{tpu_custom_call.1} parent=11 // pred_check
          %p527 = pneg %p255
        $region34: #{tpu_custom_call.1} parent=11 // pred_check_branch
          %529 = sbr.rel (%p527) target = $region36
        $region35: #{tpu_custom_call.1} parent=11 // pred_region
          %s531 = ssub.s32 16, 16
          %532 = vsyncadd [#allocation17], %s531
          %s534 = sshll.u32 [#allocation18], 4
          %s535 = int_to_ptr.vmem [resolvable:$true] %s534
          %537 = dma.hbm_to_vmem [thread:$0]  %s8, 16, %s535, [#allocation17]
        $region36: #{tpu_custom_call.1} parent=11 // pred_fallthru
          _
        // Predicated region
        $region37: #{tpu_custom_call.1} parent=11 // pred_check
          %p538 = pneg %p276
        $region38: #{tpu_custom_call.1} parent=11 // pred_check_branch
          %540 = sbr.rel (%p538) target = $region40
        $region39: #{tpu_custom_call.1} parent=11 // pred_region
          %s542 = ssub.s32 256, 256
          %543 = vsyncadd [#allocation20], %s542
          %s544 = sshll.u32 [#allocation19], 4
          %s545 = int_to_ptr.vmem [resolvable:$true] %s544
          %550 = dma.hbm_to_vmem [thread:$0]  %s9, 256, %s545, [#allocation20], 64, 64, 4
        $region40: #{tpu_custom_call.1} parent=11 // pred_fallthru
          _
        // Predicated region
        $region41: #{tpu_custom_call.1} parent=11 // pred_check
          %p551 = pneg %p297
        $region42: #{tpu_custom_call.1} parent=11 // pred_check_branch
          %553 = sbr.rel (%p551) target = $region44
        $region43: #{tpu_custom_call.1} parent=11 // pred_region
          %s555 = ssub.s32 16, 16
          %556 = vsyncadd [#allocation20], %s555
          %s558 = sshll.u32 [#allocation21], 4
          %s559 = int_to_ptr.vmem [resolvable:$true] %s558
          %561 = dma.hbm_to_vmem [thread:$0]  %s10, 16, %s559, [#allocation20]
        $region44: #{tpu_custom_call.1} parent=11 // pred_fallthru
          _
        // Predicated region
        $region45: #{tpu_custom_call.1} parent=11 // pred_check
          %p562 = pneg %p318
        $region46: #{tpu_custom_call.1} parent=11 // pred_check_branch
          %564 = sbr.rel (%p562) target = $region48
        $region47: #{tpu_custom_call.1} parent=11 // pred_region
          %s566 = ssub.s32 16, 16
          %567 = vsyncadd [#allocation23], %s566
          %s569 = sshll.u32 [#allocation22], 4
          %s570 = int_to_ptr.vmem [resolvable:$true] %s569
          %572 = dma.hbm_to_vmem [thread:$0]  %s11, 16, %s570, [#allocation23]
        $region48: #{tpu_custom_call.1} parent=11 // pred_fallthru
          _
        // Predicated region
        $region49: #{tpu_custom_call.1} parent=11 // pred_check
          %p573 = pneg %p339
        $region50: #{tpu_custom_call.1} parent=11 // pred_check_branch
          %575 = sbr.rel (%p573) target = $region52
        $region51: #{tpu_custom_call.1} parent=11 // pred_region
          %s577 = ssub.s32 16, 16
          %578 = vsyncadd [#allocation23], %s577
          %s580 = sshll.u32 [#allocation24], 4
          %s581 = int_to_ptr.vmem [resolvable:$true] %s580
          %583 = dma.hbm_to_vmem [thread:$0]  %s12, 16, %s581, [#allocation23]
        $region52: #{tpu_custom_call.1} parent=11 // pred_fallthru
          _
        // Predicated region
        $region53: #{tpu_custom_call.1} parent=11 // pred_check
          %p584 = pneg %p360
        $region54: #{tpu_custom_call.1} parent=11 // pred_check_branch
          %586 = sbr.rel (%p584) target = $region56
        $region55: #{tpu_custom_call.1} parent=11 // pred_region
          %s588 = ssub.s32 256, 256
          %589 = vsyncadd [#allocation26], %s588
          %s590 = sshll.u32 [#allocation25], 4
          %s591 = int_to_ptr.vmem [resolvable:$true] %s590
          %596 = dma.hbm_to_vmem [thread:$0]  %s13, 256, %s591, [#allocation26], 64, 64, 4
        $region56: #{tpu_custom_call.1} parent=11 // pred_fallthru
          _
        // Predicated region
        $region57: #{tpu_custom_call.1} parent=11 // pred_check
          %p597 = pneg %p381
        $region58: #{tpu_custom_call.1} parent=11 // pred_check_branch
          %599 = sbr.rel (%p597) target = $region60
        $region59: #{tpu_custom_call.1} parent=11 // pred_region
          %s601 = ssub.s32 16, 16
          %602 = vsyncadd [#allocation26], %s601
          %s604 = sshll.u32 [#allocation27], 4
          %s605 = int_to_ptr.vmem [resolvable:$true] %s604
          %607 = dma.hbm_to_vmem [thread:$0]  %s14, 16, %s605, [#allocation26]
        $region60: #{tpu_custom_call.1} parent=11 // pred_fallthru
          _
        // Predicated region
        $region61: #{tpu_custom_call.1} parent=11 // pred_check
          %p608 = pneg %p402
        $region62: #{tpu_custom_call.1} parent=11 // pred_check_branch
          %610 = sbr.rel (%p608) target = $region64
        $region63: #{tpu_custom_call.1} parent=11 // pred_region
          %s612 = ssub.s32 1024, 1024
          %613 = vsyncadd [#allocation29], %s612
          %s614 = sshll.u32 [#allocation28], 4
          %s615 = int_to_ptr.vmem [resolvable:$true] %s614
          %620 = dma.hbm_to_vmem [thread:$0]  %s15, 1024, %s615, [#allocation29], 64, 64, 4
        $region64: #{tpu_custom_call.1} parent=11 // pred_fallthru
          _
        // Predicated region
        $region65: #{tpu_custom_call.1} parent=11 // pred_check
          %p621 = pneg %p423
        $region66: #{tpu_custom_call.1} parent=11 // pred_check_branch
          %623 = sbr.rel (%p621) target = $region68
        $region67: #{tpu_custom_call.1} parent=11 // pred_region
          %s625 = ssub.s32 16, 16
          %626 = vsyncadd [#allocation29], %s625
          %s628 = sshll.u32 [#allocation30], 4
          %s629 = int_to_ptr.vmem [resolvable:$true] %s628
          %631 = dma.hbm_to_vmem [thread:$0]  %s16, 16, %s629, [#allocation29]
        $region68: #{tpu_custom_call.1} parent=11 // pred_fallthru
          _
      $region12: #{tpu_custom_call.1} parent=5 // pred_fallthru
        _
      %p632 = scmp.lt.s32.totalorder %s39, 4
      // Predicated region
      $region69: #{tpu_custom_call.1} parent=5 // pred_check
        %p633 = pneg %p632
      $region70: #{tpu_custom_call.1} parent=5 // pred_check_branch
        %635 = sbr.rel (%p633) target = $region72
      $region71: #{tpu_custom_call.1} parent=5 // pred_region
        // Predicated region
        $region73: #{tpu_custom_call.1} parent=71 // pred_check
          %p636 = pneg %p71
        $region74: #{tpu_custom_call.1} parent=71 // pred_check_branch
          %638 = sbr.rel (%p636) target = $region76
        $region75: #{tpu_custom_call.1} parent=71 // pred_region
          %s639 = sand.u32 %s61, 1
          %s640 = scalar_lea.sflag [#allocation5], %s639
          %s641 = sand.u32 %s61, 1
          %s642 = smul.addr %s641, 16
          %s643 = scalar_lea.vmem [#allocation4], %s642
          %s645 = ssub.s32 256, 256
          %646 = vsyncadd %s640, %s645
          %s647 = smul.addr %s46, 2
          %s648 = smul.addr %s647, 128
          %s649 = scalar_lea.hbm %s0, %s648
          %s650 = sshll.u32 %s643, 4
          %s651 = int_to_ptr.vmem [resolvable:$true] %s650
          %656 = dma.hbm_to_vmem [thread:$0]  %s649, 256, %s651, %s640, 128, 128, 8
        $region76: #{tpu_custom_call.1} parent=71 // pred_fallthru
          _
        // Predicated region
        $region77: #{tpu_custom_call.1} parent=71 // pred_check
          %p657 = pneg %p97
        $region78: #{tpu_custom_call.1} parent=71 // pred_check_branch
          %659 = sbr.rel (%p657) target = $region80
        $region79: #{tpu_custom_call.1} parent=71 // pred_region
          %s660 = sand.u32 %s39, 1
          %s661 = scalar_lea.sflag [#allocation8], %s660
          %s662 = sand.u32 %s87, 1
          %s663 = scalar_lea.vmem [#allocation7], %s662
          %s665 = ssub.s32 16, 16
          %666 = vsyncadd %s661, %s665
          %s667 = smul.addr %s46, 16
          %s668 = scalar_lea.hbm %s1, %s667
          %s670 = sshll.u32 %s663, 4
          %s671 = int_to_ptr.vmem [resolvable:$true] %s670
          %673 = dma.hbm_to_vmem [thread:$0]  %s668, 16, %s671, %s661
        $region80: #{tpu_custom_call.1} parent=71 // pred_fallthru
          _
        // Predicated region
        $region81: #{tpu_custom_call.1} parent=71 // pred_check
          %p674 = pneg %p123
        $region82: #{tpu_custom_call.1} parent=71 // pred_check_branch
          %676 = sbr.rel (%p674) target = $region84
        $region83: #{tpu_custom_call.1} parent=71 // pred_region
          %s677 = sand.u32 %s39, 1
          %s678 = scalar_lea.sflag [#allocation8], %s677
          %s679 = sand.u32 %s113, 1
          %s680 = scalar_lea.vmem [#allocation9], %s679
          %s682 = ssub.s32 16, 16
          %683 = vsyncadd %s678, %s682
          %s684 = smul.addr %s46, 16
          %s685 = scalar_lea.hbm %s2, %s684
          %s687 = sshll.u32 %s680, 4
          %s688 = int_to_ptr.vmem [resolvable:$true] %s687
          %690 = dma.hbm_to_vmem [thread:$0]  %s685, 16, %s688, %s678
        $region84: #{tpu_custom_call.1} parent=71 // pred_fallthru
          _
      $region72: #{tpu_custom_call.1} parent=5 // pred_fallthru
        _
      %p691 = scmp.le.s32.totalorder 1, %s39
      %p692 = scmp.lt.s32.totalorder %s39, 5
      %p693 = pnand %p691, %p692
      %p694 = pneg %p693
      // Predicated region
      $region85: #{tpu_custom_call.1} parent=5 // pred_check
        _
      $region86: #{tpu_custom_call.1} parent=5 // pred_check_branch
        %696 = sbr.rel (%p693) target = $region88
      $region87: #{tpu_custom_call.1} parent=5 // pred_region
        %s697 = ssub.s32 %s39, 1
        %s698 = sand.u32 %s64, 1
        %s699 = scalar_lea.sflag [#allocation5], %s698
        %s700 = sand.u32 %s64, 1
        %s701 = smul.addr %s700, 16
        %s702 = scalar_lea.vmem [#allocation4], %s701
        // Predicated region
        $region89: #{tpu_custom_call.1} parent=87 // pred_check
          %p703 = pneg %p77
        $region90: #{tpu_custom_call.1} parent=87 // pred_check_branch
          %705 = sbr.rel (%p703) target = $region92
        $region91: #{tpu_custom_call.1} parent=87 // pred_region
          %706 = dma.done %s699, 256
        $region92: #{tpu_custom_call.1} parent=87 // pred_fallthru
          _
        %s707 = sand.u32 %s44, 1
        %s708 = scalar_lea.sflag [#allocation8], %s707
        %s709 = sand.u32 %s90, 1
        %s710 = scalar_lea.vmem [#allocation7], %s709
        // Predicated region
        $region93: #{tpu_custom_call.1} parent=87 // pred_check
          %p711 = pneg %p103
        $region94: #{tpu_custom_call.1} parent=87 // pred_check_branch
          %713 = sbr.rel (%p711) target = $region96
        $region95: #{tpu_custom_call.1} parent=87 // pred_region
          %714 = dma.done %s708, 16
        $region96: #{tpu_custom_call.1} parent=87 // pred_fallthru
          _
        %s715 = sand.u32 %s44, 1
        %s716 = scalar_lea.sflag [#allocation8], %s715
        %s717 = sand.u32 %s116, 1
        %s718 = scalar_lea.vmem [#allocation9], %s717
        // Predicated region
        $region97: #{tpu_custom_call.1} parent=87 // pred_check
          %p719 = pneg %p129
        $region98: #{tpu_custom_call.1} parent=87 // pred_check_branch
          %721 = sbr.rel (%p719) target = $region100
        $region99: #{tpu_custom_call.1} parent=87 // pred_region
          %722 = dma.done %s716, 16
        $region100: #{tpu_custom_call.1} parent=87 // pred_fallthru
          _
        // Predicated region
        $region101: #{tpu_custom_call.1} parent=87 // pred_check
          %p723 = pneg %p150
        $region102: #{tpu_custom_call.1} parent=87 // pred_check_branch
          %725 = sbr.rel (%p723) target = $region104
        $region103: #{tpu_custom_call.1} parent=87 // pred_region
          %726 = dma.done [#allocation11], 256
        $region104: #{tpu_custom_call.1} parent=87 // pred_fallthru
          _
        // Predicated region
        $region105: #{tpu_custom_call.1} parent=87 // pred_check
          %p727 = pneg %p171
        $region106: #{tpu_custom_call.1} parent=87 // pred_check_branch
          %729 = sbr.rel (%p727) target = $region108
        $region107: #{tpu_custom_call.1} parent=87 // pred_region
          %730 = dma.done [#allocation11], 16
        $region108: #{tpu_custom_call.1} parent=87 // pred_fallthru
          _
        // Predicated region
        $region109: #{tpu_custom_call.1} parent=87 // pred_check
          %p731 = pneg %p192
        $region110: #{tpu_custom_call.1} parent=87 // pred_check_branch
          %733 = sbr.rel (%p731) target = $region112
        $region111: #{tpu_custom_call.1} parent=87 // pred_region
          %734 = dma.done [#allocation14], 256
        $region112: #{tpu_custom_call.1} parent=87 // pred_fallthru
          _
        // Predicated region
        $region113: #{tpu_custom_call.1} parent=87 // pred_check
          %p735 = pneg %p213
        $region114: #{tpu_custom_call.1} parent=87 // pred_check_branch
          %737 = sbr.rel (%p735) target = $region116
        $region115: #{tpu_custom_call.1} parent=87 // pred_region
          %738 = dma.done [#allocation14], 16
        $region116: #{tpu_custom_call.1} parent=87 // pred_fallthru
          _
        // Predicated region
        $region117: #{tpu_custom_call.1} parent=87 // pred_check
          %p739 = pneg %p234
        $region118: #{tpu_custom_call.1} parent=87 // pred_check_branch
          %741 = sbr.rel (%p739) target = $region120
        $region119: #{tpu_custom_call.1} parent=87 // pred_region
          %742 = dma.done [#allocation17], 256
        $region120: #{tpu_custom_call.1} parent=87 // pred_fallthru
          _
        // Predicated region
        $region121: #{tpu_custom_call.1} parent=87 // pred_check
          %p743 = pneg %p255
        $region122: #{tpu_custom_call.1} parent=87 // pred_check_branch
          %745 = sbr.rel (%p743) target = $region124
        $region123: #{tpu_custom_call.1} parent=87 // pred_region
          %746 = dma.done [#allocation17], 16
        $region124: #{tpu_custom_call.1} parent=87 // pred_fallthru
          _
        // Predicated region
        $region125: #{tpu_custom_call.1} parent=87 // pred_check
          %p747 = pneg %p276
        $region126: #{tpu_custom_call.1} parent=87 // pred_check_branch
          %749 = sbr.rel (%p747) target = $region128
        $region127: #{tpu_custom_call.1} parent=87 // pred_region
          %750 = dma.done [#allocation20], 256
        $region128: #{tpu_custom_call.1} parent=87 // pred_fallthru
          _
        // Predicated region
        $region129: #{tpu_custom_call.1} parent=87 // pred_check
          %p751 = pneg %p297
        $region130: #{tpu_custom_call.1} parent=87 // pred_check_branch
          %753 = sbr.rel (%p751) target = $region132
        $region131: #{tpu_custom_call.1} parent=87 // pred_region
          %754 = dma.done [#allocation20], 16
        $region132: #{tpu_custom_call.1} parent=87 // pred_fallthru
          _
        // Predicated region
        $region133: #{tpu_custom_call.1} parent=87 // pred_check
          %p755 = pneg %p318
        $region134: #{tpu_custom_call.1} parent=87 // pred_check_branch
          %757 = sbr.rel (%p755) target = $region136
        $region135: #{tpu_custom_call.1} parent=87 // pred_region
          %758 = dma.done [#allocation23], 16
        $region136: #{tpu_custom_call.1} parent=87 // pred_fallthru
          _
        // Predicated region
        $region137: #{tpu_custom_call.1} parent=87 // pred_check
          %p759 = pneg %p339
        $region138: #{tpu_custom_call.1} parent=87 // pred_check_branch
          %761 = sbr.rel (%p759) target = $region140
        $region139: #{tpu_custom_call.1} parent=87 // pred_region
          %762 = dma.done [#allocation23], 16
        $region140: #{tpu_custom_call.1} parent=87 // pred_fallthru
          _
        // Predicated region
        $region141: #{tpu_custom_call.1} parent=87 // pred_check
          %p763 = pneg %p360
        $region142: #{tpu_custom_call.1} parent=87 // pred_check_branch
          %765 = sbr.rel (%p763) target = $region144
        $region143: #{tpu_custom_call.1} parent=87 // pred_region
          %766 = dma.done [#allocation26], 256
        $region144: #{tpu_custom_call.1} parent=87 // pred_fallthru
          _
        // Predicated region
        $region145: #{tpu_custom_call.1} parent=87 // pred_check
          %p767 = pneg %p381
        $region146: #{tpu_custom_call.1} parent=87 // pred_check_branch
          %769 = sbr.rel (%p767) target = $region148
        $region147: #{tpu_custom_call.1} parent=87 // pred_region
          %770 = dma.done [#allocation26], 16
        $region148: #{tpu_custom_call.1} parent=87 // pred_fallthru
          _
        // Predicated region
        $region149: #{tpu_custom_call.1} parent=87 // pred_check
          %p771 = pneg %p402
        $region150: #{tpu_custom_call.1} parent=87 // pred_check_branch
          %773 = sbr.rel (%p771) target = $region152
        $region151: #{tpu_custom_call.1} parent=87 // pred_region
          %774 = dma.done [#allocation29], 1024
        $region152: #{tpu_custom_call.1} parent=87 // pred_fallthru
          _
        // Predicated region
        $region153: #{tpu_custom_call.1} parent=87 // pred_check
          %p775 = pneg %p423
        $region154: #{tpu_custom_call.1} parent=87 // pred_check_branch
          %777 = sbr.rel (%p775) target = $region156
        $region155: #{tpu_custom_call.1} parent=87 // pred_region
          %778 = dma.done [#allocation29], 16
        $region156: #{tpu_custom_call.1} parent=87 // pred_fallthru
          _
        %s779 = sand.u32 %s64, 1
        %s780 = scalar_lea.sflag [#allocation5], %s779
        %s781 = sand.u32 %s64, 1
        %s782 = smul.addr %s781, 16
        %s783 = scalar_lea.vmem [#allocation4], %s782
        %p784 = pneg %p77
        %p785 = pneg %p74
        %s786 = sand.u32 %s44, 1
        %s787 = scalar_lea.sflag [#allocation8], %s786
        %s788 = sand.u32 %s90, 1
        %s789 = scalar_lea.vmem [#allocation7], %s788
        %p790 = pneg %p103
        %p791 = pneg %p100
        %s792 = sand.u32 %s44, 1
        %s793 = scalar_lea.sflag [#allocation8], %s792
        %s794 = sand.u32 %s116, 1
        %s795 = scalar_lea.vmem [#allocation9], %s794
        %p796 = pneg %p129
        %p797 = pneg %p126
        %p798 = pneg %p150
        %p799 = pneg %p147
        %p800 = pneg %p171
        %p801 = pneg %p168
        %p802 = pneg %p192
        %p803 = pneg %p189
        %p804 = pneg %p213
        %p805 = pneg %p210
        %p806 = pneg %p234
        %p807 = pneg %p231
        %p808 = pneg %p255
        %p809 = pneg %p252
        %p810 = pneg %p276
        %p811 = pneg %p273
        %p812 = pneg %p297
        %p813 = pneg %p294
        %p814 = pneg %p318
        %p815 = pneg %p315
        %p816 = pneg %p339
        %p817 = pneg %p336
        %p818 = pneg %p360
        %p819 = pneg %p357
        %p820 = pneg %p381
        %p821 = pneg %p378
        %p822 = pneg %p402
        %p823 = pneg %p399
        %p824 = pneg %p423
        %p825 = pneg %p420
        %p826 = pneg %p451
        %p827 = pneg %p448
        %s828 = sand.u32 %s438, 1
        %s829 = scalar_lea.sflag [#allocation6], %s828
        %s830 = sand.u32 %s438, 1
        %s831 = smul.addr %s830, 8
        %s832 = scalar_lea.vmem [#allocation31], %s831
        %v834 = vld [vmem:[%s710] sm:$0x1]
        %v835 = vld [vmem:[%s718] sm:$0x1]
        %p836 = scmp.eq.s32.totalorder %s49, 0
        // Predicated region
        $region157: #{tpu_custom_call.1} parent=87 // pred_check
          %p837 = pneg %p836
        $region158: #{tpu_custom_call.1} parent=87 // pred_check_branch
          %839 = sbr.rel (%p837) target = $region160
        $region159: #{tpu_custom_call.1} parent=87 // pred_region
          %v840 = vld [vmem:[%s702] sm:$0xff]
          %v841 = vld [vmem:[%s702 + $0x8] sm:$0xff]
          %vm842 = vcmask 261120
          %v843 = vsel %vm842, %v840, 0.0
          %844 = vadd.xlane.f32.xlu0 %v843
          %v845 = vpop.xlane.xlu0 %844
          %v846 = vsel %vm842, %v841, 0.0
          %847 = vadd.xlane.f32.xlu0 %v846
          %v848 = vpop.xlane.xlu0 %847
          %v849 = vrcp.pop 32.0
          %v850 = vmul.f32 %v845, %v849
          %v851 = vmul.f32 %v848, %v849
          %v852 = vsub.f32 %v840, %v850
          %v853 = vsub.f32 %v841, %v851
          %v854 = vmul.f32 %v852, %v852
          %v855 = vmul.f32 %v853, %v853
          %v856 = vsel %vm842, %v854, 0.0
          %857 = vadd.xlane.f32.xlu0 %v856
          %v858 = vpop.xlane.xlu0 %857
          %v859 = vsel %vm842, %v855, 0.0
          %860 = vadd.xlane.f32.xlu0 %v859
          %v861 = vpop.xlane.xlu0 %860
          %v862 = vmul.f32 %v858, %v849
          %v863 = vmul.f32 %v861, %v849
          %v864 = vadd.f32 %v862, 1e-05
          %v865 = vadd.f32 %v863, 1e-05
          %v866 = vrsqrt.pop %v864
          %v867 = vrsqrt.pop %v865
          %v868 = vmul.f32 %v852, %v866
          %v869 = vmul.f32 %v853, %v867
          %v870 = vadd.f32 %v834, 1.0
          %v872 = vlaneseq
          %v873 = vshrl.u32 %v872, 7
          %v874 = vsub.s32 0, %v873
          %v875 = vrot.slane %v870, %v874
          %v877 = vmul.f32 %v868, %v875
          %v878 = vmul.f32 %v869, %v875
          %v880 = vlaneseq
          %v881 = vshrl.u32 %v880, 7
          %v882 = vsub.s32 0, %v881
          %v883 = vrot.slane %v835, %v882
          %v885 = vadd.f32 %v877, %v883
          %v886 = vadd.f32 %v878, %v883
          %v887 = vpack.c.bf16 %v886, %v885
          %v888 = vld [vmem:[#allocation13] sm:$0xf]
          %v889 = vld [vmem:[#allocation13 + $0x4] sm:$0xf]
          %v890 = vld [vmem:[#allocation13 + $0x8] sm:$0xf]
          %v891 = vld [vmem:[#allocation13 + $0xc] sm:$0xf]
          %v892 = vld [vmem:[#allocation15] sm:$0x1]
          %v894 = vlaneseq
          %v895 = vshrl.u32 %v894, 7
          %v896 = vsub.s32 0, %v895
          %v897 = vrot.slane %v892, %v896
          %v903 = vunpack.c.l.b16 %v888
          %v904 = vunpack.c.l.b16 %v889
          %v905 = vunpack.c.l.b16 %v890
          %v906 = vunpack.c.l.b16 %v891
          %v907 = vpack.c.b16 %v904, %v903
          %v908 = vpack.c.b16 %v906, %v905
          %v912 = vsel %vm842, %v887, 0
          %914 = vmatprep.subr.bf16.mxu0 0
          %915 = vmatpush1.bf16.msra.mxu0 %v907
          %916 = vmatprep.subr.bf16.mxu0 0
          %917 = vmatpush1.bf16.msra.mxu0 %v908
          %918 = vmatprep.subr.bf16.mxu0 0
          %919 = vmatpush1.bf16.msra.mxu0 0
          %920 = vmatprep.subr.bf16.mxu0 0
          %921 = vmatpush1.bf16.msra.mxu0 0
          %922 = vmatprep.subr.bf16.mxu0 0
          %923 = vmatpush1.bf16.msra.mxu0 0
          %924 = vmatprep.subr.bf16.mxu0 0
          %925 = vmatpush1.bf16.msra.mxu0 0
          %926 = vmatprep.subr.bf16.mxu0 0
          %927 = vmatpush1.bf16.msra.mxu0 0
          %928 = vmatprep.subr.bf16.mxu0 0
          %929 = vmatpush1.bf16.msra.mxu0 0
          %930 = vmatprep.subr.bf16.mxu0 0
          %931 = vmatpush1.bf16.msra.mxu0 0
          %932 = vmatprep.subr.bf16.mxu0 0
          %933 = vmatpush1.bf16.msra.mxu0 0
          %934 = vmatprep.subr.bf16.mxu0 0
          %935 = vmatpush1.bf16.msra.mxu0 0
          %936 = vmatprep.subr.bf16.mxu0 0
          %937 = vmatpush1.bf16.msra.mxu0 0
          %938 = vmatprep.subr.bf16.mxu0 0
          %939 = vmatpush1.bf16.msra.mxu0 0
          %940 = vmatprep.subr.bf16.mxu0 0
          %941 = vmatpush1.bf16.msra.mxu0 0
          %942 = vmatprep.subr.bf16.mxu0 0
          %943 = vmatpush1.bf16.msra.mxu0 0
          %944 = vmatprep.subr.bf16.mxu0 0
          %945 = vmatpush1.bf16.msra.mxu0 0
          %946 = vmatprep.mubr.bf16.mxu0 0
          %947 = vmatmul.mubr.bf16.gmra.mrb[0].mxu0 %v912
          %v948 = vpop.f32.mrb[0].mxu0
          %v949 = vadd.f32 %v897, %v948
          %v950 = vpop.f32.mrb[0].mxu0
          %v951 = vpop.f32.mrb[0].mxu0
          %v952 = vadd.f32 %v897, %v951
          %v953 = vpop.f32.mrb[0].mxu0
          %954 = vdwg.mxu0
          %v955 = vld [vmem:[#allocation16] sm:$0xf]
          %v956 = vld [vmem:[#allocation16 + $0x4] sm:$0xf]
          %v957 = vld [vmem:[#allocation16 + $0x8] sm:$0xf]
          %v958 = vld [vmem:[#allocation16 + $0xc] sm:$0xf]
          %v959 = vld [vmem:[#allocation18] sm:$0x1]
          %v961 = vlaneseq
          %v962 = vshrl.u32 %v961, 7
          %v963 = vsub.s32 0, %v962
          %v964 = vrot.slane %v959, %v963
          %v970 = vunpack.c.l.b16 %v955
          %v971 = vunpack.c.l.b16 %v956
          %v972 = vunpack.c.l.b16 %v957
          %v973 = vunpack.c.l.b16 %v958
          %v974 = vpack.c.b16 %v971, %v970
          %v975 = vpack.c.b16 %v973, %v972
          %978 = vmatprep.subr.bf16.mxu0 0
          %979 = vmatpush1.bf16.msra.mxu0 %v974
          %980 = vmatprep.subr.bf16.mxu0 0
          %981 = vmatpush1.bf16.msra.mxu0 %v975
          %982 = vmatprep.subr.bf16.mxu0 0
          %983 = vmatpush1.bf16.msra.mxu0 0
          %984 = vmatprep.subr.bf16.mxu0 0
          %985 = vmatpush1.bf16.msra.mxu0 0
          %986 = vmatprep.subr.bf16.mxu0 0
          %987 = vmatpush1.bf16.msra.mxu0 0
          %988 = vmatprep.subr.bf16.mxu0 0
          %989 = vmatpush1.bf16.msra.mxu0 0
          %990 = vmatprep.subr.bf16.mxu0 0
          %991 = vmatpush1.bf16.msra.mxu0 0
          %992 = vmatprep.subr.bf16.mxu0 0
          %993 = vmatpush1.bf16.msra.mxu0 0
          %994 = vmatprep.subr.bf16.mxu0 0
          %995 = vmatpush1.bf16.msra.mxu0 0
          %996 = vmatprep.subr.bf16.mxu0 0
          %997 = vmatpush1.bf16.msra.mxu0 0
          %998 = vmatprep.subr.bf16.mxu0 0
          %999 = vmatpush1.bf16.msra.mxu0 0
          %1000 = vmatprep.subr.bf16.mxu0 0
          %1001 = vmatpush1.bf16.msra.mxu0 0
          %1002 = vmatprep.subr.bf16.mxu0 0
          %1003 = vmatpush1.bf16.msra.mxu0 0
          %1004 = vmatprep.subr.bf16.mxu0 0
          %1005 = vmatpush1.bf16.msra.mxu0 0
          %1006 = vmatprep.subr.bf16.mxu0 0
          %1007 = vmatpush1.bf16.msra.mxu0 0
          %1008 = vmatprep.subr.bf16.mxu0 0
          %1009 = vmatpush1.bf16.msra.mxu0 0
          %1010 = vmatprep.mubr.bf16.mxu0 0
          %1011 = vmatmul.mubr.bf16.gmra.mrb[0].mxu0 %v912
          %v1012 = vpop.f32.mrb[0].mxu0
          %v1013 = vadd.f32 %v964, %v1012
          %v1014 = vpop.f32.mrb[0].mxu0
          %v1015 = vpop.f32.mrb[0].mxu0
          %v1016 = vadd.f32 %v964, %v1015
          %v1017 = vpop.f32.mrb[0].mxu0
          %1018 = vdwg.mxu0
          %1021 = vrot.lane.b32.xlu0 %v949, 120
          %v1022 = vpop.permute.xlu0 %1021
          %1023 = vrot.lane.b32.xlu0 %v952, 120
          %v1024 = vpop.permute.xlu0 %1023
          %1027 = vrot.lane.b32.xlu0 %v949, 112
          %v1028 = vpop.permute.xlu0 %1027
          %1029 = vrot.lane.b32.xlu0 %v952, 112
          %v1030 = vpop.permute.xlu0 %1029
          %1033 = vrot.lane.b32.xlu0 %v949, 104
          %v1034 = vpop.permute.xlu0 %1033
          %1035 = vrot.lane.b32.xlu0 %v952, 104
          %v1036 = vpop.permute.xlu0 %1035
          %v1039 = vcombine.low %v949, %v1028
          %v1040 = vcombine.high %v949, %v1028
          %v1042 = vunpack.c.l.s4 1983009808
          %v1043 = vunpack.c.0.s8 %v1042
          %v1044 = vlaneseq
          %v1045 = vshrl.u32 %v1044, 7
          %v1046 = vsub.s32 %v1043, %v1045
          %v1047 = vrot.slane %v1039, %v1046
          %v1049 = vunpack.c.l.s4 1983009808
          %v1050 = vunpack.c.0.s8 %v1049
          %v1051 = vlaneseq
          %v1052 = vshrl.u32 %v1051, 7
          %v1053 = vsub.s32 %v1050, %v1052
          %v1054 = vrot.slane %v1040, %v1053
          %v1055 = vcombine.low %v1022, %v1034
          %v1056 = vcombine.high %v1022, %v1034
          %v1058 = vunpack.c.l.s4 1983009808
          %v1059 = vunpack.c.0.s8 %v1058
          %v1060 = vlaneseq
          %v1061 = vshrl.u32 %v1060, 7
          %v1062 = vsub.s32 %v1059, %v1061
          %v1063 = vrot.slane %v1055, %v1062
          %v1065 = vunpack.c.l.s4 1983009808
          %v1066 = vunpack.c.0.s8 %v1065
          %v1067 = vlaneseq
          %v1068 = vshrl.u32 %v1067, 7
          %v1069 = vsub.s32 %v1066, %v1068
          %v1070 = vrot.slane %v1056, %v1069
          %v1071 = vcombine.low %v1047, %v1063
          %v1072 = vcombine.high %v1047, %v1063
          %v1074 = vunpack.c.l.s4 1934713408
          %v1075 = vunpack.c.0.s8 %v1074
          %v1076 = vlaneseq
          %v1077 = vshrl.u32 %v1076, 7
          %v1078 = vsub.s32 %v1075, %v1077
          %v1079 = vrot.slane %v1071, %v1078
          %v1081 = vunpack.c.l.s4 1934713408
          %v1082 = vunpack.c.0.s8 %v1081
          %v1083 = vlaneseq
          %v1084 = vshrl.u32 %v1083, 7
          %v1085 = vsub.s32 %v1082, %v1084
          %v1086 = vrot.slane %v1072, %v1085
          %v1087 = vcombine.low %v1054, %v1070
          %v1088 = vcombine.high %v1054, %v1070
          %v1090 = vunpack.c.l.s4 1934713408
          %v1091 = vunpack.c.0.s8 %v1090
          %v1092 = vlaneseq
          %v1093 = vshrl.u32 %v1092, 7
          %v1094 = vsub.s32 %v1091, %v1093
          %v1095 = vrot.slane %v1087, %v1094
          %v1097 = vunpack.c.l.s4 1934713408
          %v1098 = vunpack.c.0.s8 %v1097
          %v1099 = vlaneseq
          %v1100 = vshrl.u32 %v1099, 7
          %v1101 = vsub.s32 %v1098, %v1100
          %v1102 = vrot.slane %v1088, %v1101
          %v1103 = vcombine.high %v1079, 0.0
          %v1104 = vcombine.high %v1086, 0.0
          %v1105 = vcombine.high %v1095, 0.0
          %v1106 = vcombine.high %v1102, 0.0
          %v1107 = vcombine.low %v952, %v1030
          %v1108 = vcombine.high %v952, %v1030
          %v1110 = vunpack.c.l.s4 1983009808
          %v1111 = vunpack.c.0.s8 %v1110
          %v1112 = vlaneseq
          %v1113 = vshrl.u32 %v1112, 7
          %v1114 = vsub.s32 %v1111, %v1113
          %v1115 = vrot.slane %v1107, %v1114
          %v1117 = vunpack.c.l.s4 1983009808
          %v1118 = vunpack.c.0.s8 %v1117
          %v1119 = vlaneseq
          %v1120 = vshrl.u32 %v1119, 7
          %v1121 = vsub.s32 %v1118, %v1120
          %v1122 = vrot.slane %v1108, %v1121
          %v1123 = vcombine.low %v1024, %v1036
          %v1124 = vcombine.high %v1024, %v1036
          %v1126 = vunpack.c.l.s4 1983009808
          %v1127 = vunpack.c.0.s8 %v1126
          %v1128 = vlaneseq
          %v1129 = vshrl.u32 %v1128, 7
          %v1130 = vsub.s32 %v1127, %v1129
          %v1131 = vrot.slane %v1123, %v1130
          %v1133 = vunpack.c.l.s4 1983009808
          %v1134 = vunpack.c.0.s8 %v1133
          %v1135 = vlaneseq
          %v1136 = vshrl.u32 %v1135, 7
          %v1137 = vsub.s32 %v1134, %v1136
          %v1138 = vrot.slane %v1124, %v1137
          %v1139 = vcombine.low %v1115, %v1131
          %v1140 = vcombine.high %v1115, %v1131
          %v1142 = vunpack.c.l.s4 1934713408
          %v1143 = vunpack.c.0.s8 %v1142
          %v1144 = vlaneseq
          %v1145 = vshrl.u32 %v1144, 7
          %v1146 = vsub.s32 %v1143, %v1145
          %v1147 = vrot.slane %v1139, %v1146
          %v1149 = vunpack.c.l.s4 1934713408
          %v1150 = vunpack.c.0.s8 %v1149
          %v1151 = vlaneseq
          %v1152 = vshrl.u32 %v1151, 7
          %v1153 = vsub.s32 %v1150, %v1152
          %v1154 = vrot.slane %v1140, %v1153
          %v1155 = vcombine.low %v1122, %v1138
          %v1156 = vcombine.high %v1122, %v1138
          %v1158 = vunpack.c.l.s4 1934713408
          %v1159 = vunpack.c.0.s8 %v1158
          %v1160 = vlaneseq
          %v1161 = vshrl.u32 %v1160, 7
          %v1162 = vsub.s32 %v1159, %v1161
          %v1163 = vrot.slane %v1155, %v1162
          %v1165 = vunpack.c.l.s4 1934713408
          %v1166 = vunpack.c.0.s8 %v1165
          %v1167 = vlaneseq
          %v1168 = vshrl.u32 %v1167, 7
          %v1169 = vsub.s32 %v1166, %v1168
          %v1170 = vrot.slane %v1156, %v1169
          %v1171 = vcombine.high %v1147, 0.0
          %v1172 = vcombine.high %v1154, 0.0
          %v1173 = vcombine.high %v1163, 0.0
          %v1174 = vcombine.high %v1170, 0.0
          %v1175 = vcombine.low %v1079, %v1086
          %v1177 = vunpack.c.l.s4 1983009808
          %v1178 = vunpack.c.0.s8 %v1177
          %v1179 = vlaneseq
          %v1180 = vshrl.u32 %v1179, 7
          %v1181 = vsub.s32 %v1178, %v1180
          %v1182 = vrot.slane %v1175, %v1181
          %v1183 = vcombine.low %v1103, %v1104
          %v1185 = vunpack.c.l.s4 1983009808
          %v1186 = vunpack.c.0.s8 %v1185
          %v1187 = vlaneseq
          %v1188 = vshrl.u32 %v1187, 7
          %v1189 = vsub.s32 %v1186, %v1188
          %v1190 = vrot.slane %v1183, %v1189
          %v1191 = vcombine.low %v1095, %v1102
          %v1193 = vunpack.c.l.s4 1983009808
          %v1194 = vunpack.c.0.s8 %v1193
          %v1195 = vlaneseq
          %v1196 = vshrl.u32 %v1195, 7
          %v1197 = vsub.s32 %v1194, %v1196
          %v1198 = vrot.slane %v1191, %v1197
          %v1199 = vcombine.low %v1105, %v1106
          %v1201 = vunpack.c.l.s4 1983009808
          %v1202 = vunpack.c.0.s8 %v1201
          %v1203 = vlaneseq
          %v1204 = vshrl.u32 %v1203, 7
          %v1205 = vsub.s32 %v1202, %v1204
          %v1206 = vrot.slane %v1199, %v1205
          %v1207 = vcombine.low %v1182, %v1190
          %v1208 = vcombine.high %v1182, %v1190
          %v1210 = vunpack.c.l.s4 1934713408
          %v1211 = vunpack.c.0.s8 %v1210
          %v1212 = vlaneseq
          %v1213 = vshrl.u32 %v1212, 7
          %v1214 = vsub.s32 %v1211, %v1213
          %v1215 = vrot.slane %v1207, %v1214
          %v1217 = vunpack.c.l.s4 1934713408
          %v1218 = vunpack.c.0.s8 %v1217
          %v1219 = vlaneseq
          %v1220 = vshrl.u32 %v1219, 7
          %v1221 = vsub.s32 %v1218, %v1220
          %v1222 = vrot.slane %v1208, %v1221
          %v1223 = vcombine.low %v1198, %v1206
          %v1224 = vcombine.high %v1198, %v1206
          %v1226 = vunpack.c.l.s4 1934713408
          %v1227 = vunpack.c.0.s8 %v1226
          %v1228 = vlaneseq
          %v1229 = vshrl.u32 %v1228, 7
          %v1230 = vsub.s32 %v1227, %v1229
          %v1231 = vrot.slane %v1223, %v1230
          %v1233 = vunpack.c.l.s4 1934713408
          %v1234 = vunpack.c.0.s8 %v1233
          %v1235 = vlaneseq
          %v1236 = vshrl.u32 %v1235, 7
          %v1237 = vsub.s32 %v1234, %v1236
          %v1238 = vrot.slane %v1224, %v1237
          %v1239 = vcombine.low %v1215, %v1231
          %v1240 = vcombine.high %v1215, %v1231
          %v1241 = vcombine.low %v1222, %v1238
          %v1242 = vcombine.high %v1222, %v1238
          %v1243 = vcombine.low %v1147, %v1154
          %v1245 = vunpack.c.l.s4 1983009808
          %v1246 = vunpack.c.0.s8 %v1245
          %v1247 = vlaneseq
          %v1248 = vshrl.u32 %v1247, 7
          %v1249 = vsub.s32 %v1246, %v1248
          %v1250 = vrot.slane %v1243, %v1249
          %v1251 = vcombine.low %v1171, %v1172
          %v1253 = vunpack.c.l.s4 1983009808
          %v1254 = vunpack.c.0.s8 %v1253
          %v1255 = vlaneseq
          %v1256 = vshrl.u32 %v1255, 7
          %v1257 = vsub.s32 %v1254, %v1256
          %v1258 = vrot.slane %v1251, %v1257
          %v1259 = vcombine.low %v1163, %v1170
          %v1261 = vunpack.c.l.s4 1983009808
          %v1262 = vunpack.c.0.s8 %v1261
          %v1263 = vlaneseq
          %v1264 = vshrl.u32 %v1263, 7
          %v1265 = vsub.s32 %v1262, %v1264
          %v1266 = vrot.slane %v1259, %v1265
          %v1267 = vcombine.low %v1173, %v1174
          %v1269 = vunpack.c.l.s4 1983009808
          %v1270 = vunpack.c.0.s8 %v1269
          %v1271 = vlaneseq
          %v1272 = vshrl.u32 %v1271, 7
          %v1273 = vsub.s32 %v1270, %v1272
          %v1274 = vrot.slane %v1267, %v1273
          %v1275 = vcombine.low %v1250, %v1258
          %v1276 = vcombine.high %v1250, %v1258
          %v1278 = vunpack.c.l.s4 1934713408
          %v1279 = vunpack.c.0.s8 %v1278
          %v1280 = vlaneseq
          %v1281 = vshrl.u32 %v1280, 7
          %v1282 = vsub.s32 %v1279, %v1281
          %v1283 = vrot.slane %v1275, %v1282
          %v1285 = vunpack.c.l.s4 1934713408
          %v1286 = vunpack.c.0.s8 %v1285
          %v1287 = vlaneseq
          %v1288 = vshrl.u32 %v1287, 7
          %v1289 = vsub.s32 %v1286, %v1288
          %v1290 = vrot.slane %v1276, %v1289
          %v1291 = vcombine.low %v1266, %v1274
          %v1292 = vcombine.high %v1266, %v1274
          %v1294 = vunpack.c.l.s4 1934713408
          %v1295 = vunpack.c.0.s8 %v1294
          %v1296 = vlaneseq
          %v1297 = vshrl.u32 %v1296, 7
          %v1298 = vsub.s32 %v1295, %v1297
          %v1299 = vrot.slane %v1291, %v1298
          %v1301 = vunpack.c.l.s4 1934713408
          %v1302 = vunpack.c.0.s8 %v1301
          %v1303 = vlaneseq
          %v1304 = vshrl.u32 %v1303, 7
          %v1305 = vsub.s32 %v1302, %v1304
          %v1306 = vrot.slane %v1292, %v1305
          %v1307 = vcombine.low %v1283, %v1299
          %v1308 = vcombine.high %v1283, %v1299
          %v1309 = vcombine.low %v1290, %v1306
          %v1310 = vcombine.high %v1290, %v1306
          %v1311 = vpack.c.bf16 %v1307, %v1239
          %v1312 = vpack.c.bf16 %v1308, %v1240
          %v1313 = vpack.c.bf16 %v1309, %v1241
          %v1314 = vpack.c.bf16 %v1310, %v1242
          %vm1315 = vcmask 64512
          %1316 = vst.msk [vmem:[#allocation2] sm:$0xff] %vm1315, %v1311
          %1317 = vst.msk [vmem:[#allocation2 + $0x8] sm:$0xff] %vm1315, %v1312
          %1318 = vst.msk [vmem:[#allocation2 + $0x10] sm:$0xff] %vm1315, %v1313
          %1319 = vst.msk [vmem:[#allocation2 + $0x18] sm:$0xff] %vm1315, %v1314
          %1322 = vrot.lane.b32.xlu0 %v1013, 120
          %v1323 = vpop.permute.xlu0 %1322
          %1324 = vrot.lane.b32.xlu0 %v1016, 120
          %v1325 = vpop.permute.xlu0 %1324
          %1328 = vrot.lane.b32.xlu0 %v1013, 112
          %v1329 = vpop.permute.xlu0 %1328
          %1330 = vrot.lane.b32.xlu0 %v1016, 112
          %v1331 = vpop.permute.xlu0 %1330
          %1334 = vrot.lane.b32.xlu0 %v1013, 104
          %v1335 = vpop.permute.xlu0 %1334
          %1336 = vrot.lane.b32.xlu0 %v1016, 104
          %v1337 = vpop.permute.xlu0 %1336
          %v1340 = vcombine.low %v1013, %v1329
          %v1341 = vcombine.high %v1013, %v1329
          %v1343 = vunpack.c.l.s4 1983009808
          %v1344 = vunpack.c.0.s8 %v1343
          %v1345 = vlaneseq
          %v1346 = vshrl.u32 %v1345, 7
          %v1347 = vsub.s32 %v1344, %v1346
          %v1348 = vrot.slane %v1340, %v1347
          %v1350 = vunpack.c.l.s4 1983009808
          %v1351 = vunpack.c.0.s8 %v1350
          %v1352 = vlaneseq
          %v1353 = vshrl.u32 %v1352, 7
          %v1354 = vsub.s32 %v1351, %v1353
          %v1355 = vrot.slane %v1341, %v1354
          %v1356 = vcombine.low %v1323, %v1335
          %v1357 = vcombine.high %v1323, %v1335
          %v1359 = vunpack.c.l.s4 1983009808
          %v1360 = vunpack.c.0.s8 %v1359
          %v1361 = vlaneseq
          %v1362 = vshrl.u32 %v1361, 7
          %v1363 = vsub.s32 %v1360, %v1362
          %v1364 = vrot.slane %v1356, %v1363
          %v1366 = vunpack.c.l.s4 1983009808
          %v1367 = vunpack.c.0.s8 %v1366
          %v1368 = vlaneseq
          %v1369 = vshrl.u32 %v1368, 7
          %v1370 = vsub.s32 %v1367, %v1369
          %v1371 = vrot.slane %v1357, %v1370
          %v1372 = vcombine.low %v1348, %v1364
          %v1373 = vcombine.high %v1348, %v1364
          %v1375 = vunpack.c.l.s4 1934713408
          %v1376 = vunpack.c.0.s8 %v1375
          %v1377 = vlaneseq
          %v1378 = vshrl.u32 %v1377, 7
          %v1379 = vsub.s32 %v1376, %v1378
          %v1380 = vrot.slane %v1372, %v1379
          %v1382 = vunpack.c.l.s4 1934713408
          %v1383 = vunpack.c.0.s8 %v1382
          %v1384 = vlaneseq
          %v1385 = vshrl.u32 %v1384, 7
          %v1386 = vsub.s32 %v1383, %v1385
          %v1387 = vrot.slane %v1373, %v1386
          %v1388 = vcombine.low %v1355, %v1371
          %v1389 = vcombine.high %v1355, %v1371
          %v1391 = vunpack.c.l.s4 1934713408
          %v1392 = vunpack.c.0.s8 %v1391
          %v1393 = vlaneseq
          %v1394 = vshrl.u32 %v1393, 7
          %v1395 = vsub.s32 %v1392, %v1394
          %v1396 = vrot.slane %v1388, %v1395
          %v1398 = vunpack.c.l.s4 1934713408
          %v1399 = vunpack.c.0.s8 %v1398
          %v1400 = vlaneseq
          %v1401 = vshrl.u32 %v1400, 7
          %v1402 = vsub.s32 %v1399, %v1401
          %v1403 = vrot.slane %v1389, %v1402
          %v1404 = vcombine.high %v1380, 0.0
          %v1405 = vcombine.high %v1387, 0.0
          %v1406 = vcombine.high %v1396, 0.0
          %v1407 = vcombine.high %v1403, 0.0
          %v1408 = vcombine.low %v1016, %v1331
          %v1409 = vcombine.high %v1016, %v1331
          %v1411 = vunpack.c.l.s4 1983009808
          %v1412 = vunpack.c.0.s8 %v1411
          %v1413 = vlaneseq
          %v1414 = vshrl.u32 %v1413, 7
          %v1415 = vsub.s32 %v1412, %v1414
          %v1416 = vrot.slane %v1408, %v1415
          %v1418 = vunpack.c.l.s4 1983009808
          %v1419 = vunpack.c.0.s8 %v1418
          %v1420 = vlaneseq
          %v1421 = vshrl.u32 %v1420, 7
          %v1422 = vsub.s32 %v1419, %v1421
          %v1423 = vrot.slane %v1409, %v1422
          %v1424 = vcombine.low %v1325, %v1337
          %v1425 = vcombine.high %v1325, %v1337
          %v1427 = vunpack.c.l.s4 1983009808
          %v1428 = vunpack.c.0.s8 %v1427
          %v1429 = vlaneseq
          %v1430 = vshrl.u32 %v1429, 7
          %v1431 = vsub.s32 %v1428, %v1430
          %v1432 = vrot.slane %v1424, %v1431
          %v1434 = vunpack.c.l.s4 1983009808
          %v1435 = vunpack.c.0.s8 %v1434
          %v1436 = vlaneseq
          %v1437 = vshrl.u32 %v1436, 7
          %v1438 = vsub.s32 %v1435, %v1437
          %v1439 = vrot.slane %v1425, %v1438
          %v1440 = vcombine.low %v1416, %v1432
          %v1441 = vcombine.high %v1416, %v1432
          %v1443 = vunpack.c.l.s4 1934713408
          %v1444 = vunpack.c.0.s8 %v1443
          %v1445 = vlaneseq
          %v1446 = vshrl.u32 %v1445, 7
          %v1447 = vsub.s32 %v1444, %v1446
          %v1448 = vrot.slane %v1440, %v1447
          %v1450 = vunpack.c.l.s4 1934713408
          %v1451 = vunpack.c.0.s8 %v1450
          %v1452 = vlaneseq
          %v1453 = vshrl.u32 %v1452, 7
          %v1454 = vsub.s32 %v1451, %v1453
          %v1455 = vrot.slane %v1441, %v1454
          %v1456 = vcombine.low %v1423, %v1439
          %v1457 = vcombine.high %v1423, %v1439
          %v1459 = vunpack.c.l.s4 1934713408
          %v1460 = vunpack.c.0.s8 %v1459
          %v1461 = vlaneseq
          %v1462 = vshrl.u32 %v1461, 7
          %v1463 = vsub.s32 %v1460, %v1462
          %v1464 = vrot.slane %v1456, %v1463
          %v1466 = vunpack.c.l.s4 1934713408
          %v1467 = vunpack.c.0.s8 %v1466
          %v1468 = vlaneseq
          %v1469 = vshrl.u32 %v1468, 7
          %v1470 = vsub.s32 %v1467, %v1469
          %v1471 = vrot.slane %v1457, %v1470
          %v1472 = vcombine.high %v1448, 0.0
          %v1473 = vcombine.high %v1455, 0.0
          %v1474 = vcombine.high %v1464, 0.0
          %v1475 = vcombine.high %v1471, 0.0
          %v1476 = vcombine.low %v1380, %v1387
          %v1478 = vunpack.c.l.s4 1983009808
          %v1479 = vunpack.c.0.s8 %v1478
          %v1480 = vlaneseq
          %v1481 = vshrl.u32 %v1480, 7
          %v1482 = vsub.s32 %v1479, %v1481
          %v1483 = vrot.slane %v1476, %v1482
          %v1484 = vcombine.low %v1404, %v1405
          %v1486 = vunpack.c.l.s4 1983009808
          %v1487 = vunpack.c.0.s8 %v1486
          %v1488 = vlaneseq
          %v1489 = vshrl.u32 %v1488, 7
          %v1490 = vsub.s32 %v1487, %v1489
          %v1491 = vrot.slane %v1484, %v1490
          %v1492 = vcombine.low %v1396, %v1403
          %v1494 = vunpack.c.l.s4 1983009808
          %v1495 = vunpack.c.0.s8 %v1494
          %v1496 = vlaneseq
          %v1497 = vshrl.u32 %v1496, 7
          %v1498 = vsub.s32 %v1495, %v1497
          %v1499 = vrot.slane %v1492, %v1498
          %v1500 = vcombine.low %v1406, %v1407
          %v1502 = vunpack.c.l.s4 1983009808
          %v1503 = vunpack.c.0.s8 %v1502
          %v1504 = vlaneseq
          %v1505 = vshrl.u32 %v1504, 7
          %v1506 = vsub.s32 %v1503, %v1505
          %v1507 = vrot.slane %v1500, %v1506
          %v1508 = vcombine.low %v1483, %v1491
          %v1509 = vcombine.high %v1483, %v1491
          %v1511 = vunpack.c.l.s4 1934713408
          %v1512 = vunpack.c.0.s8 %v1511
          %v1513 = vlaneseq
          %v1514 = vshrl.u32 %v1513, 7
          %v1515 = vsub.s32 %v1512, %v1514
          %v1516 = vrot.slane %v1508, %v1515
          %v1518 = vunpack.c.l.s4 1934713408
          %v1519 = vunpack.c.0.s8 %v1518
          %v1520 = vlaneseq
          %v1521 = vshrl.u32 %v1520, 7
          %v1522 = vsub.s32 %v1519, %v1521
          %v1523 = vrot.slane %v1509, %v1522
          %v1524 = vcombine.low %v1499, %v1507
          %v1525 = vcombine.high %v1499, %v1507
          %v1527 = vunpack.c.l.s4 1934713408
          %v1528 = vunpack.c.0.s8 %v1527
          %v1529 = vlaneseq
          %v1530 = vshrl.u32 %v1529, 7
          %v1531 = vsub.s32 %v1528, %v1530
          %v1532 = vrot.slane %v1524, %v1531
          %v1534 = vunpack.c.l.s4 1934713408
          %v1535 = vunpack.c.0.s8 %v1534
          %v1536 = vlaneseq
          %v1537 = vshrl.u32 %v1536, 7
          %v1538 = vsub.s32 %v1535, %v1537
          %v1539 = vrot.slane %v1525, %v1538
          %v1540 = vcombine.low %v1516, %v1532
          %v1541 = vcombine.high %v1516, %v1532
          %v1542 = vcombine.low %v1523, %v1539
          %v1543 = vcombine.high %v1523, %v1539
          %v1544 = vcombine.low %v1448, %v1455
          %v1546 = vunpack.c.l.s4 1983009808
          %v1547 = vunpack.c.0.s8 %v1546
          %v1548 = vlaneseq
          %v1549 = vshrl.u32 %v1548, 7
          %v1550 = vsub.s32 %v1547, %v1549
          %v1551 = vrot.slane %v1544, %v1550
          %v1552 = vcombine.low %v1472, %v1473
          %v1554 = vunpack.c.l.s4 1983009808
          %v1555 = vunpack.c.0.s8 %v1554
          %v1556 = vlaneseq
          %v1557 = vshrl.u32 %v1556, 7
          %v1558 = vsub.s32 %v1555, %v1557
          %v1559 = vrot.slane %v1552, %v1558
          %v1560 = vcombine.low %v1464, %v1471
          %v1562 = vunpack.c.l.s4 1983009808
          %v1563 = vunpack.c.0.s8 %v1562
          %v1564 = vlaneseq
          %v1565 = vshrl.u32 %v1564, 7
          %v1566 = vsub.s32 %v1563, %v1565
          %v1567 = vrot.slane %v1560, %v1566
          %v1568 = vcombine.low %v1474, %v1475
          %v1570 = vunpack.c.l.s4 1983009808
          %v1571 = vunpack.c.0.s8 %v1570
          %v1572 = vlaneseq
          %v1573 = vshrl.u32 %v1572, 7
          %v1574 = vsub.s32 %v1571, %v1573
          %v1575 = vrot.slane %v1568, %v1574
          %v1576 = vcombine.low %v1551, %v1559
          %v1577 = vcombine.high %v1551, %v1559
          %v1579 = vunpack.c.l.s4 1934713408
          %v1580 = vunpack.c.0.s8 %v1579
          %v1581 = vlaneseq
          %v1582 = vshrl.u32 %v1581, 7
          %v1583 = vsub.s32 %v1580, %v1582
          %v1584 = vrot.slane %v1576, %v1583
          %v1586 = vunpack.c.l.s4 1934713408
          %v1587 = vunpack.c.0.s8 %v1586
          %v1588 = vlaneseq
          %v1589 = vshrl.u32 %v1588, 7
          %v1590 = vsub.s32 %v1587, %v1589
          %v1591 = vrot.slane %v1577, %v1590
          %v1592 = vcombine.low %v1567, %v1575
          %v1593 = vcombine.high %v1567, %v1575
          %v1595 = vunpack.c.l.s4 1934713408
          %v1596 = vunpack.c.0.s8 %v1595
          %v1597 = vlaneseq
          %v1598 = vshrl.u32 %v1597, 7
          %v1599 = vsub.s32 %v1596, %v1598
          %v1600 = vrot.slane %v1592, %v1599
          %v1602 = vunpack.c.l.s4 1934713408
          %v1603 = vunpack.c.0.s8 %v1602
          %v1604 = vlaneseq
          %v1605 = vshrl.u32 %v1604, 7
          %v1606 = vsub.s32 %v1603, %v1605
          %v1607 = vrot.slane %v1593, %v1606
          %v1608 = vcombine.low %v1584, %v1600
          %v1609 = vcombine.high %v1584, %v1600
          %v1610 = vcombine.low %v1591, %v1607
          %v1611 = vcombine.high %v1591, %v1607
          %v1612 = vpack.c.bf16 %v1608, %v1540
          %v1613 = vpack.c.bf16 %v1609, %v1541
          %v1614 = vpack.c.bf16 %v1610, %v1542
          %v1615 = vpack.c.bf16 %v1611, %v1543
          %1616 = vst.msk [vmem:[#allocation3] sm:$0xff] %vm1315, %v1612
          %1617 = vst.msk [vmem:[#allocation3 + $0x8] sm:$0xff] %vm1315, %v1613
          %1618 = vst.msk [vmem:[#allocation3 + $0x10] sm:$0xff] %vm1315, %v1614
          %1619 = vst.msk [vmem:[#allocation3 + $0x18] sm:$0xff] %vm1315, %v1615
        $region160: #{tpu_custom_call.1} parent=87 // pred_fallthru
          _
        %s1620 = smul.u32 %s49, 8
        %s1621 = scalar_lea.vmem %s702, %s1620 [#allocation4]
        %v1622 = vld [vmem:[%s1621] sm:$0xff]
        %vm1623 = vcmask 261120
        %v1624 = vsel %vm1623, %v1622, 0.0
        %1625 = vadd.xlane.f32.xlu0 %v1624
        %v1626 = vpop.xlane.xlu0 %1625
        %v1627 = vrcp.pop 32.0
        %v1628 = vmul.f32 %v1626, %v1627
        %v1629 = vsub.f32 %v1622, %v1628
        %v1630 = vmul.f32 %v1629, %v1629
        %v1631 = vsel %vm1623, %v1630, 0.0
        %1632 = vadd.xlane.f32.xlu0 %v1631
        %v1633 = vpop.xlane.xlu0 %1632
        %v1634 = vmul.f32 %v1633, %v1627
        %v1635 = vadd.f32 %v1634, 1e-05
        %v1636 = vrsqrt.pop %v1635
        %v1637 = vmul.f32 %v1629, %v1636
        %v1638 = vadd.f32 %v834, 1.0
        %v1640 = vlaneseq
        %v1641 = vshrl.u32 %v1640, 7
        %v1642 = vsub.s32 0, %v1641
        %v1643 = vrot.slane %v1638, %v1642
        %v1645 = vmul.f32 %v1637, %v1643
        %v1647 = vlaneseq
        %v1648 = vshrl.u32 %v1647, 7
        %v1649 = vsub.s32 0, %v1648
        %v1650 = vrot.slane %v835, %v1649
        %v1652 = vadd.f32 %v1645, %v1650
        %v1653 = vpack.c.bf16 %v1652, %v1652
        %v1654 = vld [vmem:[#allocation10] sm:$0xf]
        %v1655 = vld [vmem:[#allocation10 + $0x4] sm:$0xf]
        %v1656 = vld [vmem:[#allocation10 + $0x8] sm:$0xf]
        %v1657 = vld [vmem:[#allocation10 + $0xc] sm:$0xf]
        %v1658 = vld [vmem:[#allocation12] sm:$0x1]
        %v1660 = vlaneseq
        %v1661 = vshrl.u32 %v1660, 7
        %v1662 = vsub.s32 0, %v1661
        %v1663 = vrot.slane %v1658, %v1662
        %v1669 = vunpack.c.l.b16 %v1654
        %v1670 = vunpack.c.l.b16 %v1655
        %v1671 = vunpack.c.l.b16 %v1656
        %v1672 = vunpack.c.l.b16 %v1657
        %v1673 = vpack.c.b16 %v1670, %v1669
        %v1674 = vpack.c.b16 %v1672, %v1671
        %v1678 = vsel %vm1623, %v1653, 0
        %1680 = vmatprep.subr.bf16.mxu0 0
        %1681 = vmatpush1.bf16.msra.mxu0 %v1673
        %1682 = vmatprep.subr.bf16.mxu0 0
        %1683 = vmatpush1.bf16.msra.mxu0 %v1674
        %1684 = vmatprep.subr.bf16.mxu0 0
        %1685 = vmatpush1.bf16.msra.mxu0 0
        %1686 = vmatprep.subr.bf16.mxu0 0
        %1687 = vmatpush1.bf16.msra.mxu0 0
        %1688 = vmatprep.subr.bf16.mxu0 0
        %1689 = vmatpush1.bf16.msra.mxu0 0
        %1690 = vmatprep.subr.bf16.mxu0 0
        %1691 = vmatpush1.bf16.msra.mxu0 0
        %1692 = vmatprep.subr.bf16.mxu0 0
        %1693 = vmatpush1.bf16.msra.mxu0 0
        %1694 = vmatprep.subr.bf16.mxu0 0
        %1695 = vmatpush1.bf16.msra.mxu0 0
        %1696 = vmatprep.subr.bf16.mxu0 0
        %1697 = vmatpush1.bf16.msra.mxu0 0
        %1698 = vmatprep.subr.bf16.mxu0 0
        %1699 = vmatpush1.bf16.msra.mxu0 0
        %1700 = vmatprep.subr.bf16.mxu0 0
        %1701 = vmatpush1.bf16.msra.mxu0 0
        %1702 = vmatprep.subr.bf16.mxu0 0
        %1703 = vmatpush1.bf16.msra.mxu0 0
        %1704 = vmatprep.subr.bf16.mxu0 0
        %1705 = vmatpush1.bf16.msra.mxu0 0
        %1706 = vmatprep.subr.bf16.mxu0 0
        %1707 = vmatpush1.bf16.msra.mxu0 0
        %1708 = vmatprep.subr.bf16.mxu0 0
        %1709 = vmatpush1.bf16.msra.mxu0 0
        %1710 = vmatprep.subr.bf16.mxu0 0
        %1711 = vmatpush1.bf16.msra.mxu0 0
        %1712 = vmatprep.mubr.bf16.mxu0 0
        %1713 = vmatmul.mubr.bf16.gmra.mrb[0].mxu0 %v1678
        %v1714 = vpop.f32.mrb[0].mxu0
        %v1715 = vadd.f32 %v1663, %v1714
        %v1716 = vpop.f32.mrb[0].mxu0
        %v1717 = vpop.f32.mrb[0].mxu0
        %v1718 = vpop.f32.mrb[0].mxu0
        %1719 = vdwg.mxu0
        %v1720 = vmul.f32 %v1715, 0.35355338
        %1722 = vrot.lane.b32.xlu0 %v1720, 120
        %v1723 = vpop.permute.xlu0 %1722
        %1725 = vrot.lane.b32.xlu0 %v1720, 112
        %v1726 = vpop.permute.xlu0 %1725
        %1728 = vrot.lane.b32.xlu0 %v1720, 104
        %v1729 = vpop.permute.xlu0 %1728
        %v1731 = vcombine.low %v1720, %v1726
        %v1732 = vcombine.high %v1720, %v1726
        %v1734 = vunpack.c.l.s4 1983009808
        %v1735 = vunpack.c.0.s8 %v1734
        %v1736 = vlaneseq
        %v1737 = vshrl.u32 %v1736, 7
        %v1738 = vsub.s32 %v1735, %v1737
        %v1739 = vrot.slane %v1731, %v1738
        %v1741 = vunpack.c.l.s4 1983009808
        %v1742 = vunpack.c.0.s8 %v1741
        %v1743 = vlaneseq
        %v1744 = vshrl.u32 %v1743, 7
        %v1745 = vsub.s32 %v1742, %v1744
        %v1746 = vrot.slane %v1732, %v1745
        %v1747 = vcombine.low %v1723, %v1729
        %v1748 = vcombine.high %v1723, %v1729
        %v1750 = vunpack.c.l.s4 1983009808
        %v1751 = vunpack.c.0.s8 %v1750
        %v1752 = vlaneseq
        %v1753 = vshrl.u32 %v1752, 7
        %v1754 = vsub.s32 %v1751, %v1753
        %v1755 = vrot.slane %v1747, %v1754
        %v1757 = vunpack.c.l.s4 1983009808
        %v1758 = vunpack.c.0.s8 %v1757
        %v1759 = vlaneseq
        %v1760 = vshrl.u32 %v1759, 7
        %v1761 = vsub.s32 %v1758, %v1760
        %v1762 = vrot.slane %v1748, %v1761
        %v1763 = vcombine.low %v1739, %v1755
        %v1764 = vcombine.high %v1739, %v1755
        %v1766 = vunpack.c.l.s4 1934713408
        %v1767 = vunpack.c.0.s8 %v1766
        %v1768 = vlaneseq
        %v1769 = vshrl.u32 %v1768, 7
        %v1770 = vsub.s32 %v1767, %v1769
        %v1771 = vrot.slane %v1763, %v1770
        %v1773 = vunpack.c.l.s4 1934713408
        %v1774 = vunpack.c.0.s8 %v1773
        %v1775 = vlaneseq
        %v1776 = vshrl.u32 %v1775, 7
        %v1777 = vsub.s32 %v1774, %v1776
        %v1778 = vrot.slane %v1764, %v1777
        %v1779 = vcombine.low %v1746, %v1762
        %v1780 = vcombine.high %v1746, %v1762
        %v1782 = vunpack.c.l.s4 1934713408
        %v1783 = vunpack.c.0.s8 %v1782
        %v1784 = vlaneseq
        %v1785 = vshrl.u32 %v1784, 7
        %v1786 = vsub.s32 %v1783, %v1785
        %v1787 = vrot.slane %v1779, %v1786
        %v1789 = vunpack.c.l.s4 1934713408
        %v1790 = vunpack.c.0.s8 %v1789
        %v1791 = vlaneseq
        %v1792 = vshrl.u32 %v1791, 7
        %v1793 = vsub.s32 %v1790, %v1792
        %v1794 = vrot.slane %v1780, %v1793
        %v1795 = vcombine.high %v1771, 0.0
        %v1796 = vcombine.high %v1778, 0.0
        %v1797 = vcombine.high %v1787, 0.0
        %v1798 = vcombine.high %v1794, 0.0
        %v1799 = vcombine.low %v1771, %v1778
        %v1801 = vunpack.c.l.s4 1983009808
        %v1802 = vunpack.c.0.s8 %v1801
        %v1803 = vlaneseq
        %v1804 = vshrl.u32 %v1803, 7
        %v1805 = vsub.s32 %v1802, %v1804
        %v1806 = vrot.slane %v1799, %v1805
        %v1807 = vcombine.low %v1795, %v1796
        %v1809 = vunpack.c.l.s4 1983009808
        %v1810 = vunpack.c.0.s8 %v1809
        %v1811 = vlaneseq
        %v1812 = vshrl.u32 %v1811, 7
        %v1813 = vsub.s32 %v1810, %v1812
        %v1814 = vrot.slane %v1807, %v1813
        %v1815 = vcombine.low %v1787, %v1794
        %v1817 = vunpack.c.l.s4 1983009808
        %v1818 = vunpack.c.0.s8 %v1817
        %v1819 = vlaneseq
        %v1820 = vshrl.u32 %v1819, 7
        %v1821 = vsub.s32 %v1818, %v1820
        %v1822 = vrot.slane %v1815, %v1821
        %v1823 = vcombine.low %v1797, %v1798
        %v1825 = vunpack.c.l.s4 1983009808
        %v1826 = vunpack.c.0.s8 %v1825
        %v1827 = vlaneseq
        %v1828 = vshrl.u32 %v1827, 7
        %v1829 = vsub.s32 %v1826, %v1828
        %v1830 = vrot.slane %v1823, %v1829
        %v1831 = vcombine.low %v1806, %v1814
        %v1832 = vcombine.high %v1806, %v1814
        %v1834 = vunpack.c.l.s4 1934713408
        %v1835 = vunpack.c.0.s8 %v1834
        %v1836 = vlaneseq
        %v1837 = vshrl.u32 %v1836, 7
        %v1838 = vsub.s32 %v1835, %v1837
        %v1839 = vrot.slane %v1831, %v1838
        %v1841 = vunpack.c.l.s4 1934713408
        %v1842 = vunpack.c.0.s8 %v1841
        %v1843 = vlaneseq
        %v1844 = vshrl.u32 %v1843, 7
        %v1845 = vsub.s32 %v1842, %v1844
        %v1846 = vrot.slane %v1832, %v1845
        %v1847 = vcombine.low %v1822, %v1830
        %v1848 = vcombine.high %v1822, %v1830
        %v1850 = vunpack.c.l.s4 1934713408
        %v1851 = vunpack.c.0.s8 %v1850
        %v1852 = vlaneseq
        %v1853 = vshrl.u32 %v1852, 7
        %v1854 = vsub.s32 %v1851, %v1853
        %v1855 = vrot.slane %v1847, %v1854
        %v1857 = vunpack.c.l.s4 1934713408
        %v1858 = vunpack.c.0.s8 %v1857
        %v1859 = vlaneseq
        %v1860 = vshrl.u32 %v1859, 7
        %v1861 = vsub.s32 %v1858, %v1860
        %v1862 = vrot.slane %v1848, %v1861
        %v1863 = vcombine.low %v1839, %v1855
        %v1864 = vcombine.high %v1839, %v1855
        %v1865 = vcombine.low %v1846, %v1862
        %v1866 = vcombine.high %v1846, %v1862
        %v1867 = vpack.c.bf16 %v1863, %v1863
        %v1868 = vpack.c.bf16 %v1864, %v1864
        %v1869 = vpack.c.bf16 %v1865, %v1865
        %v1870 = vpack.c.bf16 %v1866, %v1866
        %v1871 = vld [vmem:[#allocation2] sm:$0xff]
        %v1872 = vld [vmem:[#allocation2 + $0x8] sm:$0xff]
        %v1873 = vld [vmem:[#allocation2 + $0x10] sm:$0xff]
        %v1874 = vld [vmem:[#allocation2 + $0x18] sm:$0xff]
        %vm1875 = vcmask 64512
        %v1877 = vsel %vm1875, %v1867, 0
        %v1880 = vsel %vm1875, %v1871, 0
        %1882 = vmatprep.subr.bf16.mxu0 0
        %1883 = vmatpush1.bf16.xpose.msra.mxu0 %v1880
        %1884 = vmatprep.subr.bf16.mxu0 0
        %1885 = vmatpush1.bf16.xpose.msra.mxu0 0
        %1886 = vmatprep.subr.bf16.mxu0 0
        %1887 = vmatpush1.bf16.xpose.msra.mxu0 0
        %1888 = vmatprep.subr.bf16.mxu0 0
        %1889 = vmatpush1.bf16.xpose.msra.mxu0 0
        %1890 = vmatprep.subr.bf16.mxu0 0
        %1891 = vmatpush1.bf16.xpose.msra.mxu0 0
        %1892 = vmatprep.subr.bf16.mxu0 0
        %1893 = vmatpush1.bf16.xpose.msra.mxu0 0
        %1894 = vmatprep.subr.bf16.mxu0 0
        %1895 = vmatpush1.bf16.xpose.msra.mxu0 0
        %1896 = vmatprep.subr.bf16.mxu0 0
        %1897 = vmatpush1.bf16.xpose.msra.mxu0 0
        %1898 = vmatprep.subr.bf16.mxu0 0
        %1899 = vmatpush1.bf16.xpose.msra.mxu0 0
        %1900 = vmatprep.subr.bf16.mxu0 0
        %1901 = vmatpush1.bf16.xpose.msra.mxu0 0
        %1902 = vmatprep.subr.bf16.mxu0 0
        %1903 = vmatpush1.bf16.xpose.msra.mxu0 0
        %1904 = vmatprep.subr.bf16.mxu0 0
        %1905 = vmatpush1.bf16.xpose.msra.mxu0 0
        %1906 = vmatprep.subr.bf16.mxu0 0
        %1907 = vmatpush1.bf16.xpose.msra.mxu0 0
        %1908 = vmatprep.subr.bf16.mxu0 0
        %1909 = vmatpush1.bf16.xpose.msra.mxu0 0
        %1910 = vmatprep.subr.bf16.mxu0 0
        %1911 = vmatpush1.bf16.xpose.msra.mxu0 0
        %1912 = vmatprep.subr.bf16.mxu0 0
        %1913 = vmatpush1.bf16.xpose.msra.mxu0 0
        %1914 = vmatprep.mubr.bf16.mxu0 0
        %1915 = vmatmul.mubr.bf16.gmra.mrb[0].mxu0 %v1877
        %v1916 = vpop.f32.mrb[0].mxu0
        %v1917 = vadd.f32 0.0, %v1916
        %v1918 = vpop.f32.mrb[0].mxu0
        %v1919 = vpop.f32.mrb[0].mxu0
        %v1920 = vpop.f32.mrb[0].mxu0
        %1921 = vdwg.mxu0
        %v1923 = vsel %vm1875, %v1868, 0
        %v1926 = vsel %vm1875, %v1872, 0
        %1928 = vmatprep.subr.bf16.mxu0 0
        %1929 = vmatpush1.bf16.xpose.msra.mxu0 %v1926
        %1930 = vmatprep.subr.bf16.mxu0 0
        %1931 = vmatpush1.bf16.xpose.msra.mxu0 0
        %1932 = vmatprep.subr.bf16.mxu0 0
        %1933 = vmatpush1.bf16.xpose.msra.mxu0 0
        %1934 = vmatprep.subr.bf16.mxu0 0
        %1935 = vmatpush1.bf16.xpose.msra.mxu0 0
        %1936 = vmatprep.subr.bf16.mxu0 0
        %1937 = vmatpush1.bf16.xpose.msra.mxu0 0
        %1938 = vmatprep.subr.bf16.mxu0 0
        %1939 = vmatpush1.bf16.xpose.msra.mxu0 0
        %1940 = vmatprep.subr.bf16.mxu0 0
        %1941 = vmatpush1.bf16.xpose.msra.mxu0 0
        %1942 = vmatprep.subr.bf16.mxu0 0
        %1943 = vmatpush1.bf16.xpose.msra.mxu0 0
        %1944 = vmatprep.subr.bf16.mxu0 0
        %1945 = vmatpush1.bf16.xpose.msra.mxu0 0
        %1946 = vmatprep.subr.bf16.mxu0 0
        %1947 = vmatpush1.bf16.xpose.msra.mxu0 0
        %1948 = vmatprep.subr.bf16.mxu0 0
        %1949 = vmatpush1.bf16.xpose.msra.mxu0 0
        %1950 = vmatprep.subr.bf16.mxu0 0
        %1951 = vmatpush1.bf16.xpose.msra.mxu0 0
        %1952 = vmatprep.subr.bf16.mxu0 0
        %1953 = vmatpush1.bf16.xpose.msra.mxu0 0
        %1954 = vmatprep.subr.bf16.mxu0 0
        %1955 = vmatpush1.bf16.xpose.msra.mxu0 0
        %1956 = vmatprep.subr.bf16.mxu0 0
        %1957 = vmatpush1.bf16.xpose.msra.mxu0 0
        %1958 = vmatprep.subr.bf16.mxu0 0
        %1959 = vmatpush1.bf16.xpose.msra.mxu0 0
        %1960 = vmatprep.mubr.bf16.mxu0 0
        %1961 = vmatmul.mubr.bf16.gmra.mrb[0].mxu0 %v1923
        %v1962 = vpop.f32.mrb[0].mxu0
        %v1963 = vadd.f32 0.0, %v1962
        %v1964 = vpop.f32.mrb[0].mxu0
        %v1965 = vpop.f32.mrb[0].mxu0
        %v1966 = vpop.f32.mrb[0].mxu0
        %1967 = vdwg.mxu0
        %v1969 = vsel %vm1875, %v1869, 0
        %v1972 = vsel %vm1875, %v1873, 0
        %1974 = vmatprep.subr.bf16.mxu0 0
        %1975 = vmatpush1.bf16.xpose.msra.mxu0 %v1972
        %1976 = vmatprep.subr.bf16.mxu0 0
        %1977 = vmatpush1.bf16.xpose.msra.mxu0 0
        %1978 = vmatprep.subr.bf16.mxu0 0
        %1979 = vmatpush1.bf16.xpose.msra.mxu0 0
        %1980 = vmatprep.subr.bf16.mxu0 0
        %1981 = vmatpush1.bf16.xpose.msra.mxu0 0
        %1982 = vmatprep.subr.bf16.mxu0 0
        %1983 = vmatpush1.bf16.xpose.msra.mxu0 0
        %1984 = vmatprep.subr.bf16.mxu0 0
        %1985 = vmatpush1.bf16.xpose.msra.mxu0 0
        %1986 = vmatprep.subr.bf16.mxu0 0
        %1987 = vmatpush1.bf16.xpose.msra.mxu0 0
        %1988 = vmatprep.subr.bf16.mxu0 0
        %1989 = vmatpush1.bf16.xpose.msra.mxu0 0
        %1990 = vmatprep.subr.bf16.mxu0 0
        %1991 = vmatpush1.bf16.xpose.msra.mxu0 0
        %1992 = vmatprep.subr.bf16.mxu0 0
        %1993 = vmatpush1.bf16.xpose.msra.mxu0 0
        %1994 = vmatprep.subr.bf16.mxu0 0
        %1995 = vmatpush1.bf16.xpose.msra.mxu0 0
        %1996 = vmatprep.subr.bf16.mxu0 0
        %1997 = vmatpush1.bf16.xpose.msra.mxu0 0
        %1998 = vmatprep.subr.bf16.mxu0 0
        %1999 = vmatpush1.bf16.xpose.msra.mxu0 0
        %2000 = vmatprep.subr.bf16.mxu0 0
        %2001 = vmatpush1.bf16.xpose.msra.mxu0 0
        %2002 = vmatprep.subr.bf16.mxu0 0
        %2003 = vmatpush1.bf16.xpose.msra.mxu0 0
        %2004 = vmatprep.subr.bf16.mxu0 0
        %2005 = vmatpush1.bf16.xpose.msra.mxu0 0
        %2006 = vmatprep.mubr.bf16.mxu0 0
        %2007 = vmatmul.mubr.bf16.gmra.mrb[0].mxu0 %v1969
        %v2008 = vpop.f32.mrb[0].mxu0
        %v2009 = vadd.f32 0.0, %v2008
        %v2010 = vpop.f32.mrb[0].mxu0
        %v2011 = vpop.f32.mrb[0].mxu0
        %v2012 = vpop.f32.mrb[0].mxu0
        %2013 = vdwg.mxu0
        %v2015 = vsel %vm1875, %v1870, 0
        %v2018 = vsel %vm1875, %v1874, 0
        %2020 = vmatprep.subr.bf16.mxu0 0
        %2021 = vmatpush1.bf16.xpose.msra.mxu0 %v2018
        %2022 = vmatprep.subr.bf16.mxu0 0
        %2023 = vmatpush1.bf16.xpose.msra.mxu0 0
        %2024 = vmatprep.subr.bf16.mxu0 0
        %2025 = vmatpush1.bf16.xpose.msra.mxu0 0
        %2026 = vmatprep.subr.bf16.mxu0 0
        %2027 = vmatpush1.bf16.xpose.msra.mxu0 0
        %2028 = vmatprep.subr.bf16.mxu0 0
        %2029 = vmatpush1.bf16.xpose.msra.mxu0 0
        %2030 = vmatprep.subr.bf16.mxu0 0
        %2031 = vmatpush1.bf16.xpose.msra.mxu0 0
        %2032 = vmatprep.subr.bf16.mxu0 0
        %2033 = vmatpush1.bf16.xpose.msra.mxu0 0
        %2034 = vmatprep.subr.bf16.mxu0 0
        %2035 = vmatpush1.bf16.xpose.msra.mxu0 0
        %2036 = vmatprep.subr.bf16.mxu0 0
        %2037 = vmatpush1.bf16.xpose.msra.mxu0 0
        %2038 = vmatprep.subr.bf16.mxu0 0
        %2039 = vmatpush1.bf16.xpose.msra.mxu0 0
        %2040 = vmatprep.subr.bf16.mxu0 0
        %2041 = vmatpush1.bf16.xpose.msra.mxu0 0
        %2042 = vmatprep.subr.bf16.mxu0 0
        %2043 = vmatpush1.bf16.xpose.msra.mxu0 0
        %2044 = vmatprep.subr.bf16.mxu0 0
        %2045 = vmatpush1.bf16.xpose.msra.mxu0 0
        %2046 = vmatprep.subr.bf16.mxu0 0
        %2047 = vmatpush1.bf16.xpose.msra.mxu0 0
        %2048 = vmatprep.subr.bf16.mxu0 0
        %2049 = vmatpush1.bf16.xpose.msra.mxu0 0
        %2050 = vmatprep.subr.bf16.mxu0 0
        %2051 = vmatpush1.bf16.xpose.msra.mxu0 0
        %2052 = vmatprep.mubr.bf16.mxu0 0
        %2053 = vmatmul.mubr.bf16.gmra.mrb[0].mxu0 %v2015
        %v2054 = vpop.f32.mrb[0].mxu0
        %v2055 = vadd.f32 0.0, %v2054
        %v2056 = vpop.f32.mrb[0].mxu0
        %v2057 = vpop.f32.mrb[0].mxu0
        %v2058 = vpop.f32.mrb[0].mxu0
        %2059 = vdwg.mxu0
        %vm2060 = vcmask 130048
        %v2061 = vsel %vm2060, %v1917, -inf
        %2062 = vmax.xlane.f32.xlu0 %v2061
        %v2063 = vpop.xlane.xlu0 %2062
        %v2064 = vsel %vm2060, %v1963, -inf
        %2065 = vmax.xlane.f32.xlu0 %v2064
        %v2066 = vpop.xlane.xlu0 %2065
        %v2067 = vsel %vm2060, %v2009, -inf
        %2068 = vmax.xlane.f32.xlu0 %v2067
        %v2069 = vpop.xlane.xlu0 %2068
        %v2070 = vsel %vm2060, %v2055, -inf
        %2071 = vmax.xlane.f32.xlu0 %v2070
        %v2072 = vpop.xlane.xlu0 %2071
        %v2073 = vsub.f32 %v1917, %v2063
        %v2074 = vsub.f32 %v1963, %v2066
        %v2075 = vsub.f32 %v2009, %v2069
        %v2076 = vsub.f32 %v2055, %v2072
        %v2077 = vmul.f32 %v2073, 1.442695
        %v2078 = vpow.pop %v2077
        %v2079 = vmul.f32 %v2074, 1.442695
        %v2080 = vpow.pop %v2079
        %v2081 = vmul.f32 %v2075, 1.442695
        %v2082 = vpow.pop %v2081
        %v2083 = vmul.f32 %v2076, 1.442695
        %v2084 = vpow.pop %v2083
        %v2085 = vsel %vm2060, %v2078, 0.0
        %2086 = vadd.xlane.f32.xlu0 %v2085
        %v2087 = vpop.xlane.xlu0 %2086
        %v2088 = vsel %vm2060, %v2080, 0.0
        %2089 = vadd.xlane.f32.xlu0 %v2088
        %v2090 = vpop.xlane.xlu0 %2089
        %v2091 = vsel %vm2060, %v2082, 0.0
        %2092 = vadd.xlane.f32.xlu0 %v2091
        %v2093 = vpop.xlane.xlu0 %2092
        %v2094 = vsel %vm2060, %v2084, 0.0
        %2095 = vadd.xlane.f32.xlu0 %v2094
        %v2096 = vpop.xlane.xlu0 %2095
        %v2097 = vrcp.pop %v2087
        %v2098 = vrcp.pop %v2090
        %v2099 = vrcp.pop %v2093
        %v2100 = vrcp.pop %v2096
        %v2101 = vmul.f32 %v2078, %v2097
        %v2102 = vmul.f32 %v2080, %v2098
        %v2103 = vmul.f32 %v2082, %v2099
        %v2104 = vmul.f32 %v2084, %v2100
        %v2105 = vpack.c.bf16 %v2101, %v2101
        %v2106 = vpack.c.bf16 %v2102, %v2102
        %v2107 = vpack.c.bf16 %v2103, %v2103
        %v2108 = vpack.c.bf16 %v2104, %v2104
        %v2109 = vld [vmem:[#allocation3] sm:$0xff]
        %v2110 = vld [vmem:[#allocation3 + $0x8] sm:$0xff]
        %v2111 = vld [vmem:[#allocation3 + $0x10] sm:$0xff]
        %v2112 = vld [vmem:[#allocation3 + $0x18] sm:$0xff]
        %v2114 = vsel %vm2060, %v2105, 0
        %2116 = vmatprep.subr.bf16.mxu0 0
        %2117 = vmatpush1.bf16.msra.mxu0 %v2109
        %2118 = vmatprep.subr.bf16.mxu0 0
        %2119 = vmatpush1.bf16.msra.mxu0 0
        %2120 = vmatprep.subr.bf16.mxu0 0
        %2121 = vmatpush1.bf16.msra.mxu0 0
        %2122 = vmatprep.subr.bf16.mxu0 0
        %2123 = vmatpush1.bf16.msra.mxu0 0
        %2124 = vmatprep.subr.bf16.mxu0 0
        %2125 = vmatpush1.bf16.msra.mxu0 0
        %2126 = vmatprep.subr.bf16.mxu0 0
        %2127 = vmatpush1.bf16.msra.mxu0 0
        %2128 = vmatprep.subr.bf16.mxu0 0
        %2129 = vmatpush1.bf16.msra.mxu0 0
        %2130 = vmatprep.subr.bf16.mxu0 0
        %2131 = vmatpush1.bf16.msra.mxu0 0
        %2132 = vmatprep.subr.bf16.mxu0 0
        %2133 = vmatpush1.bf16.msra.mxu0 0
        %2134 = vmatprep.subr.bf16.mxu0 0
        %2135 = vmatpush1.bf16.msra.mxu0 0
        %2136 = vmatprep.subr.bf16.mxu0 0
        %2137 = vmatpush1.bf16.msra.mxu0 0
        %2138 = vmatprep.subr.bf16.mxu0 0
        %2139 = vmatpush1.bf16.msra.mxu0 0
        %2140 = vmatprep.subr.bf16.mxu0 0
        %2141 = vmatpush1.bf16.msra.mxu0 0
        %2142 = vmatprep.subr.bf16.mxu0 0
        %2143 = vmatpush1.bf16.msra.mxu0 0
        %2144 = vmatprep.subr.bf16.mxu0 0
        %2145 = vmatpush1.bf16.msra.mxu0 0
        %2146 = vmatprep.subr.bf16.mxu0 0
        %2147 = vmatpush1.bf16.msra.mxu0 0
        %2148 = vmatprep.mubr.bf16.mxu0 0
        %2149 = vmatmul.mubr.bf16.gmra.mrb[0].mxu0 %v2114
        %v2150 = vpop.f32.mrb[0].mxu0
        %v2151 = vadd.f32 0.0, %v2150
        %v2152 = vpop.f32.mrb[0].mxu0
        %v2153 = vpop.f32.mrb[0].mxu0
        %v2154 = vpop.f32.mrb[0].mxu0
        %2155 = vdwg.mxu0
        %v2157 = vsel %vm2060, %v2106, 0
        %2159 = vmatprep.subr.bf16.mxu0 0
        %2160 = vmatpush1.bf16.msra.mxu0 %v2110
        %2161 = vmatprep.subr.bf16.mxu0 0
        %2162 = vmatpush1.bf16.msra.mxu0 0
        %2163 = vmatprep.subr.bf16.mxu0 0
        %2164 = vmatpush1.bf16.msra.mxu0 0
        %2165 = vmatprep.subr.bf16.mxu0 0
        %2166 = vmatpush1.bf16.msra.mxu0 0
        %2167 = vmatprep.subr.bf16.mxu0 0
        %2168 = vmatpush1.bf16.msra.mxu0 0
        %2169 = vmatprep.subr.bf16.mxu0 0
        %2170 = vmatpush1.bf16.msra.mxu0 0
        %2171 = vmatprep.subr.bf16.mxu0 0
        %2172 = vmatpush1.bf16.msra.mxu0 0
        %2173 = vmatprep.subr.bf16.mxu0 0
        %2174 = vmatpush1.bf16.msra.mxu0 0
        %2175 = vmatprep.subr.bf16.mxu0 0
        %2176 = vmatpush1.bf16.msra.mxu0 0
        %2177 = vmatprep.subr.bf16.mxu0 0
        %2178 = vmatpush1.bf16.msra.mxu0 0
        %2179 = vmatprep.subr.bf16.mxu0 0
        %2180 = vmatpush1.bf16.msra.mxu0 0
        %2181 = vmatprep.subr.bf16.mxu0 0
        %2182 = vmatpush1.bf16.msra.mxu0 0
        %2183 = vmatprep.subr.bf16.mxu0 0
        %2184 = vmatpush1.bf16.msra.mxu0 0
        %2185 = vmatprep.subr.bf16.mxu0 0
        %2186 = vmatpush1.bf16.msra.mxu0 0
        %2187 = vmatprep.subr.bf16.mxu0 0
        %2188 = vmatpush1.bf16.msra.mxu0 0
        %2189 = vmatprep.subr.bf16.mxu0 0
        %2190 = vmatpush1.bf16.msra.mxu0 0
        %2191 = vmatprep.mubr.bf16.mxu0 0
        %2192 = vmatmul.mubr.bf16.gmra.mrb[0].mxu0 %v2157
        %v2193 = vpop.f32.mrb[0].mxu0
        %v2194 = vadd.f32 0.0, %v2193
        %v2195 = vpop.f32.mrb[0].mxu0
        %v2196 = vpop.f32.mrb[0].mxu0
        %v2197 = vpop.f32.mrb[0].mxu0
        %2198 = vdwg.mxu0
        %v2200 = vsel %vm2060, %v2107, 0
        %2202 = vmatprep.subr.bf16.mxu0 0
        %2203 = vmatpush1.bf16.msra.mxu0 %v2111
        %2204 = vmatprep.subr.bf16.mxu0 0
        %2205 = vmatpush1.bf16.msra.mxu0 0
        %2206 = vmatprep.subr.bf16.mxu0 0
        %2207 = vmatpush1.bf16.msra.mxu0 0
        %2208 = vmatprep.subr.bf16.mxu0 0
        %2209 = vmatpush1.bf16.msra.mxu0 0
        %2210 = vmatprep.subr.bf16.mxu0 0
        %2211 = vmatpush1.bf16.msra.mxu0 0
        %2212 = vmatprep.subr.bf16.mxu0 0
        %2213 = vmatpush1.bf16.msra.mxu0 0
        %2214 = vmatprep.subr.bf16.mxu0 0
        %2215 = vmatpush1.bf16.msra.mxu0 0
        %2216 = vmatprep.subr.bf16.mxu0 0
        %2217 = vmatpush1.bf16.msra.mxu0 0
        %2218 = vmatprep.subr.bf16.mxu0 0
        %2219 = vmatpush1.bf16.msra.mxu0 0
        %2220 = vmatprep.subr.bf16.mxu0 0
        %2221 = vmatpush1.bf16.msra.mxu0 0
        %2222 = vmatprep.subr.bf16.mxu0 0
        %2223 = vmatpush1.bf16.msra.mxu0 0
        %2224 = vmatprep.subr.bf16.mxu0 0
        %2225 = vmatpush1.bf16.msra.mxu0 0
        %2226 = vmatprep.subr.bf16.mxu0 0
        %2227 = vmatpush1.bf16.msra.mxu0 0
        %2228 = vmatprep.subr.bf16.mxu0 0
        %2229 = vmatpush1.bf16.msra.mxu0 0
        %2230 = vmatprep.subr.bf16.mxu0 0
        %2231 = vmatpush1.bf16.msra.mxu0 0
        %2232 = vmatprep.subr.bf16.mxu0 0
        %2233 = vmatpush1.bf16.msra.mxu0 0
        %2234 = vmatprep.mubr.bf16.mxu0 0
        %2235 = vmatmul.mubr.bf16.gmra.mrb[0].mxu0 %v2200
        %v2236 = vpop.f32.mrb[0].mxu0
        %v2237 = vadd.f32 0.0, %v2236
        %v2238 = vpop.f32.mrb[0].mxu0
        %v2239 = vpop.f32.mrb[0].mxu0
        %v2240 = vpop.f32.mrb[0].mxu0
        %2241 = vdwg.mxu0
        %v2243 = vsel %vm2060, %v2108, 0
        %2245 = vmatprep.subr.bf16.mxu0 0
        %2246 = vmatpush1.bf16.msra.mxu0 %v2112
        %2247 = vmatprep.subr.bf16.mxu0 0
        %2248 = vmatpush1.bf16.msra.mxu0 0
        %2249 = vmatprep.subr.bf16.mxu0 0
        %2250 = vmatpush1.bf16.msra.mxu0 0
        %2251 = vmatprep.subr.bf16.mxu0 0
        %2252 = vmatpush1.bf16.msra.mxu0 0
        %2253 = vmatprep.subr.bf16.mxu0 0
        %2254 = vmatpush1.bf16.msra.mxu0 0
        %2255 = vmatprep.subr.bf16.mxu0 0
        %2256 = vmatpush1.bf16.msra.mxu0 0
        %2257 = vmatprep.subr.bf16.mxu0 0
        %2258 = vmatpush1.bf16.msra.mxu0 0
        %2259 = vmatprep.subr.bf16.mxu0 0
        %2260 = vmatpush1.bf16.msra.mxu0 0
        %2261 = vmatprep.subr.bf16.mxu0 0
        %2262 = vmatpush1.bf16.msra.mxu0 0
        %2263 = vmatprep.subr.bf16.mxu0 0
        %2264 = vmatpush1.bf16.msra.mxu0 0
        %2265 = vmatprep.subr.bf16.mxu0 0
        %2266 = vmatpush1.bf16.msra.mxu0 0
        %2267 = vmatprep.subr.bf16.mxu0 0
        %2268 = vmatpush1.bf16.msra.mxu0 0
        %2269 = vmatprep.subr.bf16.mxu0 0
        %2270 = vmatpush1.bf16.msra.mxu0 0
        %2271 = vmatprep.subr.bf16.mxu0 0
        %2272 = vmatpush1.bf16.msra.mxu0 0
        %2273 = vmatprep.subr.bf16.mxu0 0
        %2274 = vmatpush1.bf16.msra.mxu0 0
        %2275 = vmatprep.subr.bf16.mxu0 0
        %2276 = vmatpush1.bf16.msra.mxu0 0
        %2277 = vmatprep.mubr.bf16.mxu0 0
        %2278 = vmatmul.mubr.bf16.gmra.mrb[0].mxu0 %v2243
        %v2279 = vpop.f32.mrb[0].mxu0
        %v2280 = vadd.f32 0.0, %v2279
        %v2281 = vpop.f32.mrb[0].mxu0
        %v2282 = vpop.f32.mrb[0].mxu0
        %v2283 = vpop.f32.mrb[0].mxu0
        %2284 = vdwg.mxu0
        %v2285 = vpack.c.bf16 %v2151, %v2151
        %v2286 = vld [vmem:[#allocation19] sm:$0xf]
        %v2287 = vpack.c.bf16 %v2194, %v2194
        %s2288 = scalar_lea.vmem [#allocation19], 4
        %v2289 = vld [vmem:[%s2288] sm:$0xf]
        %v2291 = vsel %vm1875, %v2287, 0
        %vm2293 = vcmask 1043456
        %v2295 = vsel %vm2293, %v2289, 0
        %2297 = vmatprep.subr.bf16.mxu0 0
        %2298 = vmatpush1.bf16.msra.mxu0 %v2295
        %2299 = vmatprep.subr.bf16.mxu0 0
        %2300 = vmatpush1.bf16.msra.mxu0 0
        %2301 = vmatprep.subr.bf16.mxu0 0
        %2302 = vmatpush1.bf16.msra.mxu0 0
        %2303 = vmatprep.subr.bf16.mxu0 0
        %2304 = vmatpush1.bf16.msra.mxu0 0
        %2305 = vmatprep.subr.bf16.mxu0 0
        %2306 = vmatpush1.bf16.msra.mxu0 0
        %2307 = vmatprep.subr.bf16.mxu0 0
        %2308 = vmatpush1.bf16.msra.mxu0 0
        %2309 = vmatprep.subr.bf16.mxu0 0
        %2310 = vmatpush1.bf16.msra.mxu0 0
        %2311 = vmatprep.subr.bf16.mxu0 0
        %2312 = vmatpush1.bf16.msra.mxu0 0
        %2313 = vmatprep.subr.bf16.mxu0 0
        %2314 = vmatpush1.bf16.msra.mxu0 0
        %2315 = vmatprep.subr.bf16.mxu0 0
        %2316 = vmatpush1.bf16.msra.mxu0 0
        %2317 = vmatprep.subr.bf16.mxu0 0
        %2318 = vmatpush1.bf16.msra.mxu0 0
        %2319 = vmatprep.subr.bf16.mxu0 0
        %2320 = vmatpush1.bf16.msra.mxu0 0
        %2321 = vmatprep.subr.bf16.mxu0 0
        %2322 = vmatpush1.bf16.msra.mxu0 0
        %2323 = vmatprep.subr.bf16.mxu0 0
        %2324 = vmatpush1.bf16.msra.mxu0 0
        %2325 = vmatprep.subr.bf16.mxu0 0
        %2326 = vmatpush1.bf16.msra.mxu0 0
        %2327 = vmatprep.subr.bf16.mxu0 0
        %2328 = vmatpush1.bf16.msra.mxu0 0
        %2329 = vmatprep.mubr.bf16.mxu0 0
        %2330 = vmatmul.mubr.bf16.gmra.mrb[0].mxu0 %v2291
        %v2331 = vpop.f32.mrb[0].mxu0
        %v2332 = vadd.f32 0.0, %v2331
        %v2333 = vpop.f32.mrb[0].mxu0
        %v2334 = vpop.f32.mrb[0].mxu0
        %v2335 = vpop.f32.mrb[0].mxu0
        %2336 = vdwg.mxu0
        %v2338 = vsel %vm1875, %v2285, 0
        %v2341 = vsel %vm2293, %v2286, 0
        %2343 = vmatprep.subr.bf16.mxu0 0
        %2344 = vmatpush1.bf16.msra.mxu0 %v2341
        %2345 = vmatprep.subr.bf16.mxu0 0
        %2346 = vmatpush1.bf16.msra.mxu0 0
        %2347 = vmatprep.subr.bf16.mxu0 0
        %2348 = vmatpush1.bf16.msra.mxu0 0
        %2349 = vmatprep.subr.bf16.mxu0 0
        %2350 = vmatpush1.bf16.msra.mxu0 0
        %2351 = vmatprep.subr.bf16.mxu0 0
        %2352 = vmatpush1.bf16.msra.mxu0 0
        %2353 = vmatprep.subr.bf16.mxu0 0
        %2354 = vmatpush1.bf16.msra.mxu0 0
        %2355 = vmatprep.subr.bf16.mxu0 0
        %2356 = vmatpush1.bf16.msra.mxu0 0
        %2357 = vmatprep.subr.bf16.mxu0 0
        %2358 = vmatpush1.bf16.msra.mxu0 0
        %2359 = vmatprep.subr.bf16.mxu0 0
        %2360 = vmatpush1.bf16.msra.mxu0 0
        %2361 = vmatprep.subr.bf16.mxu0 0
        %2362 = vmatpush1.bf16.msra.mxu0 0
        %2363 = vmatprep.subr.bf16.mxu0 0
        %2364 = vmatpush1.bf16.msra.mxu0 0
        %2365 = vmatprep.subr.bf16.mxu0 0
        %2366 = vmatpush1.bf16.msra.mxu0 0
        %2367 = vmatprep.subr.bf16.mxu0 0
        %2368 = vmatpush1.bf16.msra.mxu0 0
        %2369 = vmatprep.subr.bf16.mxu0 0
        %2370 = vmatpush1.bf16.msra.mxu0 0
        %2371 = vmatprep.subr.bf16.mxu0 0
        %2372 = vmatpush1.bf16.msra.mxu0 0
        %2373 = vmatprep.subr.bf16.mxu0 0
        %2374 = vmatpush1.bf16.msra.mxu0 0
        %2375 = vmatprep.mubr.bf16.mxu0 0
        %2376 = vmatmul.mubr.bf16.gmra.mrb[0].mxu0 %v2338
        %v2377 = vpop.f32.mrb[0].mxu0
        %v2378 = vadd.f32 %v2332, %v2377
        %v2379 = vpop.f32.mrb[0].mxu0
        %v2380 = vpop.f32.mrb[0].mxu0
        %v2381 = vpop.f32.mrb[0].mxu0
        %2382 = vdwg.mxu0
        %v2383 = vpack.c.bf16 %v2237, %v2237
        %s2384 = scalar_lea.vmem [#allocation19], 8
        %v2385 = vld [vmem:[%s2384] sm:$0xf]
        %v2387 = vsel %vm1875, %v2383, 0
        %v2390 = vsel %vm2293, %v2385, 0
        %2392 = vmatprep.subr.bf16.mxu0 0
        %2393 = vmatpush1.bf16.msra.mxu0 %v2390
        %2394 = vmatprep.subr.bf16.mxu0 0
        %2395 = vmatpush1.bf16.msra.mxu0 0
        %2396 = vmatprep.subr.bf16.mxu0 0
        %2397 = vmatpush1.bf16.msra.mxu0 0
        %2398 = vmatprep.subr.bf16.mxu0 0
        %2399 = vmatpush1.bf16.msra.mxu0 0
        %2400 = vmatprep.subr.bf16.mxu0 0
        %2401 = vmatpush1.bf16.msra.mxu0 0
        %2402 = vmatprep.subr.bf16.mxu0 0
        %2403 = vmatpush1.bf16.msra.mxu0 0
        %2404 = vmatprep.subr.bf16.mxu0 0
        %2405 = vmatpush1.bf16.msra.mxu0 0
        %2406 = vmatprep.subr.bf16.mxu0 0
        %2407 = vmatpush1.bf16.msra.mxu0 0
        %2408 = vmatprep.subr.bf16.mxu0 0
        %2409 = vmatpush1.bf16.msra.mxu0 0
        %2410 = vmatprep.subr.bf16.mxu0 0
        %2411 = vmatpush1.bf16.msra.mxu0 0
        %2412 = vmatprep.subr.bf16.mxu0 0
        %2413 = vmatpush1.bf16.msra.mxu0 0
        %2414 = vmatprep.subr.bf16.mxu0 0
        %2415 = vmatpush1.bf16.msra.mxu0 0
        %2416 = vmatprep.subr.bf16.mxu0 0
        %2417 = vmatpush1.bf16.msra.mxu0 0
        %2418 = vmatprep.subr.bf16.mxu0 0
        %2419 = vmatpush1.bf16.msra.mxu0 0
        %2420 = vmatprep.subr.bf16.mxu0 0
        %2421 = vmatpush1.bf16.msra.mxu0 0
        %2422 = vmatprep.subr.bf16.mxu0 0
        %2423 = vmatpush1.bf16.msra.mxu0 0
        %2424 = vmatprep.mubr.bf16.mxu0 0
        %2425 = vmatmul.mubr.bf16.gmra.mrb[0].mxu0 %v2387
        %v2426 = vpop.f32.mrb[0].mxu0
        %v2427 = vadd.f32 0.0, %v2426
        %v2428 = vpop.f32.mrb[0].mxu0
        %v2429 = vpop.f32.mrb[0].mxu0
        %v2430 = vpop.f32.mrb[0].mxu0
        %2431 = vdwg.mxu0
        %v2432 = vadd.f32 %v2378, %v2427
        %v2433 = vpack.c.bf16 %v2280, %v2280
        %s2434 = scalar_lea.vmem [#allocation19], 12
        %v2435 = vld [vmem:[%s2434] sm:$0xf]
        %v2437 = vsel %vm1875, %v2433, 0
        %v2440 = vsel %vm2293, %v2435, 0
        %2442 = vmatprep.subr.bf16.mxu0 0
        %2443 = vmatpush1.bf16.msra.mxu0 %v2440
        %2444 = vmatprep.subr.bf16.mxu0 0
        %2445 = vmatpush1.bf16.msra.mxu0 0
        %2446 = vmatprep.subr.bf16.mxu0 0
        %2447 = vmatpush1.bf16.msra.mxu0 0
        %2448 = vmatprep.subr.bf16.mxu0 0
        %2449 = vmatpush1.bf16.msra.mxu0 0
        %2450 = vmatprep.subr.bf16.mxu0 0
        %2451 = vmatpush1.bf16.msra.mxu0 0
        %2452 = vmatprep.subr.bf16.mxu0 0
        %2453 = vmatpush1.bf16.msra.mxu0 0
        %2454 = vmatprep.subr.bf16.mxu0 0
        %2455 = vmatpush1.bf16.msra.mxu0 0
        %2456 = vmatprep.subr.bf16.mxu0 0
        %2457 = vmatpush1.bf16.msra.mxu0 0
        %2458 = vmatprep.subr.bf16.mxu0 0
        %2459 = vmatpush1.bf16.msra.mxu0 0
        %2460 = vmatprep.subr.bf16.mxu0 0
        %2461 = vmatpush1.bf16.msra.mxu0 0
        %2462 = vmatprep.subr.bf16.mxu0 0
        %2463 = vmatpush1.bf16.msra.mxu0 0
        %2464 = vmatprep.subr.bf16.mxu0 0
        %2465 = vmatpush1.bf16.msra.mxu0 0
        %2466 = vmatprep.subr.bf16.mxu0 0
        %2467 = vmatpush1.bf16.msra.mxu0 0
        %2468 = vmatprep.subr.bf16.mxu0 0
        %2469 = vmatpush1.bf16.msra.mxu0 0
        %2470 = vmatprep.subr.bf16.mxu0 0
        %2471 = vmatpush1.bf16.msra.mxu0 0
        %2472 = vmatprep.subr.bf16.mxu0 0
        %2473 = vmatpush1.bf16.msra.mxu0 0
        %2474 = vmatprep.mubr.bf16.mxu0 0
        %2475 = vmatmul.mubr.bf16.gmra.mrb[0].mxu0 %v2437
        %v2476 = vpop.f32.mrb[0].mxu0
        %v2477 = vadd.f32 0.0, %v2476
        %v2478 = vpop.f32.mrb[0].mxu0
        %v2479 = vpop.f32.mrb[0].mxu0
        %v2480 = vpop.f32.mrb[0].mxu0
        %2481 = vdwg.mxu0
        %v2482 = vadd.f32 %v2432, %v2477
        %v2483 = vld [vmem:[#allocation21] sm:$0x1]
        %v2485 = vlaneseq
        %v2486 = vshrl.u32 %v2485, 7
        %v2487 = vsub.s32 0, %v2486
        %v2488 = vrot.slane %v2483, %v2487
        %v2490 = vadd.f32 %v2482, %v2488
        %v2491 = vadd.f32 %v1622, %v2490
        %v2492 = vsel %vm1623, %v2491, 0.0
        %2493 = vadd.xlane.f32.xlu0 %v2492
        %v2494 = vpop.xlane.xlu0 %2493
        %v2495 = vmul.f32 %v2494, %v1627
        %v2496 = vsub.f32 %v2491, %v2495
        %v2497 = vmul.f32 %v2496, %v2496
        %v2498 = vsel %vm1623, %v2497, 0.0
        %2499 = vadd.xlane.f32.xlu0 %v2498
        %v2500 = vpop.xlane.xlu0 %2499
        %v2501 = vmul.f32 %v2500, %v1627
        %v2502 = vadd.f32 %v2501, 1e-05
        %v2503 = vrsqrt.pop %v2502
        %v2504 = vmul.f32 %v2496, %v2503
        %v2505 = vld [vmem:[#allocation22] sm:$0x1]
        %v2507 = vlaneseq
        %v2508 = vshrl.u32 %v2507, 7
        %v2509 = vsub.s32 0, %v2508
        %v2510 = vrot.slane %v2505, %v2509
        %v2512 = vmul.f32 %v2504, %v2510
        %v2513 = vld [vmem:[#allocation24] sm:$0x1]
        %v2515 = vlaneseq
        %v2516 = vshrl.u32 %v2515, 7
        %v2517 = vsub.s32 0, %v2516
        %v2518 = vrot.slane %v2513, %v2517
        %v2520 = vadd.f32 %v2512, %v2518
        %v2521 = vpack.c.bf16 %v2520, %v2520
        %v2522 = vld [vmem:[#allocation25] sm:$0xf]
        %v2523 = vld [vmem:[#allocation25 + $0x4] sm:$0xf]
        %v2524 = vld [vmem:[#allocation25 + $0x8] sm:$0xf]
        %v2525 = vld [vmem:[#allocation25 + $0xc] sm:$0xf]
        %v2526 = vld [vmem:[#allocation27] sm:$0x1]
        %v2528 = vlaneseq
        %v2529 = vshrl.u32 %v2528, 7
        %v2530 = vsub.s32 0, %v2529
        %v2531 = vrot.slane %v2526, %v2530
        %v2537 = vunpack.c.l.b16 %v2522
        %v2538 = vunpack.c.l.b16 %v2523
        %v2539 = vunpack.c.l.b16 %v2524
        %v2540 = vunpack.c.l.b16 %v2525
        %v2541 = vpack.c.b16 %v2538, %v2537
        %v2542 = vpack.c.b16 %v2540, %v2539
        %v2546 = vsel %vm1623, %v2521, 0
        %2548 = vmatprep.subr.bf16.mxu0 0
        %2549 = vmatpush1.bf16.msra.mxu0 %v2541
        %2550 = vmatprep.subr.bf16.mxu0 0
        %2551 = vmatpush1.bf16.msra.mxu0 %v2542
        %2552 = vmatprep.subr.bf16.mxu0 0
        %2553 = vmatpush1.bf16.msra.mxu0 0
        %2554 = vmatprep.subr.bf16.mxu0 0
        %2555 = vmatpush1.bf16.msra.mxu0 0
        %2556 = vmatprep.subr.bf16.mxu0 0
        %2557 = vmatpush1.bf16.msra.mxu0 0
        %2558 = vmatprep.subr.bf16.mxu0 0
        %2559 = vmatpush1.bf16.msra.mxu0 0
        %2560 = vmatprep.subr.bf16.mxu0 0
        %2561 = vmatpush1.bf16.msra.mxu0 0
        %2562 = vmatprep.subr.bf16.mxu0 0
        %2563 = vmatpush1.bf16.msra.mxu0 0
        %2564 = vmatprep.subr.bf16.mxu0 0
        %2565 = vmatpush1.bf16.msra.mxu0 0
        %2566 = vmatprep.subr.bf16.mxu0 0
        %2567 = vmatpush1.bf16.msra.mxu0 0
        %2568 = vmatprep.subr.bf16.mxu0 0
        %2569 = vmatpush1.bf16.msra.mxu0 0
        %2570 = vmatprep.subr.bf16.mxu0 0
        %2571 = vmatpush1.bf16.msra.mxu0 0
        %2572 = vmatprep.subr.bf16.mxu0 0
        %2573 = vmatpush1.bf16.msra.mxu0 0
        %2574 = vmatprep.subr.bf16.mxu0 0
        %2575 = vmatpush1.bf16.msra.mxu0 0
        %2576 = vmatprep.subr.bf16.mxu0 0
        %2577 = vmatpush1.bf16.msra.mxu0 0
        %2578 = vmatprep.subr.bf16.mxu0 0
        %2579 = vmatpush1.bf16.msra.mxu0 0
        %2580 = vmatprep.mubr.bf16.mxu0 0
        %2581 = vmatmul.mubr.bf16.gmra.mrb[0].mxu0 %v2546
        %v2582 = vpop.f32.mrb[0].mxu0
        %v2583 = vadd.f32 %v2531, %v2582
        %v2584 = vpop.f32.mrb[0].mxu0
        %v2585 = vpop.f32.mrb[0].mxu0
        %v2586 = vpop.f32.mrb[0].mxu0
        %2587 = vdwg.mxu0
        %v2588 = vmul.f32 %v2583, 0.5
        %v2589 = vmul.f32 %v2583, 0.70710677
        %v2590 = verf.f32.pop %v2589
        %v2591 = vadd.f32 %v2590, 1.0
        %v2592 = vmul.f32 %v2588, %v2591
        %v2593 = vpack.c.bf16 %v2592, %v2592
        %v2594 = vld [vmem:[#allocation28] sm:$0xf]
        %v2595 = vld [vmem:[#allocation28 + $0x4] sm:$0xf]
        %v2596 = vld [vmem:[#allocation28 + $0x8] sm:$0xf]
        %v2597 = vld [vmem:[#allocation28 + $0xc] sm:$0xf]
        %v2598 = vld [vmem:[#allocation28 + $0x10] sm:$0xf]
        %v2599 = vld [vmem:[#allocation28 + $0x14] sm:$0xf]
        %v2600 = vld [vmem:[#allocation28 + $0x18] sm:$0xf]
        %v2601 = vld [vmem:[#allocation28 + $0x1c] sm:$0xf]
        %v2602 = vld [vmem:[#allocation28 + $0x20] sm:$0xf]
        %v2603 = vld [vmem:[#allocation28 + $0x24] sm:$0xf]
        %v2604 = vld [vmem:[#allocation28 + $0x28] sm:$0xf]
        %v2605 = vld [vmem:[#allocation28 + $0x2c] sm:$0xf]
        %v2606 = vld [vmem:[#allocation28 + $0x30] sm:$0xf]
        %v2607 = vld [vmem:[#allocation28 + $0x34] sm:$0xf]
        %v2608 = vld [vmem:[#allocation28 + $0x38] sm:$0xf]
        %v2609 = vld [vmem:[#allocation28 + $0x3c] sm:$0xf]
        %v2610 = vld [vmem:[#allocation30] sm:$0x1]
        %v2612 = vlaneseq
        %v2613 = vshrl.u32 %v2612, 7
        %v2614 = vsub.s32 0, %v2613
        %v2615 = vrot.slane %v2610, %v2614
        %v2633 = vunpack.c.l.b16 %v2594
        %v2634 = vunpack.c.l.b16 %v2595
        %v2635 = vunpack.c.l.b16 %v2596
        %v2636 = vunpack.c.l.b16 %v2597
        %v2637 = vunpack.c.l.b16 %v2598
        %v2638 = vunpack.c.l.b16 %v2599
        %v2639 = vunpack.c.l.b16 %v2600
        %v2640 = vunpack.c.l.b16 %v2601
        %v2641 = vunpack.c.l.b16 %v2602
        %v2642 = vunpack.c.l.b16 %v2603
        %v2643 = vunpack.c.l.b16 %v2604
        %v2644 = vunpack.c.l.b16 %v2605
        %v2645 = vunpack.c.l.b16 %v2606
        %v2646 = vunpack.c.l.b16 %v2607
        %v2647 = vunpack.c.l.b16 %v2608
        %v2648 = vunpack.c.l.b16 %v2609
        %v2649 = vpack.c.b16 %v2634, %v2633
        %v2650 = vpack.c.b16 %v2636, %v2635
        %v2651 = vpack.c.b16 %v2638, %v2637
        %v2652 = vpack.c.b16 %v2640, %v2639
        %v2653 = vpack.c.b16 %v2642, %v2641
        %v2654 = vpack.c.b16 %v2644, %v2643
        %v2655 = vpack.c.b16 %v2646, %v2645
        %v2656 = vpack.c.b16 %v2648, %v2647
        %2665 = vmatprep.subr.bf16.mxu0 0
        %2666 = vmatpush1.bf16.msra.mxu0 %v2649
        %2667 = vmatprep.subr.bf16.mxu0 0
        %2668 = vmatpush1.bf16.msra.mxu0 %v2650
        %2669 = vmatprep.subr.bf16.mxu0 0
        %2670 = vmatpush1.bf16.msra.mxu0 %v2651
        %2671 = vmatprep.subr.bf16.mxu0 0
        %2672 = vmatpush1.bf16.msra.mxu0 %v2652
        %2673 = vmatprep.subr.bf16.mxu0 0
        %2674 = vmatpush1.bf16.msra.mxu0 %v2653
        %2675 = vmatprep.subr.bf16.mxu0 0
        %2676 = vmatpush1.bf16.msra.mxu0 %v2654
        %2677 = vmatprep.subr.bf16.mxu0 0
        %2678 = vmatpush1.bf16.msra.mxu0 %v2655
        %2679 = vmatprep.subr.bf16.mxu0 0
        %2680 = vmatpush1.bf16.msra.mxu0 %v2656
        %2681 = vmatprep.subr.bf16.mxu0 0
        %2682 = vmatpush1.bf16.msra.mxu0 0
        %2683 = vmatprep.subr.bf16.mxu0 0
        %2684 = vmatpush1.bf16.msra.mxu0 0
        %2685 = vmatprep.subr.bf16.mxu0 0
        %2686 = vmatpush1.bf16.msra.mxu0 0
        %2687 = vmatprep.subr.bf16.mxu0 0
        %2688 = vmatpush1.bf16.msra.mxu0 0
        %2689 = vmatprep.subr.bf16.mxu0 0
        %2690 = vmatpush1.bf16.msra.mxu0 0
        %2691 = vmatprep.subr.bf16.mxu0 0
        %2692 = vmatpush1.bf16.msra.mxu0 0
        %2693 = vmatprep.subr.bf16.mxu0 0
        %2694 = vmatpush1.bf16.msra.mxu0 0
        %2695 = vmatprep.subr.bf16.mxu0 0
        %2696 = vmatpush1.bf16.msra.mxu0 0
        %2697 = vmatprep.mubr.bf16.mxu0 0
        %2698 = vmatmul.mubr.bf16.gmra.mrb[0].mxu0 %v2593
        %v2699 = vpop.f32.mrb[0].mxu0
        %v2700 = vadd.f32 %v2615, %v2699
        %v2701 = vpop.f32.mrb[0].mxu0
        %v2702 = vpop.f32.mrb[0].mxu0
        %v2703 = vpop.f32.mrb[0].mxu0
        %2704 = vdwg.mxu0
        %v2705 = vadd.f32 %v2491, %v2700
        %2706 = vst.msk [vmem:[%s832] sm:$0xff] %vm1623, %v2705
        %s2707 = sand.u32 %s438, 1
        %s2708 = scalar_lea.sflag [#allocation6], %s2707
        %s2709 = sand.u32 %s438, 1
        %s2710 = smul.addr %s2709, 8
        %s2711 = scalar_lea.vmem [#allocation31], %s2710
        // Predicated region
        $region161: #{tpu_custom_call.1} parent=87 // pred_check
          %p2712 = pneg %p448
        $region162: #{tpu_custom_call.1} parent=87 // pred_check_branch
          %2714 = sbr.rel (%p2712) target = $region164
        $region163: #{tpu_custom_call.1} parent=87 // pred_region
          %s2716 = ssub.s32 128, 128
          %2717 = vsyncadd %s2708, %s2716
          %s2718 = smul.addr %s48, 2
          %s2719 = sadd.s32 %s49, %s2718
          %s2720 = smul.addr %s2719, 128
          %s2721 = scalar_lea.hbm %s17, %s2720
          %s2723 = sshll.u32 %s2711, 4
          %s2724 = int_to_ptr.vmem [resolvable:$true] %s2723
          %2726 = dma.vmem_to_hbm [thread:$0]  %s2724, 128, %s2721, %s2708
        $region164: #{tpu_custom_call.1} parent=87 // pred_fallthru
          _
      $region88: #{tpu_custom_call.1} parent=5 // pred_fallthru
        _
      %p2727 = scmp.le.s32.totalorder 2, %s39
      // Predicated region
      $region165: #{tpu_custom_call.1} parent=5 // pred_check
        %p2728 = pneg %p2727
      $region166: #{tpu_custom_call.1} parent=5 // pred_check_branch
        %2730 = sbr.rel (%p2728) target = $region168
      $region167: #{tpu_custom_call.1} parent=5 // pred_region
        %s2731 = ssub.s32 %s39, 2
        // Predicated region
        $region169: #{tpu_custom_call.1} parent=167 // pred_check
          %p2732 = pneg %p454
        $region170: #{tpu_custom_call.1} parent=167 // pred_check_branch
          %2734 = sbr.rel (%p2732) target = $region172
        $region171: #{tpu_custom_call.1} parent=167 // pred_region
          %s2735 = sand.u32 %s439, 1
          %s2736 = scalar_lea.sflag [#allocation6], %s2735
          %s2737 = sand.u32 %s439, 1
          %s2738 = smul.addr %s2737, 8
          %s2739 = scalar_lea.vmem [#allocation31], %s2738
          %2740 = dma.done %s2736, 128
        $region172: #{tpu_custom_call.1} parent=167 // pred_fallthru
          _
      $region168: #{tpu_custom_call.1} parent=5 // pred_fallthru
        _
    $region6: #{tpu_custom_call.1} parent=1 // loop_footer
      %s43 = sadd.s32 1, %s39
    $region7: #{tpu_custom_call.1} parent=1 // loop_footer_branch
      %38 = sbr.rel target = $region3
    $region8: #{tpu_custom_call.1} parent=1 // loop_exit
      _
    %2741 = vsyncpa [#allocation5], 1
    %s2742 = scalar_lea.sflag [#allocation5], 1
    %2743 = vsyncpa %s2742, 1
    %2744 = vsyncpa [#allocation8], 1
    %s2745 = scalar_lea.sflag [#allocation8], 1
    %2746 = vsyncpa %s2745, 1
    %2747 = vsyncpa [#allocation11], 1
    %2748 = vsyncpa [#allocation14], 1
    %2749 = vsyncpa [#allocation17], 1
    %2750 = vsyncpa [#allocation20], 1
    %2751 = vsyncpa [#allocation23], 1
    %2752 = vsyncpa [#allocation26], 1
    %2753 = vsyncpa [#allocation29], 1
    %2754 = vsyncpa [#allocation6], 1
    %s2755 = scalar_lea.sflag [#allocation6], 1
    %2756 = vsyncpa %s2755, 1

</llo_original>
